<compile_context>
chip_gen: v6e
topology: v6e:2x2x1
jax: 0.10.0
libtpu: 0.0.40
codegen_flags: <defaults>
</compile_context>

<pallas_src>
import jax
import jax.numpy as jnp
from jax.experimental import pallas as pl

# ----------------------------- config -------------------------------------
B = 2
H = 8
W = 8
DIM = 32
NUM_HEADS = 4
WINDOW_SIZE = 4
MLP_RATIO = 4.0
SHIFT_SIZE = 0
LN_EPS = 1e-5

HEAD_DIM = DIM // NUM_HEADS
L = H * W                                   # tokens per image
BL = B * L                                  # tokens total (batch folded in)
N_WIN = WINDOW_SIZE * WINDOW_SIZE           # tokens per window
MLP_HIDDEN = int(DIM * MLP_RATIO)
SCALE = HEAD_DIM ** (-0.5)
NEG_INF = -1e30                             # cross-window/cross-image mask
GELU_C = 0.7978845608028654                 # sqrt(2/pi)


# ----------------------------- fused kernel --------------------------------
def _swim_block_kernel(x_ref, g1_ref, b1_ref,
                       wqk_ref, bqk_ref, wvp_ref,
                       bias_ref, battn_ref,
                       g2_ref, b2_ref,
                       w1_ref, bm1_ref, w2_ref, bm2_ref,
                       o_ref):
    x = x_ref[...]                                          # (BL, C)

    # ---- norm1 (one-pass: var = E[x^2] - mu^2) -----------------------------
    mu = jnp.mean(x, axis=-1, keepdims=True)
    ex2 = jnp.mean(x * x, axis=-1, keepdims=True)
    xn = (x - mu) * jax.lax.rsqrt(ex2 - mu * mu + LN_EPS) * g1_ref[...] + b1_ref[...]

    # ---- windowed multi-head self-attention ---------------------------------
    # Fused Q|K projection: cols [q_h0..q_h3 | k_h0..k_h3], q-scale folded in,
    # k bias dropped (softmax-invariant).
    qk = jnp.dot(xn, wqk_ref[...], preferred_element_type=jnp.float32) + bqk_ref[...]
    # Fused V*proj: per-head (C, C) blocks of wv_h @ wproj_h stacked along N.
    vp = jnp.dot(xn, wvp_ref[...], preferred_element_type=jnp.float32)

    attn = jnp.zeros_like(x)
    for h in range(NUM_HEADS):                              # static 4-way unroll
        q = qk[:, h * HEAD_DIM:(h + 1) * HEAD_DIM]          # (BL, hd)
        k = qk[:, DIM + h * HEAD_DIM:DIM + (h + 1) * HEAD_DIM]
        # s = q @ k^T without materializing a transpose
        s = jax.lax.dot_general(q, k, (((1,), (1,)), ((), ())),
                                preferred_element_type=jnp.float32)
        s = s + bias_ref[h]                                 # rel-pos bias + window mask
        s = s - jnp.max(s, axis=-1, keepdims=True)
        p = jnp.exp(s)
        p = p * pl.reciprocal(jnp.sum(p, axis=-1, keepdims=True), approx=True)
        attn = attn + jnp.dot(p, vp[:, h * DIM:(h + 1) * DIM],
                              preferred_element_type=jnp.float32)

    y = x + attn + battn_ref[...]                           # residual 1 (+ folded bv@wp + bproj)

    # ---- norm2 + MLP (tanh GELU) + residual ---------------------------------
    mu2 = jnp.mean(y, axis=-1, keepdims=True)
    ey2 = jnp.mean(y * y, axis=-1, keepdims=True)
    yn = (y - mu2) * jax.lax.rsqrt(ey2 - mu2 * mu2 + LN_EPS) * g2_ref[...] + b2_ref[...]

    hdn = jnp.dot(yn, w1_ref[...], preferred_element_type=jnp.float32) + bm1_ref[...]
    hdn = 0.5 * hdn * (1.0 + jnp.tanh(GELU_C * (hdn + 0.044715 * hdn * hdn * hdn)))
    mlp = jnp.dot(hdn, w2_ref[...], preferred_element_type=jnp.float32) + bm2_ref[...]

    o_ref[...] = (y + mlp).astype(o_ref.dtype)


# ----------------------------- wrappers --------------------------------------
def prepare_kernel_params(params):
    """One-TIME restructuring of the PyTorch-layout params.

    Called once outside the forward jit (cached), so the head splits, scale
    folding, wv@wproj fold and the (nh, BL, BL) bias/mask gather never run in
    steady state.
    """
    c, nh, hd = DIM, NUM_HEADS, HEAD_DIM
    wqkv = params["wqkv"]                     # (C, 3C): cols = [q | k | v], head-major within each
    bqkv = params["bqkv"][0]                  # (3C,)

    # fused Q|K weight; fold q scaling; drop k bias (softmax-invariant)
    wqk = jnp.concatenate([wqkv[:, 0:c] * SCALE, wqkv[:, c:2 * c]], axis=1)   # (C, 2C)
    bqk = jnp.concatenate([bqkv[0:c] * SCALE,
                           jnp.zeros((c,), jnp.float32)])[None, :]            # (1, 2C)

    # fold V projection into output projection: vproj_h = wv_h @ wproj_h
    wv3 = wqkv[:, 2 * c:3 * c].reshape(c, nh, hd)             # (C, nh, hd)
    wp3 = params["wproj"].reshape(nh, hd, c)                  # (nh, hd, C)
    vproj = jnp.einsum("chd,hdk->hck", wv3, wp3)              # (nh, C, C)
    wvp = jnp.transpose(vproj, (1, 0, 2)).reshape(c, nh * c)  # (C, nh*C)
    # value bias + proj bias folded into one post-attention bias
    # (exact given softmax rows sum to 1)
    bv3 = bqkv[2 * c:3 * c].reshape(nh, hd)
    battn = (jnp.einsum("hd,hdk->k", bv3, wp3) + params["bproj"][0])[None, :]  # (1, C)

    # block-diagonal additive bias over BL tokens: rel-pos bias on same-window
    # same-image pairs, -1e30 elsewhere (exp -> 0, so dense softmax == per-window)
    t = jnp.arange(BL)
    img = t // L
    r, cc = (t % L) // W, (t % L) % W
    win = (img * ((H // WINDOW_SIZE) * (W // WINDOW_SIZE))
           + (r // WINDOW_SIZE) * (W // WINDOW_SIZE) + (cc // WINDOW_SIZE))
    pos = (r % WINDOW_SIZE) * WINDOW_SIZE + (cc % WINDOW_SIZE)
    same = win[:, None] == win[None, :]
    bias = params["rel_bias"][:, pos[:, None], pos[None, :]]                  # (nh, BL, BL)
    bias = jnp.where(same[None], bias, jnp.float32(NEG_INF))

    return dict(
        g1=params["g1"], b1=params["b1"],
        wqk=wqk, bqk=bqk, wvp=wvp, bias=bias, battn=battn,
        g2=params["g2"], b2=params["b2"],
        w1=params["w1"], bm1=params["bb1"], w2=params["w2"], bm2=params["bb2"],
    )


@jax.jit
def swim_block_forward(x, kp):
    """Steady-state forward: reshape + one single-step pallas_call."""
    b, l, c = x.shape
    out = pl.pallas_call(
        _swim_block_kernel,
        out_shape=jax.ShapeDtypeStruct((b * l, c), x.dtype),
        # No grid / BlockSpecs: the whole problem (< 1 MiB) is a single VMEM
        # block on every TPU generation, so there is nothing to pipeline.
    )(x.reshape(b * l, c),
      kp["g1"], kp["b1"], kp["wqk"], kp["bqk"], kp["wvp"],
      kp["bias"], kp["battn"], kp["g2"], kp["b2"],
      kp["w1"], kp["bm1"], kp["w2"], kp["bm2"])
    return out.reshape(b, l, c)


# ------------------------- reference-only helpers ----------------------------
def window_partition_jax(x, ws):
    b, h, w, c = x.shape
    x = x.reshape(b, h // ws, ws, w // ws, ws, c)
    return x.transpose(0, 1, 3, 2, 4, 5).reshape(-1, ws, ws, c)


def window_reverse_jax(windows, ws, h, w):
    b = windows.shape[0] // (h * w // ws // ws)
    x = windows.reshape(b, h // ws, w // ws, ws, ws, -1)
    return x.transpose(0, 1, 3, 2, 4, 5).reshape(b, h, w, -1)


def relative_position_index(ws):
    coords = jnp.stack(jnp.meshgrid(jnp.arange(ws), jnp.arange(ws), indexing="ij"))
    coords_flat = coords.reshape(2, -1)
    rel = coords_flat[:, :, None] - coords_flat[:, None, :]
    rel = rel.transpose(1, 2, 0)
    rel = rel.at[:, :, 0].add(ws - 1)
    rel = rel.at[:, :, 1].add(ws - 1)
    rel = rel.at[:, :, 0].multiply(2 * ws - 1)
    return rel.sum(-1)                                                 # (N, N)


def reference_forward(x, params):
    """Pure-JAX mirror of the PyTorch module (window_partition based, erf GELU)."""
    b, l, c = x.shape
    shortcut = x

    def ln(z, g, bb):
        mu = jnp.mean(z, axis=-1, keepdims=True)
        var = jnp.mean((z - mu) ** 2, axis=-1, keepdims=True)
        return (z - mu) * jax.lax.rsqrt(var + LN_EPS) * g[0] + bb[0]

    xn = ln(x, params["g1"], params["b1"])
    xv = xn.reshape(b, H, W, c)
    x_windows = window_partition_jax(xv, WINDOW_SIZE).reshape(-1, N_WIN, c)

    qkv = x_windows @ params["wqkv"] + params["bqkv"][0]
    nw = x_windows.shape[0]
    qkv = qkv.reshape(nw, N_WIN, 3, NUM_HEADS, HEAD_DIM).transpose(2, 0, 3, 1, 4)
    q, k, v = qkv[0] * SCALE, qkv[1], qkv[2]
    attn = jnp.einsum("whnd,whmd->whnm", q, k) + params["rel_bias"][None]
    attn = jax.nn.softmax(attn, axis=-1)
    out = jnp.einsum("whnm,whmd->whnd", attn, v).transpose(0, 2, 1, 3).reshape(nw, N_WIN, c)
    out = out @ params["wproj"] + params["bproj"][0]

    out = window_reverse_jax(out.reshape(-1, WINDOW_SIZE, WINDOW_SIZE, c), WINDOW_SIZE, H, W)
    x2 = shortcut + out.reshape(b, l, c)

    xn2 = ln(x2, params["g2"], params["b2"])
    hdn = xn2 @ params["w1"] + params["bb1"][0]
    hdn = 0.5 * hdn * (1.0 + jax.lax.erf(hdn / jnp.sqrt(2.0)))          # exact GELU
    mlp = hdn @ params["w2"] + params["bb2"][0]
    return x2 + mlp


# ----------------------------------- main ------------------------------------
if __name__ == "__main__":
    key = jax.random.PRNGKey(0)
    keys = jax.random.split(key, 12)

    x = jax.random.normal(keys[0], (B, H * W, DIM), jnp.float32)

    table = 0.02 * jax.random.normal(
        keys[1], ((2 * WINDOW_SIZE - 1) * (2 * WINDOW_SIZE - 1), NUM_HEADS), jnp.float32)
    rel_idx = relative_position_index(WINDOW_SIZE)                     # (N, N)
    rel_bias = table[rel_idx.reshape(-1)].reshape(N_WIN, N_WIN, NUM_HEADS)
    rel_bias = jnp.transpose(rel_bias, (2, 0, 1))                      # (nh, N, N)

    params = dict(
        g1=jnp.ones((1, DIM), jnp.float32),
        b1=jnp.zeros((1, DIM), jnp.float32),
        wqkv=0.05 * jax.random.normal(keys[2], (DIM, 3 * DIM), jnp.float32),
        bqkv=0.01 * jax.random.normal(keys[3], (1, 3 * DIM), jnp.float32),
        wproj=0.05 * jax.random.normal(keys[4], (DIM, DIM), jnp.float32),
        bproj=0.01 * jax.random.normal(keys[5], (1, DIM), jnp.float32),
        rel_bias=rel_bias,
        g2=jnp.ones((1, DIM), jnp.float32),
        b2=jnp.zeros((1, DIM), jnp.float32),
        w1=0.05 * jax.random.normal(keys[6], (DIM, MLP_HIDDEN), jnp.float32),
        bb1=0.01 * jax.random.normal(keys[7], (1, MLP_HIDDEN), jnp.float32),
        w2=0.05 * jax.random.normal(keys[8], (MLP_HIDDEN, DIM), jnp.float32),
        bb2=0.01 * jax.random.normal(keys[9], (1, DIM), jnp.float32),
    )

    # One-time param prep (hoisted out of the per-call jit / steady-state path).
    kp = prepare_kernel_params(params)
    kp = jax.tree_util.tree_map(jax.block_until_ready, kp)

    out = swim_block_forward(x, kp)
    out = jax.block_until_ready(out)

    ref = reference_forward(x, params)
    assert out.shape == (B, H * W, DIM)
    assert jnp.all(jnp.isfinite(out))
    # Tolerance covers the intentional approximations: EUP approximate
    # reciprocal in the softmax denominator, tanh-approximate GELU vs. exact
    # erf, and the bv@wproj bias fold (exact iff softmax rows sum to 1).
    assert jnp.allclose(out, ref, atol=2e-3, rtol=2e-3), \
        f"max err {jnp.max(jnp.abs(out - ref))}"

    print("KERNEL_OK")
</pallas_src>

<mosaic_0001>
module attributes {stable_mosaic.version = 11 : i64} {
  func.func @_swim_block_kernel(%arg0: memref<128x32xf32, #tpu.memory_space<vmem>>, %arg1: memref<1x32xf32, #tpu.memory_space<vmem>>, %arg2: memref<1x32xf32, #tpu.memory_space<vmem>>, %arg3: memref<32x64xf32, #tpu.memory_space<vmem>>, %arg4: memref<1x64xf32, #tpu.memory_space<vmem>>, %arg5: memref<32x128xf32, #tpu.memory_space<vmem>>, %arg6: memref<4x128x128xf32, #tpu.memory_space<vmem>>, %arg7: memref<1x32xf32, #tpu.memory_space<vmem>>, %arg8: memref<1x32xf32, #tpu.memory_space<vmem>>, %arg9: memref<1x32xf32, #tpu.memory_space<vmem>>, %arg10: memref<32x128xf32, #tpu.memory_space<vmem>>, %arg11: memref<1x128xf32, #tpu.memory_space<vmem>>, %arg12: memref<128x32xf32, #tpu.memory_space<vmem>>, %arg13: memref<1x32xf32, #tpu.memory_space<vmem>>, %arg14: memref<128x32xf32, #tpu.memory_space<vmem>>) attributes {dimension_semantics = [], scalar_prefetch = 0 : i64, scratch_operands = 0 : i64, tpu.core_type = #tpu.core_type<tc>} {
    %c0 = arith.constant 0 : index
    %c0_0 = arith.constant 0 : index
    %0 = vector.load %arg0[%c0, %c0_0] : memref<128x32xf32, #tpu.memory_space<vmem>>, vector<128x32xf32>
    %cst = arith.constant dense<0.000000e+00> : vector<128xf32>
    %1 = vector.multi_reduction <add>, %0, %cst [1] : vector<128x32xf32> to vector<128xf32>
    %2 = vector.shape_cast %1 : vector<128xf32> to vector<128x1xf32>
    %cst_1 = arith.constant 3.200000e+01 : f32
    %3 = vector.broadcast %cst_1 : f32 to vector<128x1xf32>
    %4 = arith.divf %2, %3 : vector<128x1xf32>
    %5 = arith.mulf %0, %0 : vector<128x32xf32>
    %cst_2 = arith.constant dense<0.000000e+00> : vector<128xf32>
    %6 = vector.multi_reduction <add>, %5, %cst_2 [1] : vector<128x32xf32> to vector<128xf32>
    %7 = vector.shape_cast %6 : vector<128xf32> to vector<128x1xf32>
    %cst_3 = arith.constant 3.200000e+01 : f32
    %8 = vector.broadcast %cst_3 : f32 to vector<128x1xf32>
    %9 = arith.divf %7, %8 : vector<128x1xf32>
    %10 = vector.broadcast %4 : vector<128x1xf32> to vector<128x32xf32>
    %11 = arith.subf %0, %10 : vector<128x32xf32>
    %12 = arith.mulf %4, %4 : vector<128x1xf32>
    %13 = arith.subf %9, %12 : vector<128x1xf32>
    %cst_4 = arith.constant 9.99999974E-6 : f32
    %14 = vector.broadcast %cst_4 : f32 to vector<128x1xf32>
    %15 = arith.addf %13, %14 : vector<128x1xf32>
    %16 = math.rsqrt %15 : vector<128x1xf32>
    %17 = vector.broadcast %16 : vector<128x1xf32> to vector<128x32xf32>
    %18 = arith.mulf %11, %17 : vector<128x32xf32>
    %c0_5 = arith.constant 0 : index
    %c0_6 = arith.constant 0 : index
    %19 = vector.load %arg1[%c0_5, %c0_6] : memref<1x32xf32, #tpu.memory_space<vmem>>, vector<1x32xf32>
    %20 = vector.broadcast %19 : vector<1x32xf32> to vector<128x32xf32>
    %21 = arith.mulf %18, %20 : vector<128x32xf32>
    %c0_7 = arith.constant 0 : index
    %c0_8 = arith.constant 0 : index
    %22 = vector.load %arg2[%c0_7, %c0_8] : memref<1x32xf32, #tpu.memory_space<vmem>>, vector<1x32xf32>
    %23 = vector.broadcast %22 : vector<1x32xf32> to vector<128x32xf32>
    %24 = arith.addf %21, %23 : vector<128x32xf32>
    %c0_9 = arith.constant 0 : index
    %c0_10 = arith.constant 0 : index
    %25 = vector.load %arg3[%c0_9, %c0_10] : memref<32x64xf32, #tpu.memory_space<vmem>>, vector<32x64xf32>
    %cst_11 = arith.constant dense<0.000000e+00> : vector<128x64xf32>
    %26 = tpu.matmul %24, %25, %cst_11 {dimension_numbers = #tpu.dot_dimension_numbers<[1], [0], [0], [1], [0, 0, 1, 1], [], []>} : vector<128x32xf32>, vector<32x64xf32>, vector<128x64xf32> -> vector<128x64xf32>
    %c0_12 = arith.constant 0 : index
    %c0_13 = arith.constant 0 : index
    %27 = vector.load %arg4[%c0_12, %c0_13] : memref<1x64xf32, #tpu.memory_space<vmem>>, vector<1x64xf32>
    %28 = vector.broadcast %27 : vector<1x64xf32> to vector<128x64xf32>
    %29 = arith.addf %26, %28 : vector<128x64xf32>
    %c0_14 = arith.constant 0 : index
    %c0_15 = arith.constant 0 : index
    %30 = vector.load %arg5[%c0_14, %c0_15] : memref<32x128xf32, #tpu.memory_space<vmem>>, vector<32x128xf32>
    %cst_16 = arith.constant dense<0.000000e+00> : vector<128x128xf32>
    %31 = tpu.matmul %24, %30, %cst_16 {dimension_numbers = #tpu.dot_dimension_numbers<[1], [0], [0], [1], [0, 0, 1, 1], [], []>} : vector<128x32xf32>, vector<32x128xf32>, vector<128x128xf32> -> vector<128x128xf32>
    %cst_17 = arith.constant 0.000000e+00 : f32
    %32 = vector.broadcast %cst_17 : f32 to vector<128x32xf32>
    %33 = vector.extract_strided_slice %29 {offsets = [0, 0], sizes = [128, 8], strides = [1, 1]} : vector<128x64xf32> to vector<128x8xf32>
    %34 = vector.extract_strided_slice %29 {offsets = [0, 32], sizes = [128, 8], strides = [1, 1]} : vector<128x64xf32> to vector<128x8xf32>
    %cst_18 = arith.constant dense<0.000000e+00> : vector<128x128xf32>
    %35 = tpu.matmul %33, %34, %cst_18 {dimension_numbers = #tpu.dot_dimension_numbers<[1], [1], [0], [0], [0, 0, 1, 0], [], []>} : vector<128x8xf32>, vector<128x8xf32>, vector<128x128xf32> -> vector<128x128xf32>
    %c0_19 = arith.constant 0 : index
    %c0_20 = arith.constant 0 : index
    %c0_21 = arith.constant 0 : index
    %36 = vector.load %arg6[%c0_19, %c0_20, %c0_21] : memref<4x128x128xf32, #tpu.memory_space<vmem>>, vector<1x128x128xf32>
    %37 = vector.shape_cast %36 : vector<1x128x128xf32> to vector<128x128xf32>
    %38 = arith.addf %35, %37 : vector<128x128xf32>
    %cst_22 = arith.constant dense<0xFF800000> : vector<128xf32>
    %39 = vector.multi_reduction <maximumf>, %38, %cst_22 [1] : vector<128x128xf32> to vector<128xf32>
    %40 = vector.shape_cast %39 : vector<128xf32> to vector<128x1xf32>
    %41 = vector.broadcast %40 : vector<128x1xf32> to vector<128x128xf32>
    %42 = arith.subf %38, %41 : vector<128x128xf32>
    %43 = math.exp %42 : vector<128x128xf32>
    %cst_23 = arith.constant dense<0.000000e+00> : vector<128xf32>
    %44 = vector.multi_reduction <add>, %43, %cst_23 [1] : vector<128x128xf32> to vector<128xf32>
    %45 = vector.shape_cast %44 : vector<128xf32> to vector<128x1xf32>
    %46 = tpu.reciprocal %45 {approx = true} : vector<128x1xf32> -> vector<128x1xf32>
    %47 = vector.broadcast %46 : vector<128x1xf32> to vector<128x128xf32>
    %48 = arith.mulf %43, %47 : vector<128x128xf32>
    %49 = vector.extract_strided_slice %31 {offsets = [0, 0], sizes = [128, 32], strides = [1, 1]} : vector<128x128xf32> to vector<128x32xf32>
    %cst_24 = arith.constant dense<0.000000e+00> : vector<128x32xf32>
    %50 = tpu.matmul %48, %49, %cst_24 {dimension_numbers = #tpu.dot_dimension_numbers<[1], [0], [0], [1], [0, 0, 1, 1], [], []>} : vector<128x128xf32>, vector<128x32xf32>, vector<128x32xf32> -> vector<128x32xf32>
    %51 = arith.addf %32, %50 : vector<128x32xf32>
    %52 = vector.extract_strided_slice %29 {offsets = [0, 8], sizes = [128, 8], strides = [1, 1]} : vector<128x64xf32> to vector<128x8xf32>
    %53 = vector.extract_strided_slice %29 {offsets = [0, 40], sizes = [128, 8], strides = [1, 1]} : vector<128x64xf32> to vector<128x8xf32>
    %cst_25 = arith.constant dense<0.000000e+00> : vector<128x128xf32>
    %54 = tpu.matmul %52, %53, %cst_25 {dimension_numbers = #tpu.dot_dimension_numbers<[1], [1], [0], [0], [0, 0, 1, 0], [], []>} : vector<128x8xf32>, vector<128x8xf32>, vector<128x128xf32> -> vector<128x128xf32>
    %c1 = arith.constant 1 : index
    %c0_26 = arith.constant 0 : index
    %c0_27 = arith.constant 0 : index
    %55 = vector.load %arg6[%c1, %c0_26, %c0_27] : memref<4x128x128xf32, #tpu.memory_space<vmem>>, vector<1x128x128xf32>
    %56 = vector.shape_cast %55 : vector<1x128x128xf32> to vector<128x128xf32>
    %57 = arith.addf %54, %56 : vector<128x128xf32>
    %cst_28 = arith.constant dense<0xFF800000> : vector<128xf32>
    %58 = vector.multi_reduction <maximumf>, %57, %cst_28 [1] : vector<128x128xf32> to vector<128xf32>
    %59 = vector.shape_cast %58 : vector<128xf32> to vector<128x1xf32>
    %60 = vector.broadcast %59 : vector<128x1xf32> to vector<128x128xf32>
    %61 = arith.subf %57, %60 : vector<128x128xf32>
    %62 = math.exp %61 : vector<128x128xf32>
    %cst_29 = arith.constant dense<0.000000e+00> : vector<128xf32>
    %63 = vector.multi_reduction <add>, %62, %cst_29 [1] : vector<128x128xf32> to vector<128xf32>
    %64 = vector.shape_cast %63 : vector<128xf32> to vector<128x1xf32>
    %65 = tpu.reciprocal %64 {approx = true} : vector<128x1xf32> -> vector<128x1xf32>
    %66 = vector.broadcast %65 : vector<128x1xf32> to vector<128x128xf32>
    %67 = arith.mulf %62, %66 : vector<128x128xf32>
    %68 = vector.extract_strided_slice %31 {offsets = [0, 32], sizes = [128, 32], strides = [1, 1]} : vector<128x128xf32> to vector<128x32xf32>
    %cst_30 = arith.constant dense<0.000000e+00> : vector<128x32xf32>
    %69 = tpu.matmul %67, %68, %cst_30 {dimension_numbers = #tpu.dot_dimension_numbers<[1], [0], [0], [1], [0, 0, 1, 1], [], []>} : vector<128x128xf32>, vector<128x32xf32>, vector<128x32xf32> -> vector<128x32xf32>
    %70 = arith.addf %51, %69 : vector<128x32xf32>
    %71 = vector.extract_strided_slice %29 {offsets = [0, 16], sizes = [128, 8], strides = [1, 1]} : vector<128x64xf32> to vector<128x8xf32>
    %72 = vector.extract_strided_slice %29 {offsets = [0, 48], sizes = [128, 8], strides = [1, 1]} : vector<128x64xf32> to vector<128x8xf32>
    %cst_31 = arith.constant dense<0.000000e+00> : vector<128x128xf32>
    %73 = tpu.matmul %71, %72, %cst_31 {dimension_numbers = #tpu.dot_dimension_numbers<[1], [1], [0], [0], [0, 0, 1, 0], [], []>} : vector<128x8xf32>, vector<128x8xf32>, vector<128x128xf32> -> vector<128x128xf32>
    %c2 = arith.constant 2 : index
    %c0_32 = arith.constant 0 : index
    %c0_33 = arith.constant 0 : index
    %74 = vector.load %arg6[%c2, %c0_32, %c0_33] : memref<4x128x128xf32, #tpu.memory_space<vmem>>, vector<1x128x128xf32>
    %75 = vector.shape_cast %74 : vector<1x128x128xf32> to vector<128x128xf32>
    %76 = arith.addf %73, %75 : vector<128x128xf32>
    %cst_34 = arith.constant dense<0xFF800000> : vector<128xf32>
    %77 = vector.multi_reduction <maximumf>, %76, %cst_34 [1] : vector<128x128xf32> to vector<128xf32>
    %78 = vector.shape_cast %77 : vector<128xf32> to vector<128x1xf32>
    %79 = vector.broadcast %78 : vector<128x1xf32> to vector<128x128xf32>
    %80 = arith.subf %76, %79 : vector<128x128xf32>
    %81 = math.exp %80 : vector<128x128xf32>
    %cst_35 = arith.constant dense<0.000000e+00> : vector<128xf32>
    %82 = vector.multi_reduction <add>, %81, %cst_35 [1] : vector<128x128xf32> to vector<128xf32>
    %83 = vector.shape_cast %82 : vector<128xf32> to vector<128x1xf32>
    %84 = tpu.reciprocal %83 {approx = true} : vector<128x1xf32> -> vector<128x1xf32>
    %85 = vector.broadcast %84 : vector<128x1xf32> to vector<128x128xf32>
    %86 = arith.mulf %81, %85 : vector<128x128xf32>
    %87 = vector.extract_strided_slice %31 {offsets = [0, 64], sizes = [128, 32], strides = [1, 1]} : vector<128x128xf32> to vector<128x32xf32>
    %cst_36 = arith.constant dense<0.000000e+00> : vector<128x32xf32>
    %88 = tpu.matmul %86, %87, %cst_36 {dimension_numbers = #tpu.dot_dimension_numbers<[1], [0], [0], [1], [0, 0, 1, 1], [], []>} : vector<128x128xf32>, vector<128x32xf32>, vector<128x32xf32> -> vector<128x32xf32>
    %89 = arith.addf %70, %88 : vector<128x32xf32>
    %90 = vector.extract_strided_slice %29 {offsets = [0, 24], sizes = [128, 8], strides = [1, 1]} : vector<128x64xf32> to vector<128x8xf32>
    %91 = vector.extract_strided_slice %29 {offsets = [0, 56], sizes = [128, 8], strides = [1, 1]} : vector<128x64xf32> to vector<128x8xf32>
    %cst_37 = arith.constant dense<0.000000e+00> : vector<128x128xf32>
    %92 = tpu.matmul %90, %91, %cst_37 {dimension_numbers = #tpu.dot_dimension_numbers<[1], [1], [0], [0], [0, 0, 1, 0], [], []>} : vector<128x8xf32>, vector<128x8xf32>, vector<128x128xf32> -> vector<128x128xf32>
    %c3 = arith.constant 3 : index
    %c0_38 = arith.constant 0 : index
    %c0_39 = arith.constant 0 : index
    %93 = vector.load %arg6[%c3, %c0_38, %c0_39] : memref<4x128x128xf32, #tpu.memory_space<vmem>>, vector<1x128x128xf32>
    %94 = vector.shape_cast %93 : vector<1x128x128xf32> to vector<128x128xf32>
    %95 = arith.addf %92, %94 : vector<128x128xf32>
    %cst_40 = arith.constant dense<0xFF800000> : vector<128xf32>
    %96 = vector.multi_reduction <maximumf>, %95, %cst_40 [1] : vector<128x128xf32> to vector<128xf32>
    %97 = vector.shape_cast %96 : vector<128xf32> to vector<128x1xf32>
    %98 = vector.broadcast %97 : vector<128x1xf32> to vector<128x128xf32>
    %99 = arith.subf %95, %98 : vector<128x128xf32>
    %100 = math.exp %99 : vector<128x128xf32>
    %cst_41 = arith.constant dense<0.000000e+00> : vector<128xf32>
    %101 = vector.multi_reduction <add>, %100, %cst_41 [1] : vector<128x128xf32> to vector<128xf32>
    %102 = vector.shape_cast %101 : vector<128xf32> to vector<128x1xf32>
    %103 = tpu.reciprocal %102 {approx = true} : vector<128x1xf32> -> vector<128x1xf32>
    %104 = vector.broadcast %103 : vector<128x1xf32> to vector<128x128xf32>
    %105 = arith.mulf %100, %104 : vector<128x128xf32>
    %106 = vector.extract_strided_slice %31 {offsets = [0, 96], sizes = [128, 32], strides = [1, 1]} : vector<128x128xf32> to vector<128x32xf32>
    %cst_42 = arith.constant dense<0.000000e+00> : vector<128x32xf32>
    %107 = tpu.matmul %105, %106, %cst_42 {dimension_numbers = #tpu.dot_dimension_numbers<[1], [0], [0], [1], [0, 0, 1, 1], [], []>} : vector<128x128xf32>, vector<128x32xf32>, vector<128x32xf32> -> vector<128x32xf32>
    %108 = arith.addf %89, %107 : vector<128x32xf32>
    %109 = arith.addf %0, %108 : vector<128x32xf32>
    %c0_43 = arith.constant 0 : index
    %c0_44 = arith.constant 0 : index
    %110 = vector.load %arg7[%c0_43, %c0_44] : memref<1x32xf32, #tpu.memory_space<vmem>>, vector<1x32xf32>
    %111 = vector.broadcast %110 : vector<1x32xf32> to vector<128x32xf32>
    %112 = arith.addf %109, %111 : vector<128x32xf32>
    %cst_45 = arith.constant dense<0.000000e+00> : vector<128xf32>
    %113 = vector.multi_reduction <add>, %112, %cst_45 [1] : vector<128x32xf32> to vector<128xf32>
    %114 = vector.shape_cast %113 : vector<128xf32> to vector<128x1xf32>
    %cst_46 = arith.constant 3.200000e+01 : f32
    %115 = vector.broadcast %cst_46 : f32 to vector<128x1xf32>
    %116 = arith.divf %114, %115 : vector<128x1xf32>
    %117 = arith.mulf %112, %112 : vector<128x32xf32>
    %cst_47 = arith.constant dense<0.000000e+00> : vector<128xf32>
    %118 = vector.multi_reduction <add>, %117, %cst_47 [1] : vector<128x32xf32> to vector<128xf32>
    %119 = vector.shape_cast %118 : vector<128xf32> to vector<128x1xf32>
    %cst_48 = arith.constant 3.200000e+01 : f32
    %120 = vector.broadcast %cst_48 : f32 to vector<128x1xf32>
    %121 = arith.divf %119, %120 : vector<128x1xf32>
    %122 = vector.broadcast %116 : vector<128x1xf32> to vector<128x32xf32>
    %123 = arith.subf %112, %122 : vector<128x32xf32>
    %124 = arith.mulf %116, %116 : vector<128x1xf32>
    %125 = arith.subf %121, %124 : vector<128x1xf32>
    %cst_49 = arith.constant 9.99999974E-6 : f32
    %126 = vector.broadcast %cst_49 : f32 to vector<128x1xf32>
    %127 = arith.addf %125, %126 : vector<128x1xf32>
    %128 = math.rsqrt %127 : vector<128x1xf32>
    %129 = vector.broadcast %128 : vector<128x1xf32> to vector<128x32xf32>
    %130 = arith.mulf %123, %129 : vector<128x32xf32>
    %c0_50 = arith.constant 0 : index
    %c0_51 = arith.constant 0 : index
    %131 = vector.load %arg8[%c0_50, %c0_51] : memref<1x32xf32, #tpu.memory_space<vmem>>, vector<1x32xf32>
    %132 = vector.broadcast %131 : vector<1x32xf32> to vector<128x32xf32>
    %133 = arith.mulf %130, %132 : vector<128x32xf32>
    %c0_52 = arith.constant 0 : index
    %c0_53 = arith.constant 0 : index
    %134 = vector.load %arg9[%c0_52, %c0_53] : memref<1x32xf32, #tpu.memory_space<vmem>>, vector<1x32xf32>
    %135 = vector.broadcast %134 : vector<1x32xf32> to vector<128x32xf32>
    %136 = arith.addf %133, %135 : vector<128x32xf32>
    %c0_54 = arith.constant 0 : index
    %c0_55 = arith.constant 0 : index
    %137 = vector.load %arg10[%c0_54, %c0_55] : memref<32x128xf32, #tpu.memory_space<vmem>>, vector<32x128xf32>
    %cst_56 = arith.constant dense<0.000000e+00> : vector<128x128xf32>
    %138 = tpu.matmul %136, %137, %cst_56 {dimension_numbers = #tpu.dot_dimension_numbers<[1], [0], [0], [1], [0, 0, 1, 1], [], []>} : vector<128x32xf32>, vector<32x128xf32>, vector<128x128xf32> -> vector<128x128xf32>
    %c0_57 = arith.constant 0 : index
    %c0_58 = arith.constant 0 : index
    %139 = vector.load %arg11[%c0_57, %c0_58] : memref<1x128xf32, #tpu.memory_space<vmem>>, vector<1x128xf32>
    %140 = vector.broadcast %139 : vector<1x128xf32> to vector<128x128xf32>
    %141 = arith.addf %138, %140 : vector<128x128xf32>
    %cst_59 = arith.constant 5.000000e-01 : f32
    %142 = vector.broadcast %cst_59 : f32 to vector<128x128xf32>
    %143 = arith.mulf %142, %141 : vector<128x128xf32>
    %cst_60 = arith.constant 4.471500e-02 : f32
    %144 = vector.broadcast %cst_60 : f32 to vector<128x128xf32>
    %145 = arith.mulf %144, %141 : vector<128x128xf32>
    %146 = arith.mulf %145, %141 : vector<128x128xf32>
    %147 = arith.mulf %146, %141 : vector<128x128xf32>
    %148 = arith.addf %141, %147 : vector<128x128xf32>
    %cst_61 = arith.constant 0.797884583 : f32
    %149 = vector.broadcast %cst_61 : f32 to vector<128x128xf32>
    %150 = arith.mulf %149, %148 : vector<128x128xf32>
    %151 = math.tanh %150 : vector<128x128xf32>
    %cst_62 = arith.constant 1.000000e+00 : f32
    %152 = vector.broadcast %cst_62 : f32 to vector<128x128xf32>
    %153 = arith.addf %152, %151 : vector<128x128xf32>
    %154 = arith.mulf %143, %153 : vector<128x128xf32>
    %c0_63 = arith.constant 0 : index
    %c0_64 = arith.constant 0 : index
    %155 = vector.load %arg12[%c0_63, %c0_64] : memref<128x32xf32, #tpu.memory_space<vmem>>, vector<128x32xf32>
    %cst_65 = arith.constant dense<0.000000e+00> : vector<128x32xf32>
    %156 = tpu.matmul %154, %155, %cst_65 {dimension_numbers = #tpu.dot_dimension_numbers<[1], [0], [0], [1], [0, 0, 1, 1], [], []>} : vector<128x128xf32>, vector<128x32xf32>, vector<128x32xf32> -> vector<128x32xf32>
    %c0_66 = arith.constant 0 : index
    %c0_67 = arith.constant 0 : index
    %157 = vector.load %arg13[%c0_66, %c0_67] : memref<1x32xf32, #tpu.memory_space<vmem>>, vector<1x32xf32>
    %158 = vector.broadcast %157 : vector<1x32xf32> to vector<128x32xf32>
    %159 = arith.addf %156, %158 : vector<128x32xf32>
    %160 = arith.addf %112, %159 : vector<128x32xf32>
    %c0_68 = arith.constant 0 : index
    %c0_69 = arith.constant 0 : index
    %161 = vector.load %arg14[%c0_68, %c0_69] : memref<128x32xf32, #tpu.memory_space<vmem>>, vector<128x32xf32>
    tpu.vector_store %arg14[%c0_68, %c0_69], %160 {strides = array<i32>} : memref<128x32xf32, #tpu.memory_space<vmem>>, vector<128x32xf32>,
    return
  }
}

</mosaic_0001>

<llo_original>
// kernel: swim_block_forward.1
$region0: #{swim_block_forward.1}
  #allocation0 [shape = 'u32[]', space=smem, size = 0x4, offset = 0x4, fixed_abs, tag = 'smem constant byte address 0x4 - core index']
  #allocation1 [shape = 'u32[144,128]{1,0:T(1,128)}', space=vmem, size = 0x12000, scoped, tag = 'internal scratch']
  %s0 = inlined_call_operand.vmem [shape: f32[128,32], index: 0, kind: input, shape index: {}]
  %s1 = inlined_call_operand.vmem [shape: f32[1,32], index: 1, kind: input, shape index: {}]
  %s2 = inlined_call_operand.vmem [shape: f32[1,32], index: 2, kind: input, shape index: {}]
  %s3 = inlined_call_operand.vmem [shape: f32[32,64], index: 3, kind: input, shape index: {}]
  %s4 = inlined_call_operand.vmem [shape: f32[1,64], index: 4, kind: input, shape index: {}]
  %s5 = inlined_call_operand.vmem [shape: f32[32,128], index: 5, kind: input, shape index: {}]
  %s6 = inlined_call_operand.hbm [shape: f32[4,128,128], index: 6, kind: input, shape index: {}]
  %s7 = inlined_call_operand.vmem [shape: f32[1,32], index: 7, kind: input, shape index: {}]
  %s8 = inlined_call_operand.vmem [shape: f32[1,32], index: 8, kind: input, shape index: {}]
  %s9 = inlined_call_operand.vmem [shape: f32[1,32], index: 9, kind: input, shape index: {}]
  %s10 = inlined_call_operand.vmem [shape: f32[32,128], index: 10, kind: input, shape index: {}]
  %s11 = inlined_call_operand.vmem [shape: f32[1,128], index: 11, kind: input, shape index: {}]
  %s12 = inlined_call_operand.vmem [shape: f32[128,32], index: 12, kind: input, shape index: {}]
  %s13 = inlined_call_operand.vmem [shape: f32[1,32], index: 13, kind: input, shape index: {}]
  %s14 = inlined_call_operand.vmem [shape: f32[128,32], index: 14, kind: output, shape index: {}]
  %s15 = sld [smem:[#allocation0]]
  $region70: #{swim_block_forward.1} parent=0
    _
  %s17 = ssub.s32 1, %s15
  %s18 = scalar_select 0, %s17, %s15
  $region1: #{swim_block_forward.1} parent=0
    #allocation2 [shape = 'u8[262144]{0}', space=vmem, size = 0x40000, scoped, tag = 'input window, operand 6, single buffered']
    #allocation3 [shape = 's32[1]{0}', space=sflag, size = 0x4, scoped, tag = 'scoped memory for swim_block_forward.1']
    %19 = vsyncpa [#allocation3], 0
    // Predicated region
    $region2: #{swim_block_forward.1} parent=1 // pred_check
      _
    $region3: #{swim_block_forward.1} parent=1 // pred_check_branch
      %21 = sbr.rel (0) target = $region5
    $region4: #{swim_block_forward.1} parent=1 // pred_region
      _
    $region5: #{swim_block_forward.1} parent=1 // pred_fallthru
      _
    // Predicated region
    $region6: #{swim_block_forward.1} parent=1 // pred_check
      _
    $region7: #{swim_block_forward.1} parent=1 // pred_check_branch
      %23 = sbr.rel (0) target = $region9
    $region8: #{swim_block_forward.1} parent=1 // pred_region
      _
    $region9: #{swim_block_forward.1} parent=1 // pred_fallthru
      _
    // Predicated region
    $region10: #{swim_block_forward.1} parent=1 // pred_check
      _
    $region11: #{swim_block_forward.1} parent=1 // pred_check_branch
      %25 = sbr.rel (0) target = $region13
    $region12: #{swim_block_forward.1} parent=1 // pred_region
      _
    $region13: #{swim_block_forward.1} parent=1 // pred_fallthru
      _
    // Predicated region
    $region14: #{swim_block_forward.1} parent=1 // pred_check
      _
    $region15: #{swim_block_forward.1} parent=1 // pred_check_branch
      %27 = sbr.rel (0) target = $region17
    $region16: #{swim_block_forward.1} parent=1 // pred_region
      _
    $region17: #{swim_block_forward.1} parent=1 // pred_fallthru
      _
    // Predicated region
    $region18: #{swim_block_forward.1} parent=1 // pred_check
      _
    $region19: #{swim_block_forward.1} parent=1 // pred_check_branch
      %29 = sbr.rel (0) target = $region21
    $region20: #{swim_block_forward.1} parent=1 // pred_region
      _
    $region21: #{swim_block_forward.1} parent=1 // pred_fallthru
      _
    // Predicated region
    $region22: #{swim_block_forward.1} parent=1 // pred_check
      _
    $region23: #{swim_block_forward.1} parent=1 // pred_check_branch
      %31 = sbr.rel (0) target = $region25
    $region24: #{swim_block_forward.1} parent=1 // pred_region
      _
    $region25: #{swim_block_forward.1} parent=1 // pred_fallthru
      _
    // Predicated region
    $region26: #{swim_block_forward.1} parent=1 // pred_check
      _
    $region27: #{swim_block_forward.1} parent=1 // pred_check_branch
      %33 = sbr.rel (0) target = $region29
    $region28: #{swim_block_forward.1} parent=1 // pred_region
      %s35 = ssub.s32 8192, 8192
      %36 = vsyncadd [#allocation3], %s35
      %s37 = sshll.u32 [#allocation2], 4
      %s38 = int_to_ptr.vmem [resolvable:$true] %s37
      %43 = dma.hbm_to_vmem [thread:$0]  %s6, 8192, %s38, [#allocation3], 128, 128, 8
    $region29: #{swim_block_forward.1} parent=1 // pred_fallthru
      _
    // Predicated region
    $region30: #{swim_block_forward.1} parent=1 // pred_check
      _
    $region31: #{swim_block_forward.1} parent=1 // pred_check_branch
      %45 = sbr.rel (0) target = $region33
    $region32: #{swim_block_forward.1} parent=1 // pred_region
      _
    $region33: #{swim_block_forward.1} parent=1 // pred_fallthru
      _
    // Predicated region
    $region34: #{swim_block_forward.1} parent=1 // pred_check
      _
    $region35: #{swim_block_forward.1} parent=1 // pred_check_branch
      %47 = sbr.rel (0) target = $region37
    $region36: #{swim_block_forward.1} parent=1 // pred_region
      _
    $region37: #{swim_block_forward.1} parent=1 // pred_fallthru
      _
    // Predicated region
    $region38: #{swim_block_forward.1} parent=1 // pred_check
      _
    $region39: #{swim_block_forward.1} parent=1 // pred_check_branch
      %49 = sbr.rel (0) target = $region41
    $region40: #{swim_block_forward.1} parent=1 // pred_region
      _
    $region41: #{swim_block_forward.1} parent=1 // pred_fallthru
      _
    // Predicated region
    $region42: #{swim_block_forward.1} parent=1 // pred_check
      _
    $region43: #{swim_block_forward.1} parent=1 // pred_check_branch
      %51 = sbr.rel (0) target = $region45
    $region44: #{swim_block_forward.1} parent=1 // pred_region
      _
    $region45: #{swim_block_forward.1} parent=1 // pred_fallthru
      _
    // Predicated region
    $region46: #{swim_block_forward.1} parent=1 // pred_check
      _
    $region47: #{swim_block_forward.1} parent=1 // pred_check_branch
      %53 = sbr.rel (0) target = $region49
    $region48: #{swim_block_forward.1} parent=1 // pred_region
      _
    $region49: #{swim_block_forward.1} parent=1 // pred_fallthru
      _
    // Predicated region
    $region50: #{swim_block_forward.1} parent=1 // pred_check
      _
    $region51: #{swim_block_forward.1} parent=1 // pred_check_branch
      %55 = sbr.rel (0) target = $region53
    $region52: #{swim_block_forward.1} parent=1 // pred_region
      _
    $region53: #{swim_block_forward.1} parent=1 // pred_fallthru
      _
    // Predicated region
    $region54: #{swim_block_forward.1} parent=1 // pred_check
      _
    $region55: #{swim_block_forward.1} parent=1 // pred_check_branch
      %57 = sbr.rel (0) target = $region57
    $region56: #{swim_block_forward.1} parent=1 // pred_region
      _
    $region57: #{swim_block_forward.1} parent=1 // pred_fallthru
      _
    // Predicated region
    $region58: #{swim_block_forward.1} parent=1 // pred_check
      _
    $region59: #{swim_block_forward.1} parent=1 // pred_check_branch
      %59 = sbr.rel (0) target = $region61
    $region60: #{swim_block_forward.1} parent=1 // pred_region
      %60 = dma.done [#allocation3], 8192
    $region61: #{swim_block_forward.1} parent=1 // pred_fallthru
      _
    %v61 = vld [vmem:[%s0] sm:$0xff]
    %v62 = vld [vmem:[%s0 + $0x8] sm:$0xff]
    %v63 = vld [vmem:[%s0 + $0x10] sm:$0xff]
    %v64 = vld [vmem:[%s0 + $0x18] sm:$0xff]
    %v65 = vld [vmem:[%s0 + $0x20] sm:$0xff]
    %v66 = vld [vmem:[%s0 + $0x28] sm:$0xff]
    %v67 = vld [vmem:[%s0 + $0x30] sm:$0xff]
    %v68 = vld [vmem:[%s0 + $0x38] sm:$0xff]
    %v69 = vld [vmem:[%s0 + $0x40] sm:$0xff]
    %v70 = vld [vmem:[%s0 + $0x48] sm:$0xff]
    %v71 = vld [vmem:[%s0 + $0x50] sm:$0xff]
    %v72 = vld [vmem:[%s0 + $0x58] sm:$0xff]
    %v73 = vld [vmem:[%s0 + $0x60] sm:$0xff]
    %v74 = vld [vmem:[%s0 + $0x68] sm:$0xff]
    %v75 = vld [vmem:[%s0 + $0x70] sm:$0xff]
    %v76 = vld [vmem:[%s0 + $0x78] sm:$0xff]
    %vm77 = vcmask 261120
    %v78 = vsel %vm77, %v61, 0.0
    %79 = vadd.xlane.f32.xlu0 %v78
    %v80 = vpop.xlane.xlu0 %79
    %v81 = vsel %vm77, %v62, 0.0
    %82 = vadd.xlane.f32.xlu0 %v81
    %v83 = vpop.xlane.xlu0 %82
    %v84 = vsel %vm77, %v63, 0.0
    %85 = vadd.xlane.f32.xlu0 %v84
    %v86 = vpop.xlane.xlu0 %85
    %v87 = vsel %vm77, %v64, 0.0
    %88 = vadd.xlane.f32.xlu0 %v87
    %v89 = vpop.xlane.xlu0 %88
    %v90 = vsel %vm77, %v65, 0.0
    %91 = vadd.xlane.f32.xlu0 %v90
    %v92 = vpop.xlane.xlu0 %91
    %v93 = vsel %vm77, %v66, 0.0
    %94 = vadd.xlane.f32.xlu0 %v93
    %v95 = vpop.xlane.xlu0 %94
    %v96 = vsel %vm77, %v67, 0.0
    %97 = vadd.xlane.f32.xlu0 %v96
    %v98 = vpop.xlane.xlu0 %97
    %v99 = vsel %vm77, %v68, 0.0
    %100 = vadd.xlane.f32.xlu0 %v99
    %v101 = vpop.xlane.xlu0 %100
    %v102 = vsel %vm77, %v69, 0.0
    %103 = vadd.xlane.f32.xlu0 %v102
    %v104 = vpop.xlane.xlu0 %103
    %v105 = vsel %vm77, %v70, 0.0
    %106 = vadd.xlane.f32.xlu0 %v105
    %v107 = vpop.xlane.xlu0 %106
    %v108 = vsel %vm77, %v71, 0.0
    %109 = vadd.xlane.f32.xlu0 %v108
    %v110 = vpop.xlane.xlu0 %109
    %v111 = vsel %vm77, %v72, 0.0
    %112 = vadd.xlane.f32.xlu0 %v111
    %v113 = vpop.xlane.xlu0 %112
    %v114 = vsel %vm77, %v73, 0.0
    %115 = vadd.xlane.f32.xlu0 %v114
    %v116 = vpop.xlane.xlu0 %115
    %v117 = vsel %vm77, %v74, 0.0
    %118 = vadd.xlane.f32.xlu0 %v117
    %v119 = vpop.xlane.xlu0 %118
    %v120 = vsel %vm77, %v75, 0.0
    %121 = vadd.xlane.f32.xlu0 %v120
    %v122 = vpop.xlane.xlu0 %121
    %v123 = vsel %vm77, %v76, 0.0
    %124 = vadd.xlane.f32.xlu0 %v123
    %v125 = vpop.xlane.xlu0 %124
    %v126 = vrcp.pop 32.0
    %v127 = vmul.f32 %v80, %v126
    %v128 = vmul.f32 %v83, %v126
    %v129 = vmul.f32 %v86, %v126
    %v130 = vmul.f32 %v89, %v126
    %v131 = vmul.f32 %v92, %v126
    %v132 = vmul.f32 %v95, %v126
    %v133 = vmul.f32 %v98, %v126
    %v134 = vmul.f32 %v101, %v126
    %v135 = vmul.f32 %v104, %v126
    %v136 = vmul.f32 %v107, %v126
    %v137 = vmul.f32 %v110, %v126
    %v138 = vmul.f32 %v113, %v126
    %v139 = vmul.f32 %v116, %v126
    %v140 = vmul.f32 %v119, %v126
    %v141 = vmul.f32 %v122, %v126
    %v142 = vmul.f32 %v125, %v126
    %v143 = vmul.f32 %v61, %v61
    %v144 = vmul.f32 %v62, %v62
    %v145 = vmul.f32 %v63, %v63
    %v146 = vmul.f32 %v64, %v64
    %v147 = vmul.f32 %v65, %v65
    %v148 = vmul.f32 %v66, %v66
    %v149 = vmul.f32 %v67, %v67
    %v150 = vmul.f32 %v68, %v68
    %v151 = vmul.f32 %v69, %v69
    %v152 = vmul.f32 %v70, %v70
    %v153 = vmul.f32 %v71, %v71
    %v154 = vmul.f32 %v72, %v72
    %v155 = vmul.f32 %v73, %v73
    %v156 = vmul.f32 %v74, %v74
    %v157 = vmul.f32 %v75, %v75
    %v158 = vmul.f32 %v76, %v76
    %v159 = vsel %vm77, %v143, 0.0
    %160 = vadd.xlane.f32.xlu0 %v159
    %v161 = vpop.xlane.xlu0 %160
    %v162 = vsel %vm77, %v144, 0.0
    %163 = vadd.xlane.f32.xlu0 %v162
    %v164 = vpop.xlane.xlu0 %163
    %v165 = vsel %vm77, %v145, 0.0
    %166 = vadd.xlane.f32.xlu0 %v165
    %v167 = vpop.xlane.xlu0 %166
    %v168 = vsel %vm77, %v146, 0.0
    %169 = vadd.xlane.f32.xlu0 %v168
    %v170 = vpop.xlane.xlu0 %169
    %v171 = vsel %vm77, %v147, 0.0
    %172 = vadd.xlane.f32.xlu0 %v171
    %v173 = vpop.xlane.xlu0 %172
    %v174 = vsel %vm77, %v148, 0.0
    %175 = vadd.xlane.f32.xlu0 %v174
    %v176 = vpop.xlane.xlu0 %175
    %v177 = vsel %vm77, %v149, 0.0
    %178 = vadd.xlane.f32.xlu0 %v177
    %v179 = vpop.xlane.xlu0 %178
    %v180 = vsel %vm77, %v150, 0.0
    %181 = vadd.xlane.f32.xlu0 %v180
    %v182 = vpop.xlane.xlu0 %181
    %v183 = vsel %vm77, %v151, 0.0
    %184 = vadd.xlane.f32.xlu0 %v183
    %v185 = vpop.xlane.xlu0 %184
    %v186 = vsel %vm77, %v152, 0.0
    %187 = vadd.xlane.f32.xlu0 %v186
    %v188 = vpop.xlane.xlu0 %187
    %v189 = vsel %vm77, %v153, 0.0
    %190 = vadd.xlane.f32.xlu0 %v189
    %v191 = vpop.xlane.xlu0 %190
    %v192 = vsel %vm77, %v154, 0.0
    %193 = vadd.xlane.f32.xlu0 %v192
    %v194 = vpop.xlane.xlu0 %193
    %v195 = vsel %vm77, %v155, 0.0
    %196 = vadd.xlane.f32.xlu0 %v195
    %v197 = vpop.xlane.xlu0 %196
    %v198 = vsel %vm77, %v156, 0.0
    %199 = vadd.xlane.f32.xlu0 %v198
    %v200 = vpop.xlane.xlu0 %199
    %v201 = vsel %vm77, %v157, 0.0
    %202 = vadd.xlane.f32.xlu0 %v201
    %v203 = vpop.xlane.xlu0 %202
    %v204 = vsel %vm77, %v158, 0.0
    %205 = vadd.xlane.f32.xlu0 %v204
    %v206 = vpop.xlane.xlu0 %205
    %v207 = vmul.f32 %v161, %v126
    %v208 = vmul.f32 %v164, %v126
    %v209 = vmul.f32 %v167, %v126
    %v210 = vmul.f32 %v170, %v126
    %v211 = vmul.f32 %v173, %v126
    %v212 = vmul.f32 %v176, %v126
    %v213 = vmul.f32 %v179, %v126
    %v214 = vmul.f32 %v182, %v126
    %v215 = vmul.f32 %v185, %v126
    %v216 = vmul.f32 %v188, %v126
    %v217 = vmul.f32 %v191, %v126
    %v218 = vmul.f32 %v194, %v126
    %v219 = vmul.f32 %v197, %v126
    %v220 = vmul.f32 %v200, %v126
    %v221 = vmul.f32 %v203, %v126
    %v222 = vmul.f32 %v206, %v126
    %v223 = vsub.f32 %v61, %v127
    %v224 = vsub.f32 %v62, %v128
    %v225 = vsub.f32 %v63, %v129
    %v226 = vsub.f32 %v64, %v130
    %v227 = vsub.f32 %v65, %v131
    %v228 = vsub.f32 %v66, %v132
    %v229 = vsub.f32 %v67, %v133
    %v230 = vsub.f32 %v68, %v134
    %v231 = vsub.f32 %v69, %v135
    %v232 = vsub.f32 %v70, %v136
    %v233 = vsub.f32 %v71, %v137
    %v234 = vsub.f32 %v72, %v138
    %v235 = vsub.f32 %v73, %v139
    %v236 = vsub.f32 %v74, %v140
    %v237 = vsub.f32 %v75, %v141
    %v238 = vsub.f32 %v76, %v142
    %v239 = vmul.f32 %v127, %v127
    %v240 = vmul.f32 %v128, %v128
    %v241 = vmul.f32 %v129, %v129
    %v242 = vmul.f32 %v130, %v130
    %v243 = vmul.f32 %v131, %v131
    %v244 = vmul.f32 %v132, %v132
    %v245 = vmul.f32 %v133, %v133
    %v246 = vmul.f32 %v134, %v134
    %v247 = vmul.f32 %v135, %v135
    %v248 = vmul.f32 %v136, %v136
    %v249 = vmul.f32 %v137, %v137
    %v250 = vmul.f32 %v138, %v138
    %v251 = vmul.f32 %v139, %v139
    %v252 = vmul.f32 %v140, %v140
    %v253 = vmul.f32 %v141, %v141
    %v254 = vmul.f32 %v142, %v142
    %v255 = vsub.f32 %v207, %v239
    %v256 = vsub.f32 %v208, %v240
    %v257 = vsub.f32 %v209, %v241
    %v258 = vsub.f32 %v210, %v242
    %v259 = vsub.f32 %v211, %v243
    %v260 = vsub.f32 %v212, %v244
    %v261 = vsub.f32 %v213, %v245
    %v262 = vsub.f32 %v214, %v246
    %v263 = vsub.f32 %v215, %v247
    %v264 = vsub.f32 %v216, %v248
    %v265 = vsub.f32 %v217, %v249
    %v266 = vsub.f32 %v218, %v250
    %v267 = vsub.f32 %v219, %v251
    %v268 = vsub.f32 %v220, %v252
    %v269 = vsub.f32 %v221, %v253
    %v270 = vsub.f32 %v222, %v254
    %v271 = vadd.f32 %v255, 1e-05
    %v272 = vadd.f32 %v256, 1e-05
    %v273 = vadd.f32 %v257, 1e-05
    %v274 = vadd.f32 %v258, 1e-05
    %v275 = vadd.f32 %v259, 1e-05
    %v276 = vadd.f32 %v260, 1e-05
    %v277 = vadd.f32 %v261, 1e-05
    %v278 = vadd.f32 %v262, 1e-05
    %v279 = vadd.f32 %v263, 1e-05
    %v280 = vadd.f32 %v264, 1e-05
    %v281 = vadd.f32 %v265, 1e-05
    %v282 = vadd.f32 %v266, 1e-05
    %v283 = vadd.f32 %v267, 1e-05
    %v284 = vadd.f32 %v268, 1e-05
    %v285 = vadd.f32 %v269, 1e-05
    %v286 = vadd.f32 %v270, 1e-05
    %v287 = vrsqrt.pop %v271
    %v288 = vrsqrt.pop %v272
    %v289 = vrsqrt.pop %v273
    %v290 = vrsqrt.pop %v274
    %v291 = vrsqrt.pop %v275
    %v292 = vrsqrt.pop %v276
    %v293 = vrsqrt.pop %v277
    %v294 = vrsqrt.pop %v278
    %v295 = vrsqrt.pop %v279
    %v296 = vrsqrt.pop %v280
    %v297 = vrsqrt.pop %v281
    %v298 = vrsqrt.pop %v282
    %v299 = vrsqrt.pop %v283
    %v300 = vrsqrt.pop %v284
    %v301 = vrsqrt.pop %v285
    %v302 = vrsqrt.pop %v286
    %v303 = vmul.f32 %v223, %v287
    %v304 = vmul.f32 %v224, %v288
    %v305 = vmul.f32 %v225, %v289
    %v306 = vmul.f32 %v226, %v290
    %v307 = vmul.f32 %v227, %v291
    %v308 = vmul.f32 %v228, %v292
    %v309 = vmul.f32 %v229, %v293
    %v310 = vmul.f32 %v230, %v294
    %v311 = vmul.f32 %v231, %v295
    %v312 = vmul.f32 %v232, %v296
    %v313 = vmul.f32 %v233, %v297
    %v314 = vmul.f32 %v234, %v298
    %v315 = vmul.f32 %v235, %v299
    %v316 = vmul.f32 %v236, %v300
    %v317 = vmul.f32 %v237, %v301
    %v318 = vmul.f32 %v238, %v302
    %v319 = vld [vmem:[%s1] sm:$0x1]
    %v321 = vlaneseq
    %v322 = vshrl.u32 %v321, 7
    %v323 = vsub.s32 0, %v322
    %v324 = vrot.slane %v319, %v323
    %v326 = vmul.f32 %v303, %v324
    %v327 = vmul.f32 %v304, %v324
    %v328 = vmul.f32 %v305, %v324
    %v329 = vmul.f32 %v306, %v324
    %v330 = vmul.f32 %v307, %v324
    %v331 = vmul.f32 %v308, %v324
    %v332 = vmul.f32 %v309, %v324
    %v333 = vmul.f32 %v310, %v324
    %v334 = vmul.f32 %v311, %v324
    %v335 = vmul.f32 %v312, %v324
    %v336 = vmul.f32 %v313, %v324
    %v337 = vmul.f32 %v314, %v324
    %v338 = vmul.f32 %v315, %v324
    %v339 = vmul.f32 %v316, %v324
    %v340 = vmul.f32 %v317, %v324
    %v341 = vmul.f32 %v318, %v324
    %v342 = vld [vmem:[%s2] sm:$0x1]
    %v344 = vlaneseq
    %v345 = vshrl.u32 %v344, 7
    %v346 = vsub.s32 0, %v345
    %v347 = vrot.slane %v342, %v346
    %v349 = vadd.f32 %v326, %v347
    %v350 = vadd.f32 %v327, %v347
    %v351 = vadd.f32 %v328, %v347
    %v352 = vadd.f32 %v329, %v347
    %v353 = vadd.f32 %v330, %v347
    %v354 = vadd.f32 %v331, %v347
    %v355 = vadd.f32 %v332, %v347
    %v356 = vadd.f32 %v333, %v347
    %v357 = vadd.f32 %v334, %v347
    %v358 = vadd.f32 %v335, %v347
    %v359 = vadd.f32 %v336, %v347
    %v360 = vadd.f32 %v337, %v347
    %v361 = vadd.f32 %v338, %v347
    %v362 = vadd.f32 %v339, %v347
    %v363 = vadd.f32 %v340, %v347
    %v364 = vadd.f32 %v341, %v347
    %v365 = vld [vmem:[%s3] sm:$0xff]
    %v366 = vld [vmem:[%s3 + $0x8] sm:$0xff]
    %v367 = vld [vmem:[%s3 + $0x10] sm:$0xff]
    %v368 = vld [vmem:[%s3 + $0x18] sm:$0xff]
    %v369 = vld [vmem:[%s4] sm:$0x1]
    %v371 = vlaneseq
    %v372 = vshrl.u32 %v371, 7
    %v373 = vsub.s32 0, %v372
    %v374 = vrot.slane %v369, %v373
    %v377 = vsel %vm77, %v349, 0
    %v380 = vsel %vm77, %v350, 0
    %v383 = vsel %vm77, %v351, 0
    %v386 = vsel %vm77, %v352, 0
    %v389 = vsel %vm77, %v353, 0
    %v392 = vsel %vm77, %v354, 0
    %v395 = vsel %vm77, %v355, 0
    %v398 = vsel %vm77, %v356, 0
    %v401 = vsel %vm77, %v357, 0
    %v404 = vsel %vm77, %v358, 0
    %v407 = vsel %vm77, %v359, 0
    %v410 = vsel %vm77, %v360, 0
    %v413 = vsel %vm77, %v361, 0
    %v416 = vsel %vm77, %v362, 0
    %v419 = vsel %vm77, %v363, 0
    %v422 = vsel %vm77, %v364, 0
    %424 = vmatprep.subr.mxu0 0.0
    %425 = vmatpush1.msra.mxu0 0.0
    %426 = vmatprep.subr.mxu0 0.0
    %427 = vmatpush1.msra.mxu0 0.0
    %428 = vmatprep.subr.mxu0 0.0
    %429 = vmatpush1.msra.mxu0 0.0
    %430 = vmatprep.subr.mxu0 0.0
    %431 = vmatpush1.msra.mxu0 0.0
    %432 = vmatprep.subr.mxu0 0.0
    %433 = vmatpush1.msra.mxu0 0.0
    %434 = vmatprep.subr.mxu0 0.0
    %435 = vmatpush1.msra.mxu0 0.0
    %436 = vmatprep.subr.mxu0 0.0
    %437 = vmatpush1.msra.mxu0 0.0
    %438 = vmatprep.subr.mxu0 0.0
    %439 = vmatpush1.msra.mxu0 0.0
    %440 = vmatprep.subr.mxu0 0.0
    %441 = vmatpush1.msra.mxu0 0.0
    %442 = vmatprep.subr.mxu0 0.0
    %443 = vmatpush1.msra.mxu0 0.0
    %444 = vmatprep.subr.mxu0 0.0
    %445 = vmatpush1.msra.mxu0 0.0
    %446 = vmatprep.subr.mxu0 0.0
    %447 = vmatpush1.msra.mxu0 0.0
    %448 = vmatprep.subr.mxu0 0.0
    %449 = vmatpush1.msra.mxu0 %v368
    %450 = vmatprep.subr.mxu0 0.0
    %451 = vmatpush1.msra.mxu0 %v367
    %452 = vmatprep.subr.mxu0 0.0
    %453 = vmatpush1.msra.mxu0 %v366
    %454 = vmatprep.subr.mxu0 0.0
    %455 = vmatpush1.msra.mxu0 %v365
    %456 = vmatprep.subr.mxu0 0.0
    %457 = vmatpush2.msra.mxu0 0.0
    %458 = vmatprep.subr.mxu0 0.0
    %459 = vmatpush2.msra.mxu0 0.0
    %460 = vmatprep.subr.mxu0 0.0
    %461 = vmatpush2.msra.mxu0 0.0
    %462 = vmatprep.subr.mxu0 0.0
    %463 = vmatpush2.msra.mxu0 0.0
    %464 = vmatprep.subr.mxu0 0.0
    %465 = vmatpush2.msra.mxu0 0.0
    %466 = vmatprep.subr.mxu0 0.0
    %467 = vmatpush2.msra.mxu0 0.0
    %468 = vmatprep.subr.mxu0 0.0
    %469 = vmatpush2.msra.mxu0 0.0
    %470 = vmatprep.subr.mxu0 0.0
    %471 = vmatpush2.msra.mxu0 0.0
    %472 = vmatprep.subr.mxu0 0.0
    %473 = vmatpush2.msra.mxu0 0.0
    %474 = vmatprep.subr.mxu0 0.0
    %475 = vmatpush2.msra.mxu0 0.0
    %476 = vmatprep.subr.mxu0 0.0
    %477 = vmatpush2.msra.mxu0 0.0
    %478 = vmatprep.subr.mxu0 0.0
    %479 = vmatpush2.msra.mxu0 0.0
    %480 = vmatprep.subr.mxu0 0.0
    %481 = vmatpush2.msra.mxu0 0.0
    %482 = vmatprep.subr.mxu0 0.0
    %483 = vmatpush2.msra.mxu0 0.0
    %484 = vmatprep.subr.mxu0 0.0
    %485 = vmatpush2.msra.mxu0 0.0
    %486 = vmatprep.subr.mxu0 0.0
    %487 = vmatpush2.msra.mxu0 0.0
    %488 = vmatprep.mubr.f32.mxu0 0.0
    %489 = vmatmul.mubr.f32.gmra.mxu0 %v377
    %v490 = vpop.f32.mrf.mxu0
    %v491 = vadd.f32 %v374, %v490
    %v492 = vpop.f32.mrf.mxu0
    %493 = vmatprep.mubr.f32.mxu0 0.0
    %494 = vmatmul.mubr.f32.gmra.mxu0 %v380
    %v495 = vpop.f32.mrf.mxu0
    %v496 = vadd.f32 %v374, %v495
    %v497 = vpop.f32.mrf.mxu0
    %498 = vmatprep.mubr.f32.mxu0 0.0
    %499 = vmatmul.mubr.f32.gmra.mxu0 %v383
    %v500 = vpop.f32.mrf.mxu0
    %v501 = vadd.f32 %v374, %v500
    %v502 = vpop.f32.mrf.mxu0
    %503 = vmatprep.mubr.f32.mxu0 0.0
    %504 = vmatmul.mubr.f32.gmra.mxu0 %v386
    %v505 = vpop.f32.mrf.mxu0
    %v506 = vadd.f32 %v374, %v505
    %v507 = vpop.f32.mrf.mxu0
    %508 = vmatprep.mubr.f32.mxu0 0.0
    %509 = vmatmul.mubr.f32.gmra.mxu0 %v389
    %v510 = vpop.f32.mrf.mxu0
    %v511 = vadd.f32 %v374, %v510
    %v512 = vpop.f32.mrf.mxu0
    %513 = vmatprep.mubr.f32.mxu0 0.0
    %514 = vmatmul.mubr.f32.gmra.mxu0 %v392
    %v515 = vpop.f32.mrf.mxu0
    %v516 = vadd.f32 %v374, %v515
    %v517 = vpop.f32.mrf.mxu0
    %518 = vmatprep.mubr.f32.mxu0 0.0
    %519 = vmatmul.mubr.f32.gmra.mxu0 %v395
    %v520 = vpop.f32.mrf.mxu0
    %v521 = vadd.f32 %v374, %v520
    %v522 = vpop.f32.mrf.mxu0
    %523 = vmatprep.mubr.f32.mxu0 0.0
    %524 = vmatmul.mubr.f32.gmra.mxu0 %v398
    %v525 = vpop.f32.mrf.mxu0
    %v526 = vadd.f32 %v374, %v525
    %v527 = vpop.f32.mrf.mxu0
    %528 = vmatprep.mubr.f32.mxu0 0.0
    %529 = vmatmul.mubr.f32.gmra.mxu0 %v401
    %v530 = vpop.f32.mrf.mxu0
    %v531 = vadd.f32 %v374, %v530
    %v532 = vpop.f32.mrf.mxu0
    %533 = vmatprep.mubr.f32.mxu0 0.0
    %534 = vmatmul.mubr.f32.gmra.mxu0 %v404
    %v535 = vpop.f32.mrf.mxu0
    %v536 = vadd.f32 %v374, %v535
    %v537 = vpop.f32.mrf.mxu0
    %538 = vmatprep.mubr.f32.mxu0 0.0
    %539 = vmatmul.mubr.f32.gmra.mxu0 %v407
    %v540 = vpop.f32.mrf.mxu0
    %v541 = vadd.f32 %v374, %v540
    %v542 = vpop.f32.mrf.mxu0
    %543 = vmatprep.mubr.f32.mxu0 0.0
    %544 = vmatmul.mubr.f32.gmra.mxu0 %v410
    %v545 = vpop.f32.mrf.mxu0
    %v546 = vadd.f32 %v374, %v545
    %v547 = vpop.f32.mrf.mxu0
    %548 = vmatprep.mubr.f32.mxu0 0.0
    %549 = vmatmul.mubr.f32.gmra.mxu0 %v413
    %v550 = vpop.f32.mrf.mxu0
    %v551 = vadd.f32 %v374, %v550
    %v552 = vpop.f32.mrf.mxu0
    %553 = vmatprep.mubr.f32.mxu0 0.0
    %554 = vmatmul.mubr.f32.gmra.mxu0 %v416
    %v555 = vpop.f32.mrf.mxu0
    %v556 = vadd.f32 %v374, %v555
    %v557 = vpop.f32.mrf.mxu0
    %558 = vmatprep.mubr.f32.mxu0 0.0
    %559 = vmatmul.mubr.f32.gmra.mxu0 %v419
    %v560 = vpop.f32.mrf.mxu0
    %v561 = vadd.f32 %v374, %v560
    %v562 = vpop.f32.mrf.mxu0
    %563 = vmatprep.mubr.f32.mxu0 0.0
    %564 = vmatmul.mubr.f32.gmra.mxu0 %v422
    %v565 = vpop.f32.mrf.mxu0
    %v566 = vadd.f32 %v374, %v565
    %v567 = vpop.f32.mrf.mxu0
    %568 = vdwg.mxu0
    %v569 = vld [vmem:[%s5] sm:$0xff]
    %v570 = vld [vmem:[%s5 + $0x8] sm:$0xff]
    %v571 = vld [vmem:[%s5 + $0x10] sm:$0xff]
    %v572 = vld [vmem:[%s5 + $0x18] sm:$0xff]
    %573 = vmatprep.subr.mxu0 0.0
    %574 = vmatpush1.msra.mxu0 0.0
    %575 = vmatprep.subr.mxu0 0.0
    %576 = vmatpush1.msra.mxu0 0.0
    %577 = vmatprep.subr.mxu0 0.0
    %578 = vmatpush1.msra.mxu0 0.0
    %579 = vmatprep.subr.mxu0 0.0
    %580 = vmatpush1.msra.mxu0 0.0
    %581 = vmatprep.subr.mxu0 0.0
    %582 = vmatpush1.msra.mxu0 0.0
    %583 = vmatprep.subr.mxu0 0.0
    %584 = vmatpush1.msra.mxu0 0.0
    %585 = vmatprep.subr.mxu0 0.0
    %586 = vmatpush1.msra.mxu0 0.0
    %587 = vmatprep.subr.mxu0 0.0
    %588 = vmatpush1.msra.mxu0 0.0
    %589 = vmatprep.subr.mxu0 0.0
    %590 = vmatpush1.msra.mxu0 0.0
    %591 = vmatprep.subr.mxu0 0.0
    %592 = vmatpush1.msra.mxu0 0.0
    %593 = vmatprep.subr.mxu0 0.0
    %594 = vmatpush1.msra.mxu0 0.0
    %595 = vmatprep.subr.mxu0 0.0
    %596 = vmatpush1.msra.mxu0 0.0
    %597 = vmatprep.subr.mxu0 0.0
    %598 = vmatpush1.msra.mxu0 %v572
    %599 = vmatprep.subr.mxu0 0.0
    %600 = vmatpush1.msra.mxu0 %v571
    %601 = vmatprep.subr.mxu0 0.0
    %602 = vmatpush1.msra.mxu0 %v570
    %603 = vmatprep.subr.mxu0 0.0
    %604 = vmatpush1.msra.mxu0 %v569
    %605 = vmatprep.subr.mxu0 0.0
    %606 = vmatpush2.msra.mxu0 0.0
    %607 = vmatprep.subr.mxu0 0.0
    %608 = vmatpush2.msra.mxu0 0.0
    %609 = vmatprep.subr.mxu0 0.0
    %610 = vmatpush2.msra.mxu0 0.0
    %611 = vmatprep.subr.mxu0 0.0
    %612 = vmatpush2.msra.mxu0 0.0
    %613 = vmatprep.subr.mxu0 0.0
    %614 = vmatpush2.msra.mxu0 0.0
    %615 = vmatprep.subr.mxu0 0.0
    %616 = vmatpush2.msra.mxu0 0.0
    %617 = vmatprep.subr.mxu0 0.0
    %618 = vmatpush2.msra.mxu0 0.0
    %619 = vmatprep.subr.mxu0 0.0
    %620 = vmatpush2.msra.mxu0 0.0
    %621 = vmatprep.subr.mxu0 0.0
    %622 = vmatpush2.msra.mxu0 0.0
    %623 = vmatprep.subr.mxu0 0.0
    %624 = vmatpush2.msra.mxu0 0.0
    %625 = vmatprep.subr.mxu0 0.0
    %626 = vmatpush2.msra.mxu0 0.0
    %627 = vmatprep.subr.mxu0 0.0
    %628 = vmatpush2.msra.mxu0 0.0
    %629 = vmatprep.subr.mxu0 0.0
    %630 = vmatpush2.msra.mxu0 0.0
    %631 = vmatprep.subr.mxu0 0.0
    %632 = vmatpush2.msra.mxu0 0.0
    %633 = vmatprep.subr.mxu0 0.0
    %634 = vmatpush2.msra.mxu0 0.0
    %635 = vmatprep.subr.mxu0 0.0
    %636 = vmatpush2.msra.mxu0 0.0
    %637 = vmatprep.mubr.f32.mxu0 0.0
    %638 = vmatmul.mubr.f32.gmra.mxu0 %v377
    %v639 = vpop.f32.mrf.mxu0
    %v640 = vadd.f32 0.0, %v639
    %v641 = vpop.f32.mrf.mxu0
    %642 = vmatprep.mubr.f32.mxu0 0.0
    %643 = vmatmul.mubr.f32.gmra.mxu0 %v380
    %v644 = vpop.f32.mrf.mxu0
    %v645 = vadd.f32 0.0, %v644
    %v646 = vpop.f32.mrf.mxu0
    %647 = vmatprep.mubr.f32.mxu0 0.0
    %648 = vmatmul.mubr.f32.gmra.mxu0 %v383
    %v649 = vpop.f32.mrf.mxu0
    %v650 = vadd.f32 0.0, %v649
    %v651 = vpop.f32.mrf.mxu0
    %652 = vmatprep.mubr.f32.mxu0 0.0
    %653 = vmatmul.mubr.f32.gmra.mxu0 %v386
    %v654 = vpop.f32.mrf.mxu0
    %v655 = vadd.f32 0.0, %v654
    %v656 = vpop.f32.mrf.mxu0
    %657 = vmatprep.mubr.f32.mxu0 0.0
    %658 = vmatmul.mubr.f32.gmra.mxu0 %v389
    %v659 = vpop.f32.mrf.mxu0
    %v660 = vadd.f32 0.0, %v659
    %v661 = vpop.f32.mrf.mxu0
    %662 = vmatprep.mubr.f32.mxu0 0.0
    %663 = vmatmul.mubr.f32.gmra.mxu0 %v392
    %v664 = vpop.f32.mrf.mxu0
    %v665 = vadd.f32 0.0, %v664
    %v666 = vpop.f32.mrf.mxu0
    %667 = vmatprep.mubr.f32.mxu0 0.0
    %668 = vmatmul.mubr.f32.gmra.mxu0 %v395
    %v669 = vpop.f32.mrf.mxu0
    %v670 = vadd.f32 0.0, %v669
    %v671 = vpop.f32.mrf.mxu0
    %672 = vmatprep.mubr.f32.mxu0 0.0
    %673 = vmatmul.mubr.f32.gmra.mxu0 %v398
    %v674 = vpop.f32.mrf.mxu0
    %v675 = vadd.f32 0.0, %v674
    %v676 = vpop.f32.mrf.mxu0
    %677 = vmatprep.mubr.f32.mxu0 0.0
    %678 = vmatmul.mubr.f32.gmra.mxu0 %v401
    %v679 = vpop.f32.mrf.mxu0
    %v680 = vadd.f32 0.0, %v679
    %v681 = vpop.f32.mrf.mxu0
    %682 = vmatprep.mubr.f32.mxu0 0.0
    %683 = vmatmul.mubr.f32.gmra.mxu0 %v404
    %v684 = vpop.f32.mrf.mxu0
    %v685 = vadd.f32 0.0, %v684
    %v686 = vpop.f32.mrf.mxu0
    %687 = vmatprep.mubr.f32.mxu0 0.0
    %688 = vmatmul.mubr.f32.gmra.mxu0 %v407
    %v689 = vpop.f32.mrf.mxu0
    %v690 = vadd.f32 0.0, %v689
    %v691 = vpop.f32.mrf.mxu0
    %692 = vmatprep.mubr.f32.mxu0 0.0
    %693 = vmatmul.mubr.f32.gmra.mxu0 %v410
    %v694 = vpop.f32.mrf.mxu0
    %v695 = vadd.f32 0.0, %v694
    %v696 = vpop.f32.mrf.mxu0
    %697 = vmatprep.mubr.f32.mxu0 0.0
    %698 = vmatmul.mubr.f32.gmra.mxu0 %v413
    %v699 = vpop.f32.mrf.mxu0
    %v700 = vadd.f32 0.0, %v699
    %v701 = vpop.f32.mrf.mxu0
    %702 = vmatprep.mubr.f32.mxu0 0.0
    %703 = vmatmul.mubr.f32.gmra.mxu0 %v416
    %v704 = vpop.f32.mrf.mxu0
    %v705 = vadd.f32 0.0, %v704
    %v706 = vpop.f32.mrf.mxu0
    %707 = vmatprep.mubr.f32.mxu0 0.0
    %708 = vmatmul.mubr.f32.gmra.mxu0 %v419
    %v709 = vpop.f32.mrf.mxu0
    %v710 = vadd.f32 0.0, %v709
    %v711 = vpop.f32.mrf.mxu0
    %712 = vmatprep.mubr.f32.mxu0 0.0
    %713 = vmatmul.mubr.f32.gmra.mxu0 %v422
    %v714 = vpop.f32.mrf.mxu0
    %v715 = vadd.f32 0.0, %v714
    %v716 = vpop.f32.mrf.mxu0
    %717 = vdwg.mxu0
    %v718 = vld [vmem:[#allocation2] sm:$0xff]
    %v719 = vld [vmem:[#allocation2 + $0x8] sm:$0xff]
    %v720 = vld [vmem:[#allocation2 + $0x10] sm:$0xff]
    %v721 = vld [vmem:[#allocation2 + $0x18] sm:$0xff]
    %v722 = vld [vmem:[#allocation2 + $0x20] sm:$0xff]
    %v723 = vld [vmem:[#allocation2 + $0x28] sm:$0xff]
    %v724 = vld [vmem:[#allocation2 + $0x30] sm:$0xff]
    %v725 = vld [vmem:[#allocation2 + $0x38] sm:$0xff]
    %v726 = vld [vmem:[#allocation2 + $0x40] sm:$0xff]
    %v727 = vld [vmem:[#allocation2 + $0x48] sm:$0xff]
    %v728 = vld [vmem:[#allocation2 + $0x50] sm:$0xff]
    %v729 = vld [vmem:[#allocation2 + $0x58] sm:$0xff]
    %v730 = vld [vmem:[#allocation2 + $0x60] sm:$0xff]
    %v731 = vld [vmem:[#allocation2 + $0x68] sm:$0xff]
    %v732 = vld [vmem:[#allocation2 + $0x70] sm:$0xff]
    %v733 = vld [vmem:[#allocation2 + $0x78] sm:$0xff]
    %750 = vrot.lane.b32.xlu0 %v491, 96
    %v751 = vpop.permute.xlu0 %750
    %752 = vrot.lane.b32.xlu0 %v496, 96
    %v753 = vpop.permute.xlu0 %752
    %754 = vrot.lane.b32.xlu0 %v501, 96
    %v755 = vpop.permute.xlu0 %754
    %756 = vrot.lane.b32.xlu0 %v506, 96
    %v757 = vpop.permute.xlu0 %756
    %758 = vrot.lane.b32.xlu0 %v511, 96
    %v759 = vpop.permute.xlu0 %758
    %760 = vrot.lane.b32.xlu0 %v516, 96
    %v761 = vpop.permute.xlu0 %760
    %762 = vrot.lane.b32.xlu0 %v521, 96
    %v763 = vpop.permute.xlu0 %762
    %764 = vrot.lane.b32.xlu0 %v526, 96
    %v765 = vpop.permute.xlu0 %764
    %766 = vrot.lane.b32.xlu0 %v531, 96
    %v767 = vpop.permute.xlu0 %766
    %768 = vrot.lane.b32.xlu0 %v536, 96
    %v769 = vpop.permute.xlu0 %768
    %770 = vrot.lane.b32.xlu0 %v541, 96
    %v771 = vpop.permute.xlu0 %770
    %772 = vrot.lane.b32.xlu0 %v546, 96
    %v773 = vpop.permute.xlu0 %772
    %774 = vrot.lane.b32.xlu0 %v551, 96
    %v775 = vpop.permute.xlu0 %774
    %776 = vrot.lane.b32.xlu0 %v556, 96
    %v777 = vpop.permute.xlu0 %776
    %778 = vrot.lane.b32.xlu0 %v561, 96
    %v779 = vpop.permute.xlu0 %778
    %780 = vrot.lane.b32.xlu0 %v566, 96
    %v781 = vpop.permute.xlu0 %780
    %vm782 = vcmask 64512
    %v783 = vsel %vm782, %v491, 0
    %v785 = vsel %vm782, %v496, 0
    %v787 = vsel %vm782, %v501, 0
    %v789 = vsel %vm782, %v506, 0
    %v791 = vsel %vm782, %v511, 0
    %v793 = vsel %vm782, %v516, 0
    %v795 = vsel %vm782, %v521, 0
    %v797 = vsel %vm782, %v526, 0
    %v799 = vsel %vm782, %v531, 0
    %v801 = vsel %vm782, %v536, 0
    %v803 = vsel %vm782, %v541, 0
    %v805 = vsel %vm782, %v546, 0
    %v807 = vsel %vm782, %v551, 0
    %v809 = vsel %vm782, %v556, 0
    %v811 = vsel %vm782, %v561, 0
    %v813 = vsel %vm782, %v566, 0
    %v815 = vsel %vm782, %v751, 0
    %v817 = vsel %vm782, %v753, 0
    %v819 = vsel %vm782, %v755, 0
    %v821 = vsel %vm782, %v757, 0
    %v823 = vsel %vm782, %v759, 0
    %v825 = vsel %vm782, %v761, 0
    %v827 = vsel %vm782, %v763, 0
    %v829 = vsel %vm782, %v765, 0
    %v831 = vsel %vm782, %v767, 0
    %v833 = vsel %vm782, %v769, 0
    %v835 = vsel %vm782, %v771, 0
    %v837 = vsel %vm782, %v773, 0
    %v839 = vsel %vm782, %v775, 0
    %v841 = vsel %vm782, %v777, 0
    %v843 = vsel %vm782, %v779, 0
    %v845 = vsel %vm782, %v781, 0
    %847 = vmatprep.subr.mxu0 0.0
    %848 = vmatpush1.xpose.msra.mxu0 %v845
    %849 = vmatprep.subr.mxu0 0.0
    %850 = vmatpush1.xpose.msra.mxu0 %v843
    %851 = vmatprep.subr.mxu0 0.0
    %852 = vmatpush1.xpose.msra.mxu0 %v841
    %853 = vmatprep.subr.mxu0 0.0
    %854 = vmatpush1.xpose.msra.mxu0 %v839
    %855 = vmatprep.subr.mxu0 0.0
    %856 = vmatpush1.xpose.msra.mxu0 %v837
    %857 = vmatprep.subr.mxu0 0.0
    %858 = vmatpush1.xpose.msra.mxu0 %v835
    %859 = vmatprep.subr.mxu0 0.0
    %860 = vmatpush1.xpose.msra.mxu0 %v833
    %861 = vmatprep.subr.mxu0 0.0
    %862 = vmatpush1.xpose.msra.mxu0 %v831
    %863 = vmatprep.subr.mxu0 0.0
    %864 = vmatpush1.xpose.msra.mxu0 %v829
    %865 = vmatprep.subr.mxu0 0.0
    %866 = vmatpush1.xpose.msra.mxu0 %v827
    %867 = vmatprep.subr.mxu0 0.0
    %868 = vmatpush1.xpose.msra.mxu0 %v825
    %869 = vmatprep.subr.mxu0 0.0
    %870 = vmatpush1.xpose.msra.mxu0 %v823
    %871 = vmatprep.subr.mxu0 0.0
    %872 = vmatpush1.xpose.msra.mxu0 %v821
    %873 = vmatprep.subr.mxu0 0.0
    %874 = vmatpush1.xpose.msra.mxu0 %v819
    %875 = vmatprep.subr.mxu0 0.0
    %876 = vmatpush1.xpose.msra.mxu0 %v817
    %877 = vmatprep.subr.mxu0 0.0
    %878 = vmatpush1.xpose.msra.mxu0 %v815
    %879 = vmatprep.subr.mxu0 0.0
    %880 = vmatpush2.xpose.msra.mxu0 0.0
    %881 = vmatprep.subr.mxu0 0.0
    %882 = vmatpush2.xpose.msra.mxu0 0.0
    %883 = vmatprep.subr.mxu0 0.0
    %884 = vmatpush2.xpose.msra.mxu0 0.0
    %885 = vmatprep.subr.mxu0 0.0
    %886 = vmatpush2.xpose.msra.mxu0 0.0
    %887 = vmatprep.subr.mxu0 0.0
    %888 = vmatpush2.xpose.msra.mxu0 0.0
    %889 = vmatprep.subr.mxu0 0.0
    %890 = vmatpush2.xpose.msra.mxu0 0.0
    %891 = vmatprep.subr.mxu0 0.0
    %892 = vmatpush2.xpose.msra.mxu0 0.0
    %893 = vmatprep.subr.mxu0 0.0
    %894 = vmatpush2.xpose.msra.mxu0 0.0
    %895 = vmatprep.subr.mxu0 0.0
    %896 = vmatpush2.xpose.msra.mxu0 0.0
    %897 = vmatprep.subr.mxu0 0.0
    %898 = vmatpush2.xpose.msra.mxu0 0.0
    %899 = vmatprep.subr.mxu0 0.0
    %900 = vmatpush2.xpose.msra.mxu0 0.0
    %901 = vmatprep.subr.mxu0 0.0
    %902 = vmatpush2.xpose.msra.mxu0 0.0
    %903 = vmatprep.subr.mxu0 0.0
    %904 = vmatpush2.xpose.msra.mxu0 0.0
    %905 = vmatprep.subr.mxu0 0.0
    %906 = vmatpush2.xpose.msra.mxu0 0.0
    %907 = vmatprep.subr.mxu0 0.0
    %908 = vmatpush2.xpose.msra.mxu0 0.0
    %909 = vmatprep.subr.mxu0 0.0
    %910 = vmatpush2.xpose.msra.mxu0 0.0
    %911 = vmatprep.mubr.f32.mxu0 0.0
    %912 = vmatmul.mubr.f32.gmra.mxu0 %v783
    %v913 = vpop.f32.mrf.mxu0
    %v914 = vadd.f32 %v718, %v913
    %v915 = vpop.f32.mrf.mxu0
    %916 = vmatprep.mubr.f32.mxu0 0.0
    %917 = vmatmul.mubr.f32.gmra.mxu0 %v785
    %v918 = vpop.f32.mrf.mxu0
    %v919 = vadd.f32 %v719, %v918
    %v920 = vpop.f32.mrf.mxu0
    %921 = vmatprep.mubr.f32.mxu0 0.0
    %922 = vmatmul.mubr.f32.gmra.mxu0 %v787
    %v923 = vpop.f32.mrf.mxu0
    %v924 = vadd.f32 %v720, %v923
    %v925 = vpop.f32.mrf.mxu0
    %926 = vmatprep.mubr.f32.mxu0 0.0
    %927 = vmatmul.mubr.f32.gmra.mxu0 %v789
    %v928 = vpop.f32.mrf.mxu0
    %v929 = vadd.f32 %v721, %v928
    %v930 = vpop.f32.mrf.mxu0
    %931 = vmatprep.mubr.f32.mxu0 0.0
    %932 = vmatmul.mubr.f32.gmra.mxu0 %v791
    %v933 = vpop.f32.mrf.mxu0
    %v934 = vadd.f32 %v722, %v933
    %v935 = vpop.f32.mrf.mxu0
    %936 = vmatprep.mubr.f32.mxu0 0.0
    %937 = vmatmul.mubr.f32.gmra.mxu0 %v793
    %v938 = vpop.f32.mrf.mxu0
    %v939 = vadd.f32 %v723, %v938
    %v940 = vpop.f32.mrf.mxu0
    %941 = vmatprep.mubr.f32.mxu0 0.0
    %942 = vmatmul.mubr.f32.gmra.mxu0 %v795
    %v943 = vpop.f32.mrf.mxu0
    %v944 = vadd.f32 %v724, %v943
    %v945 = vpop.f32.mrf.mxu0
    %946 = vmatprep.mubr.f32.mxu0 0.0
    %947 = vmatmul.mubr.f32.gmra.mxu0 %v797
    %v948 = vpop.f32.mrf.mxu0
    %v949 = vadd.f32 %v725, %v948
    %v950 = vpop.f32.mrf.mxu0
    %951 = vmatprep.mubr.f32.mxu0 0.0
    %952 = vmatmul.mubr.f32.gmra.mxu0 %v799
    %v953 = vpop.f32.mrf.mxu0
    %v954 = vadd.f32 %v726, %v953
    %v955 = vpop.f32.mrf.mxu0
    %956 = vmatprep.mubr.f32.mxu0 0.0
    %957 = vmatmul.mubr.f32.gmra.mxu0 %v801
    %v958 = vpop.f32.mrf.mxu0
    %v959 = vadd.f32 %v727, %v958
    %v960 = vpop.f32.mrf.mxu0
    %961 = vmatprep.mubr.f32.mxu0 0.0
    %962 = vmatmul.mubr.f32.gmra.mxu0 %v803
    %v963 = vpop.f32.mrf.mxu0
    %v964 = vadd.f32 %v728, %v963
    %v965 = vpop.f32.mrf.mxu0
    %966 = vmatprep.mubr.f32.mxu0 0.0
    %967 = vmatmul.mubr.f32.gmra.mxu0 %v805
    %v968 = vpop.f32.mrf.mxu0
    %v969 = vadd.f32 %v729, %v968
    %v970 = vpop.f32.mrf.mxu0
    %971 = vmatprep.mubr.f32.mxu0 0.0
    %972 = vmatmul.mubr.f32.gmra.mxu0 %v807
    %v973 = vpop.f32.mrf.mxu0
    %v974 = vadd.f32 %v730, %v973
    %v975 = vpop.f32.mrf.mxu0
    %976 = vmatprep.mubr.f32.mxu0 0.0
    %977 = vmatmul.mubr.f32.gmra.mxu0 %v809
    %v978 = vpop.f32.mrf.mxu0
    %v979 = vadd.f32 %v731, %v978
    %v980 = vpop.f32.mrf.mxu0
    %981 = vmatprep.mubr.f32.mxu0 0.0
    %982 = vmatmul.mubr.f32.gmra.mxu0 %v811
    %v983 = vpop.f32.mrf.mxu0
    %v984 = vadd.f32 %v732, %v983
    %v985 = vpop.f32.mrf.mxu0
    %986 = vmatprep.mubr.f32.mxu0 0.0
    %987 = vmatmul.mubr.f32.gmra.mxu0 %v813
    %v988 = vpop.f32.mrf.mxu0
    %v989 = vadd.f32 %v733, %v988
    %v990 = vpop.f32.mrf.mxu0
    %991 = vdwg.mxu0
    %992 = vmax.xlane.f32.xlu0 %v914
    %v993 = vpop.xlane.xlu0 %992
    %994 = vmax.xlane.f32.xlu0 %v919
    %v995 = vpop.xlane.xlu0 %994
    %996 = vmax.xlane.f32.xlu0 %v924
    %v997 = vpop.xlane.xlu0 %996
    %998 = vmax.xlane.f32.xlu0 %v929
    %v999 = vpop.xlane.xlu0 %998
    %1000 = vmax.xlane.f32.xlu0 %v934
    %v1001 = vpop.xlane.xlu0 %1000
    %1002 = vmax.xlane.f32.xlu0 %v939
    %v1003 = vpop.xlane.xlu0 %1002
    %1004 = vmax.xlane.f32.xlu0 %v944
    %v1005 = vpop.xlane.xlu0 %1004
    %1006 = vmax.xlane.f32.xlu0 %v949
    %v1007 = vpop.xlane.xlu0 %1006
    %1008 = vmax.xlane.f32.xlu0 %v954
    %v1009 = vpop.xlane.xlu0 %1008
    %1010 = vmax.xlane.f32.xlu0 %v959
    %v1011 = vpop.xlane.xlu0 %1010
    %1012 = vmax.xlane.f32.xlu0 %v964
    %v1013 = vpop.xlane.xlu0 %1012
    %1014 = vmax.xlane.f32.xlu0 %v969
    %v1015 = vpop.xlane.xlu0 %1014
    %1016 = vmax.xlane.f32.xlu0 %v974
    %v1017 = vpop.xlane.xlu0 %1016
    %1018 = vmax.xlane.f32.xlu0 %v979
    %v1019 = vpop.xlane.xlu0 %1018
    %1020 = vmax.xlane.f32.xlu0 %v984
    %v1021 = vpop.xlane.xlu0 %1020
    %1022 = vmax.xlane.f32.xlu0 %v989
    %v1023 = vpop.xlane.xlu0 %1022
    %v1024 = vsub.f32 %v914, %v993
    %v1025 = vsub.f32 %v919, %v995
    %v1026 = vsub.f32 %v924, %v997
    %v1027 = vsub.f32 %v929, %v999
    %v1028 = vsub.f32 %v934, %v1001
    %v1029 = vsub.f32 %v939, %v1003
    %v1030 = vsub.f32 %v944, %v1005
    %v1031 = vsub.f32 %v949, %v1007
    %v1032 = vsub.f32 %v954, %v1009
    %v1033 = vsub.f32 %v959, %v1011
    %v1034 = vsub.f32 %v964, %v1013
    %v1035 = vsub.f32 %v969, %v1015
    %v1036 = vsub.f32 %v974, %v1017
    %v1037 = vsub.f32 %v979, %v1019
    %v1038 = vsub.f32 %v984, %v1021
    %v1039 = vsub.f32 %v989, %v1023
    %v1040 = vmul.f32 %v1024, 1.442695
    %v1041 = vpow.pop %v1040
    %v1042 = vmul.f32 %v1025, 1.442695
    %v1043 = vpow.pop %v1042
    %v1044 = vmul.f32 %v1026, 1.442695
    %v1045 = vpow.pop %v1044
    %v1046 = vmul.f32 %v1027, 1.442695
    %v1047 = vpow.pop %v1046
    %v1048 = vmul.f32 %v1028, 1.442695
    %v1049 = vpow.pop %v1048
    %v1050 = vmul.f32 %v1029, 1.442695
    %v1051 = vpow.pop %v1050
    %v1052 = vmul.f32 %v1030, 1.442695
    %v1053 = vpow.pop %v1052
    %v1054 = vmul.f32 %v1031, 1.442695
    %v1055 = vpow.pop %v1054
    %v1056 = vmul.f32 %v1032, 1.442695
    %v1057 = vpow.pop %v1056
    %v1058 = vmul.f32 %v1033, 1.442695
    %v1059 = vpow.pop %v1058
    %v1060 = vmul.f32 %v1034, 1.442695
    %v1061 = vpow.pop %v1060
    %v1062 = vmul.f32 %v1035, 1.442695
    %v1063 = vpow.pop %v1062
    %v1064 = vmul.f32 %v1036, 1.442695
    %v1065 = vpow.pop %v1064
    %v1066 = vmul.f32 %v1037, 1.442695
    %v1067 = vpow.pop %v1066
    %v1068 = vmul.f32 %v1038, 1.442695
    %v1069 = vpow.pop %v1068
    %v1070 = vmul.f32 %v1039, 1.442695
    %v1071 = vpow.pop %v1070
    %1072 = vadd.xlane.f32.xlu0 %v1041
    %v1073 = vpop.xlane.xlu0 %1072
    %1074 = vadd.xlane.f32.xlu0 %v1043
    %v1075 = vpop.xlane.xlu0 %1074
    %1076 = vadd.xlane.f32.xlu0 %v1045
    %v1077 = vpop.xlane.xlu0 %1076
    %1078 = vadd.xlane.f32.xlu0 %v1047
    %v1079 = vpop.xlane.xlu0 %1078
    %1080 = vadd.xlane.f32.xlu0 %v1049
    %v1081 = vpop.xlane.xlu0 %1080
    %1082 = vadd.xlane.f32.xlu0 %v1051
    %v1083 = vpop.xlane.xlu0 %1082
    %1084 = vadd.xlane.f32.xlu0 %v1053
    %v1085 = vpop.xlane.xlu0 %1084
    %1086 = vadd.xlane.f32.xlu0 %v1055
    %v1087 = vpop.xlane.xlu0 %1086
    %1088 = vadd.xlane.f32.xlu0 %v1057
    %v1089 = vpop.xlane.xlu0 %1088
    %1090 = vadd.xlane.f32.xlu0 %v1059
    %v1091 = vpop.xlane.xlu0 %1090
    %1092 = vadd.xlane.f32.xlu0 %v1061
    %v1093 = vpop.xlane.xlu0 %1092
    %1094 = vadd.xlane.f32.xlu0 %v1063
    %v1095 = vpop.xlane.xlu0 %1094
    %1096 = vadd.xlane.f32.xlu0 %v1065
    %v1097 = vpop.xlane.xlu0 %1096
    %1098 = vadd.xlane.f32.xlu0 %v1067
    %v1099 = vpop.xlane.xlu0 %1098
    %1100 = vadd.xlane.f32.xlu0 %v1069
    %v1101 = vpop.xlane.xlu0 %1100
    %1102 = vadd.xlane.f32.xlu0 %v1071
    %v1103 = vpop.xlane.xlu0 %1102
    %v1104 = vrcp.pop %v1073
    %v1105 = vrcp.pop %v1075
    %v1106 = vrcp.pop %v1077
    %v1107 = vrcp.pop %v1079
    %v1108 = vrcp.pop %v1081
    %v1109 = vrcp.pop %v1083
    %v1110 = vrcp.pop %v1085
    %v1111 = vrcp.pop %v1087
    %v1112 = vrcp.pop %v1089
    %v1113 = vrcp.pop %v1091
    %v1114 = vrcp.pop %v1093
    %v1115 = vrcp.pop %v1095
    %v1116 = vrcp.pop %v1097
    %v1117 = vrcp.pop %v1099
    %v1118 = vrcp.pop %v1101
    %v1119 = vrcp.pop %v1103
    %v1120 = vmul.f32 %v1041, %v1104
    %v1121 = vmul.f32 %v1043, %v1105
    %v1122 = vmul.f32 %v1045, %v1106
    %v1123 = vmul.f32 %v1047, %v1107
    %v1124 = vmul.f32 %v1049, %v1108
    %v1125 = vmul.f32 %v1051, %v1109
    %v1126 = vmul.f32 %v1053, %v1110
    %v1127 = vmul.f32 %v1055, %v1111
    %v1128 = vmul.f32 %v1057, %v1112
    %v1129 = vmul.f32 %v1059, %v1113
    %v1130 = vmul.f32 %v1061, %v1114
    %v1131 = vmul.f32 %v1063, %v1115
    %v1132 = vmul.f32 %v1065, %v1116
    %v1133 = vmul.f32 %v1067, %v1117
    %v1134 = vmul.f32 %v1069, %v1118
    %v1135 = vmul.f32 %v1071, %v1119
    %s1136 = scalar_lea.vmem [#allocation2], 128
    %v1137 = vld [vmem:[%s1136] sm:$0xff]
    %v1138 = vld [vmem:[%s1136 + $0x8] sm:$0xff]
    %v1139 = vld [vmem:[%s1136 + $0x10] sm:$0xff]
    %v1140 = vld [vmem:[%s1136 + $0x18] sm:$0xff]
    %v1141 = vld [vmem:[%s1136 + $0x20] sm:$0xff]
    %v1142 = vld [vmem:[%s1136 + $0x28] sm:$0xff]
    %v1143 = vld [vmem:[%s1136 + $0x30] sm:$0xff]
    %v1144 = vld [vmem:[%s1136 + $0x38] sm:$0xff]
    %v1145 = vld [vmem:[%s1136 + $0x40] sm:$0xff]
    %v1146 = vld [vmem:[%s1136 + $0x48] sm:$0xff]
    %v1147 = vld [vmem:[%s1136 + $0x50] sm:$0xff]
    %v1148 = vld [vmem:[%s1136 + $0x58] sm:$0xff]
    %v1149 = vld [vmem:[%s1136 + $0x60] sm:$0xff]
    %v1150 = vld [vmem:[%s1136 + $0x68] sm:$0xff]
    %v1151 = vld [vmem:[%s1136 + $0x70] sm:$0xff]
    %v1152 = vld [vmem:[%s1136 + $0x78] sm:$0xff]
    %1153 = vrot.lane.b32.xlu0 %v491, 120
    %v1154 = vpop.permute.xlu0 %1153
    %1155 = vrot.lane.b32.xlu0 %v496, 120
    %v1156 = vpop.permute.xlu0 %1155
    %1157 = vrot.lane.b32.xlu0 %v501, 120
    %v1158 = vpop.permute.xlu0 %1157
    %1159 = vrot.lane.b32.xlu0 %v506, 120
    %v1160 = vpop.permute.xlu0 %1159
    %1161 = vrot.lane.b32.xlu0 %v511, 120
    %v1162 = vpop.permute.xlu0 %1161
    %1163 = vrot.lane.b32.xlu0 %v516, 120
    %v1164 = vpop.permute.xlu0 %1163
    %1165 = vrot.lane.b32.xlu0 %v521, 120
    %v1166 = vpop.permute.xlu0 %1165
    %1167 = vrot.lane.b32.xlu0 %v526, 120
    %v1168 = vpop.permute.xlu0 %1167
    %1169 = vrot.lane.b32.xlu0 %v531, 120
    %v1170 = vpop.permute.xlu0 %1169
    %1171 = vrot.lane.b32.xlu0 %v536, 120
    %v1172 = vpop.permute.xlu0 %1171
    %1173 = vrot.lane.b32.xlu0 %v541, 120
    %v1174 = vpop.permute.xlu0 %1173
    %1175 = vrot.lane.b32.xlu0 %v546, 120
    %v1176 = vpop.permute.xlu0 %1175
    %1177 = vrot.lane.b32.xlu0 %v551, 120
    %v1178 = vpop.permute.xlu0 %1177
    %1179 = vrot.lane.b32.xlu0 %v556, 120
    %v1180 = vpop.permute.xlu0 %1179
    %1181 = vrot.lane.b32.xlu0 %v561, 120
    %v1182 = vpop.permute.xlu0 %1181
    %1183 = vrot.lane.b32.xlu0 %v566, 120
    %v1184 = vpop.permute.xlu0 %1183
    %1185 = vrot.lane.b32.xlu0 %v491, 88
    %v1186 = vpop.permute.xlu0 %1185
    %1187 = vrot.lane.b32.xlu0 %v496, 88
    %v1188 = vpop.permute.xlu0 %1187
    %1189 = vrot.lane.b32.xlu0 %v501, 88
    %v1190 = vpop.permute.xlu0 %1189
    %1191 = vrot.lane.b32.xlu0 %v506, 88
    %v1192 = vpop.permute.xlu0 %1191
    %1193 = vrot.lane.b32.xlu0 %v511, 88
    %v1194 = vpop.permute.xlu0 %1193
    %1195 = vrot.lane.b32.xlu0 %v516, 88
    %v1196 = vpop.permute.xlu0 %1195
    %1197 = vrot.lane.b32.xlu0 %v521, 88
    %v1198 = vpop.permute.xlu0 %1197
    %1199 = vrot.lane.b32.xlu0 %v526, 88
    %v1200 = vpop.permute.xlu0 %1199
    %1201 = vrot.lane.b32.xlu0 %v531, 88
    %v1202 = vpop.permute.xlu0 %1201
    %1203 = vrot.lane.b32.xlu0 %v536, 88
    %v1204 = vpop.permute.xlu0 %1203
    %1205 = vrot.lane.b32.xlu0 %v541, 88
    %v1206 = vpop.permute.xlu0 %1205
    %1207 = vrot.lane.b32.xlu0 %v546, 88
    %v1208 = vpop.permute.xlu0 %1207
    %1209 = vrot.lane.b32.xlu0 %v551, 88
    %v1210 = vpop.permute.xlu0 %1209
    %1211 = vrot.lane.b32.xlu0 %v556, 88
    %v1212 = vpop.permute.xlu0 %1211
    %1213 = vrot.lane.b32.xlu0 %v561, 88
    %v1214 = vpop.permute.xlu0 %1213
    %1215 = vrot.lane.b32.xlu0 %v566, 88
    %v1216 = vpop.permute.xlu0 %1215
    %v1217 = vsel %vm782, %v1154, 0
    %v1219 = vsel %vm782, %v1156, 0
    %v1221 = vsel %vm782, %v1158, 0
    %v1223 = vsel %vm782, %v1160, 0
    %v1225 = vsel %vm782, %v1162, 0
    %v1227 = vsel %vm782, %v1164, 0
    %v1229 = vsel %vm782, %v1166, 0
    %v1231 = vsel %vm782, %v1168, 0
    %v1233 = vsel %vm782, %v1170, 0
    %v1235 = vsel %vm782, %v1172, 0
    %v1237 = vsel %vm782, %v1174, 0
    %v1239 = vsel %vm782, %v1176, 0
    %v1241 = vsel %vm782, %v1178, 0
    %v1243 = vsel %vm782, %v1180, 0
    %v1245 = vsel %vm782, %v1182, 0
    %v1247 = vsel %vm782, %v1184, 0
    %v1249 = vsel %vm782, %v1186, 0
    %v1251 = vsel %vm782, %v1188, 0
    %v1253 = vsel %vm782, %v1190, 0
    %v1255 = vsel %vm782, %v1192, 0
    %v1257 = vsel %vm782, %v1194, 0
    %v1259 = vsel %vm782, %v1196, 0
    %v1261 = vsel %vm782, %v1198, 0
    %v1263 = vsel %vm782, %v1200, 0
    %v1265 = vsel %vm782, %v1202, 0
    %v1267 = vsel %vm782, %v1204, 0
    %v1269 = vsel %vm782, %v1206, 0
    %v1271 = vsel %vm782, %v1208, 0
    %v1273 = vsel %vm782, %v1210, 0
    %v1275 = vsel %vm782, %v1212, 0
    %v1277 = vsel %vm782, %v1214, 0
    %v1279 = vsel %vm782, %v1216, 0
    %1281 = vmatprep.subr.mxu0 0.0
    %1282 = vmatpush1.xpose.msra.mxu0 %v1279
    %1283 = vmatprep.subr.mxu0 0.0
    %1284 = vmatpush1.xpose.msra.mxu0 %v1277
    %1285 = vmatprep.subr.mxu0 0.0
    %1286 = vmatpush1.xpose.msra.mxu0 %v1275
    %1287 = vmatprep.subr.mxu0 0.0
    %1288 = vmatpush1.xpose.msra.mxu0 %v1273
    %1289 = vmatprep.subr.mxu0 0.0
    %1290 = vmatpush1.xpose.msra.mxu0 %v1271
    %1291 = vmatprep.subr.mxu0 0.0
    %1292 = vmatpush1.xpose.msra.mxu0 %v1269
    %1293 = vmatprep.subr.mxu0 0.0
    %1294 = vmatpush1.xpose.msra.mxu0 %v1267
    %1295 = vmatprep.subr.mxu0 0.0
    %1296 = vmatpush1.xpose.msra.mxu0 %v1265
    %1297 = vmatprep.subr.mxu0 0.0
    %1298 = vmatpush1.xpose.msra.mxu0 %v1263
    %1299 = vmatprep.subr.mxu0 0.0
    %1300 = vmatpush1.xpose.msra.mxu0 %v1261
    %1301 = vmatprep.subr.mxu0 0.0
    %1302 = vmatpush1.xpose.msra.mxu0 %v1259
    %1303 = vmatprep.subr.mxu0 0.0
    %1304 = vmatpush1.xpose.msra.mxu0 %v1257
    %1305 = vmatprep.subr.mxu0 0.0
    %1306 = vmatpush1.xpose.msra.mxu0 %v1255
    %1307 = vmatprep.subr.mxu0 0.0
    %1308 = vmatpush1.xpose.msra.mxu0 %v1253
    %1309 = vmatprep.subr.mxu0 0.0
    %1310 = vmatpush1.xpose.msra.mxu0 %v1251
    %1311 = vmatprep.subr.mxu0 0.0
    %1312 = vmatpush1.xpose.msra.mxu0 %v1249
    %1313 = vmatprep.subr.mxu0 0.0
    %1314 = vmatpush2.xpose.msra.mxu0 0.0
    %1315 = vmatprep.subr.mxu0 0.0
    %1316 = vmatpush2.xpose.msra.mxu0 0.0
    %1317 = vmatprep.subr.mxu0 0.0
    %1318 = vmatpush2.xpose.msra.mxu0 0.0
    %1319 = vmatprep.subr.mxu0 0.0
    %1320 = vmatpush2.xpose.msra.mxu0 0.0
    %1321 = vmatprep.subr.mxu0 0.0
    %1322 = vmatpush2.xpose.msra.mxu0 0.0
    %1323 = vmatprep.subr.mxu0 0.0
    %1324 = vmatpush2.xpose.msra.mxu0 0.0
    %1325 = vmatprep.subr.mxu0 0.0
    %1326 = vmatpush2.xpose.msra.mxu0 0.0
    %1327 = vmatprep.subr.mxu0 0.0
    %1328 = vmatpush2.xpose.msra.mxu0 0.0
    %1329 = vmatprep.subr.mxu0 0.0
    %1330 = vmatpush2.xpose.msra.mxu0 0.0
    %1331 = vmatprep.subr.mxu0 0.0
    %1332 = vmatpush2.xpose.msra.mxu0 0.0
    %1333 = vmatprep.subr.mxu0 0.0
    %1334 = vmatpush2.xpose.msra.mxu0 0.0
    %1335 = vmatprep.subr.mxu0 0.0
    %1336 = vmatpush2.xpose.msra.mxu0 0.0
    %1337 = vmatprep.subr.mxu0 0.0
    %1338 = vmatpush2.xpose.msra.mxu0 0.0
    %1339 = vmatprep.subr.mxu0 0.0
    %1340 = vmatpush2.xpose.msra.mxu0 0.0
    %1341 = vmatprep.subr.mxu0 0.0
    %1342 = vmatpush2.xpose.msra.mxu0 0.0
    %1343 = vmatprep.subr.mxu0 0.0
    %1344 = vmatpush2.xpose.msra.mxu0 0.0
    %1345 = vmatprep.mubr.f32.mxu0 0.0
    %1346 = vmatmul.mubr.f32.gmra.mxu0 %v1217
    %v1347 = vpop.f32.mrf.mxu0
    %v1348 = vadd.f32 %v1137, %v1347
    %v1349 = vpop.f32.mrf.mxu0
    %1350 = vmatprep.mubr.f32.mxu0 0.0
    %1351 = vmatmul.mubr.f32.gmra.mxu0 %v1219
    %v1352 = vpop.f32.mrf.mxu0
    %v1353 = vadd.f32 %v1138, %v1352
    %v1354 = vpop.f32.mrf.mxu0
    %1355 = vmatprep.mubr.f32.mxu0 0.0
    %1356 = vmatmul.mubr.f32.gmra.mxu0 %v1221
    %v1357 = vpop.f32.mrf.mxu0
    %v1358 = vadd.f32 %v1139, %v1357
    %v1359 = vpop.f32.mrf.mxu0
    %1360 = vmatprep.mubr.f32.mxu0 0.0
    %1361 = vmatmul.mubr.f32.gmra.mxu0 %v1223
    %v1362 = vpop.f32.mrf.mxu0
    %v1363 = vadd.f32 %v1140, %v1362
    %v1364 = vpop.f32.mrf.mxu0
    %1365 = vmatprep.mubr.f32.mxu0 0.0
    %1366 = vmatmul.mubr.f32.gmra.mxu0 %v1225
    %v1367 = vpop.f32.mrf.mxu0
    %v1368 = vadd.f32 %v1141, %v1367
    %v1369 = vpop.f32.mrf.mxu0
    %1370 = vmatprep.mubr.f32.mxu0 0.0
    %1371 = vmatmul.mubr.f32.gmra.mxu0 %v1227
    %v1372 = vpop.f32.mrf.mxu0
    %v1373 = vadd.f32 %v1142, %v1372
    %v1374 = vpop.f32.mrf.mxu0
    %1375 = vmatprep.mubr.f32.mxu0 0.0
    %1376 = vmatmul.mubr.f32.gmra.mxu0 %v1229
    %v1377 = vpop.f32.mrf.mxu0
    %v1378 = vadd.f32 %v1143, %v1377
    %v1379 = vpop.f32.mrf.mxu0
    %1380 = vmatprep.mubr.f32.mxu0 0.0
    %1381 = vmatmul.mubr.f32.gmra.mxu0 %v1231
    %v1382 = vpop.f32.mrf.mxu0
    %v1383 = vadd.f32 %v1144, %v1382
    %v1384 = vpop.f32.mrf.mxu0
    %1385 = vmatprep.mubr.f32.mxu0 0.0
    %1386 = vmatmul.mubr.f32.gmra.mxu0 %v1233
    %v1387 = vpop.f32.mrf.mxu0
    %v1388 = vadd.f32 %v1145, %v1387
    %v1389 = vpop.f32.mrf.mxu0
    %1390 = vmatprep.mubr.f32.mxu0 0.0
    %1391 = vmatmul.mubr.f32.gmra.mxu0 %v1235
    %v1392 = vpop.f32.mrf.mxu0
    %v1393 = vadd.f32 %v1146, %v1392
    %v1394 = vpop.f32.mrf.mxu0
    %1395 = vmatprep.mubr.f32.mxu0 0.0
    %1396 = vmatmul.mubr.f32.gmra.mxu0 %v1237
    %v1397 = vpop.f32.mrf.mxu0
    %v1398 = vadd.f32 %v1147, %v1397
    %v1399 = vpop.f32.mrf.mxu0
    %1400 = vmatprep.mubr.f32.mxu0 0.0
    %1401 = vmatmul.mubr.f32.gmra.mxu0 %v1239
    %v1402 = vpop.f32.mrf.mxu0
    %v1403 = vadd.f32 %v1148, %v1402
    %v1404 = vpop.f32.mrf.mxu0
    %1405 = vmatprep.mubr.f32.mxu0 0.0
    %1406 = vmatmul.mubr.f32.gmra.mxu0 %v1241
    %v1407 = vpop.f32.mrf.mxu0
    %v1408 = vadd.f32 %v1149, %v1407
    %v1409 = vpop.f32.mrf.mxu0
    %1410 = vmatprep.mubr.f32.mxu0 0.0
    %1411 = vmatmul.mubr.f32.gmra.mxu0 %v1243
    %v1412 = vpop.f32.mrf.mxu0
    %v1413 = vadd.f32 %v1150, %v1412
    %v1414 = vpop.f32.mrf.mxu0
    %1415 = vmatprep.mubr.f32.mxu0 0.0
    %1416 = vmatmul.mubr.f32.gmra.mxu0 %v1245
    %v1417 = vpop.f32.mrf.mxu0
    %v1418 = vadd.f32 %v1151, %v1417
    %v1419 = vpop.f32.mrf.mxu0
    %1420 = vmatprep.mubr.f32.mxu0 0.0
    %1421 = vmatmul.mubr.f32.gmra.mxu0 %v1247
    %v1422 = vpop.f32.mrf.mxu0
    %v1423 = vadd.f32 %v1152, %v1422
    %v1424 = vpop.f32.mrf.mxu0
    %1425 = vdwg.mxu0
    %1426 = vmax.xlane.f32.xlu0 %v1348
    %v1427 = vpop.xlane.xlu0 %1426
    %1428 = vmax.xlane.f32.xlu0 %v1353
    %v1429 = vpop.xlane.xlu0 %1428
    %1430 = vmax.xlane.f32.xlu0 %v1358
    %v1431 = vpop.xlane.xlu0 %1430
    %1432 = vmax.xlane.f32.xlu0 %v1363
    %v1433 = vpop.xlane.xlu0 %1432
    %1434 = vmax.xlane.f32.xlu0 %v1368
    %v1435 = vpop.xlane.xlu0 %1434
    %1436 = vmax.xlane.f32.xlu0 %v1373
    %v1437 = vpop.xlane.xlu0 %1436
    %1438 = vmax.xlane.f32.xlu0 %v1378
    %v1439 = vpop.xlane.xlu0 %1438
    %1440 = vmax.xlane.f32.xlu0 %v1383
    %v1441 = vpop.xlane.xlu0 %1440
    %1442 = vmax.xlane.f32.xlu0 %v1388
    %v1443 = vpop.xlane.xlu0 %1442
    %1444 = vmax.xlane.f32.xlu0 %v1393
    %v1445 = vpop.xlane.xlu0 %1444
    %1446 = vmax.xlane.f32.xlu0 %v1398
    %v1447 = vpop.xlane.xlu0 %1446
    %1448 = vmax.xlane.f32.xlu0 %v1403
    %v1449 = vpop.xlane.xlu0 %1448
    %1450 = vmax.xlane.f32.xlu0 %v1408
    %v1451 = vpop.xlane.xlu0 %1450
    %1452 = vmax.xlane.f32.xlu0 %v1413
    %v1453 = vpop.xlane.xlu0 %1452
    %1454 = vmax.xlane.f32.xlu0 %v1418
    %v1455 = vpop.xlane.xlu0 %1454
    %1456 = vmax.xlane.f32.xlu0 %v1423
    %v1457 = vpop.xlane.xlu0 %1456
    %v1458 = vsub.f32 %v1348, %v1427
    %v1459 = vsub.f32 %v1353, %v1429
    %v1460 = vsub.f32 %v1358, %v1431
    %v1461 = vsub.f32 %v1363, %v1433
    %v1462 = vsub.f32 %v1368, %v1435
    %v1463 = vsub.f32 %v1373, %v1437
    %v1464 = vsub.f32 %v1378, %v1439
    %v1465 = vsub.f32 %v1383, %v1441
    %v1466 = vsub.f32 %v1388, %v1443
    %v1467 = vsub.f32 %v1393, %v1445
    %v1468 = vsub.f32 %v1398, %v1447
    %v1469 = vsub.f32 %v1403, %v1449
    %v1470 = vsub.f32 %v1408, %v1451
    %v1471 = vsub.f32 %v1413, %v1453
    %v1472 = vsub.f32 %v1418, %v1455
    %v1473 = vsub.f32 %v1423, %v1457
    %v1474 = vmul.f32 %v1458, 1.442695
    %v1475 = vpow.pop %v1474
    %v1476 = vmul.f32 %v1459, 1.442695
    %v1477 = vpow.pop %v1476
    %v1478 = vmul.f32 %v1460, 1.442695
    %v1479 = vpow.pop %v1478
    %v1480 = vmul.f32 %v1461, 1.442695
    %v1481 = vpow.pop %v1480
    %v1482 = vmul.f32 %v1462, 1.442695
    %v1483 = vpow.pop %v1482
    %v1484 = vmul.f32 %v1463, 1.442695
    %v1485 = vpow.pop %v1484
    %v1486 = vmul.f32 %v1464, 1.442695
    %v1487 = vpow.pop %v1486
    %v1488 = vmul.f32 %v1465, 1.442695
    %v1489 = vpow.pop %v1488
    %v1490 = vmul.f32 %v1466, 1.442695
    %v1491 = vpow.pop %v1490
    %v1492 = vmul.f32 %v1467, 1.442695
    %v1493 = vpow.pop %v1492
    %v1494 = vmul.f32 %v1468, 1.442695
    %v1495 = vpow.pop %v1494
    %v1496 = vmul.f32 %v1469, 1.442695
    %v1497 = vpow.pop %v1496
    %v1498 = vmul.f32 %v1470, 1.442695
    %v1499 = vpow.pop %v1498
    %v1500 = vmul.f32 %v1471, 1.442695
    %v1501 = vpow.pop %v1500
    %v1502 = vmul.f32 %v1472, 1.442695
    %v1503 = vpow.pop %v1502
    %v1504 = vmul.f32 %v1473, 1.442695
    %v1505 = vpow.pop %v1504
    %1506 = vadd.xlane.f32.xlu0 %v1475
    %v1507 = vpop.xlane.xlu0 %1506
    %1508 = vadd.xlane.f32.xlu0 %v1477
    %v1509 = vpop.xlane.xlu0 %1508
    %1510 = vadd.xlane.f32.xlu0 %v1479
    %v1511 = vpop.xlane.xlu0 %1510
    %1512 = vadd.xlane.f32.xlu0 %v1481
    %v1513 = vpop.xlane.xlu0 %1512
    %1514 = vadd.xlane.f32.xlu0 %v1483
    %v1515 = vpop.xlane.xlu0 %1514
    %1516 = vadd.xlane.f32.xlu0 %v1485
    %v1517 = vpop.xlane.xlu0 %1516
    %1518 = vadd.xlane.f32.xlu0 %v1487
    %v1519 = vpop.xlane.xlu0 %1518
    %1520 = vadd.xlane.f32.xlu0 %v1489
    %v1521 = vpop.xlane.xlu0 %1520
    %1522 = vadd.xlane.f32.xlu0 %v1491
    %v1523 = vpop.xlane.xlu0 %1522
    %1524 = vadd.xlane.f32.xlu0 %v1493
    %v1525 = vpop.xlane.xlu0 %1524
    %1526 = vadd.xlane.f32.xlu0 %v1495
    %v1527 = vpop.xlane.xlu0 %1526
    %1528 = vadd.xlane.f32.xlu0 %v1497
    %v1529 = vpop.xlane.xlu0 %1528
    %1530 = vadd.xlane.f32.xlu0 %v1499
    %v1531 = vpop.xlane.xlu0 %1530
    %1532 = vadd.xlane.f32.xlu0 %v1501
    %v1533 = vpop.xlane.xlu0 %1532
    %1534 = vadd.xlane.f32.xlu0 %v1503
    %v1535 = vpop.xlane.xlu0 %1534
    %1536 = vadd.xlane.f32.xlu0 %v1505
    %v1537 = vpop.xlane.xlu0 %1536
    %v1538 = vrcp.pop %v1507
    %v1539 = vrcp.pop %v1509
    %v1540 = vrcp.pop %v1511
    %v1541 = vrcp.pop %v1513
    %v1542 = vrcp.pop %v1515
    %v1543 = vrcp.pop %v1517
    %v1544 = vrcp.pop %v1519
    %v1545 = vrcp.pop %v1521
    %v1546 = vrcp.pop %v1523
    %v1547 = vrcp.pop %v1525
    %v1548 = vrcp.pop %v1527
    %v1549 = vrcp.pop %v1529
    %v1550 = vrcp.pop %v1531
    %v1551 = vrcp.pop %v1533
    %v1552 = vrcp.pop %v1535
    %v1553 = vrcp.pop %v1537
    %v1554 = vmul.f32 %v1475, %v1538
    %v1555 = vmul.f32 %v1477, %v1539
    %v1556 = vmul.f32 %v1479, %v1540
    %v1557 = vmul.f32 %v1481, %v1541
    %v1558 = vmul.f32 %v1483, %v1542
    %v1559 = vmul.f32 %v1485, %v1543
    %v1560 = vmul.f32 %v1487, %v1544
    %v1561 = vmul.f32 %v1489, %v1545
    %v1562 = vmul.f32 %v1491, %v1546
    %v1563 = vmul.f32 %v1493, %v1547
    %v1564 = vmul.f32 %v1495, %v1548
    %v1565 = vmul.f32 %v1497, %v1549
    %v1566 = vmul.f32 %v1499, %v1550
    %v1567 = vmul.f32 %v1501, %v1551
    %v1568 = vmul.f32 %v1503, %v1552
    %v1569 = vmul.f32 %v1505, %v1553
    %1586 = vrot.lane.b32.xlu0 %v640, 96
    %v1587 = vpop.permute.xlu0 %1586
    %1588 = vrot.lane.b32.xlu0 %v645, 96
    %v1589 = vpop.permute.xlu0 %1588
    %1590 = vrot.lane.b32.xlu0 %v650, 96
    %v1591 = vpop.permute.xlu0 %1590
    %1592 = vrot.lane.b32.xlu0 %v655, 96
    %v1593 = vpop.permute.xlu0 %1592
    %1594 = vrot.lane.b32.xlu0 %v660, 96
    %v1595 = vpop.permute.xlu0 %1594
    %1596 = vrot.lane.b32.xlu0 %v665, 96
    %v1597 = vpop.permute.xlu0 %1596
    %1598 = vrot.lane.b32.xlu0 %v670, 96
    %v1599 = vpop.permute.xlu0 %1598
    %1600 = vrot.lane.b32.xlu0 %v675, 96
    %v1601 = vpop.permute.xlu0 %1600
    %1602 = vrot.lane.b32.xlu0 %v680, 96
    %v1603 = vpop.permute.xlu0 %1602
    %1604 = vrot.lane.b32.xlu0 %v685, 96
    %v1605 = vpop.permute.xlu0 %1604
    %1606 = vrot.lane.b32.xlu0 %v690, 96
    %v1607 = vpop.permute.xlu0 %1606
    %1608 = vrot.lane.b32.xlu0 %v695, 96
    %v1609 = vpop.permute.xlu0 %1608
    %1610 = vrot.lane.b32.xlu0 %v700, 96
    %v1611 = vpop.permute.xlu0 %1610
    %1612 = vrot.lane.b32.xlu0 %v705, 96
    %v1613 = vpop.permute.xlu0 %1612
    %1614 = vrot.lane.b32.xlu0 %v710, 96
    %v1615 = vpop.permute.xlu0 %1614
    %1616 = vrot.lane.b32.xlu0 %v715, 96
    %v1617 = vpop.permute.xlu0 %1616
    %1634 = vmatprep.subr.mxu0 0.0
    %1635 = vmatpush1.msra.mxu0 %v1617
    %1636 = vmatprep.subr.mxu0 0.0
    %1637 = vmatpush1.msra.mxu0 %v1615
    %1638 = vmatprep.subr.mxu0 0.0
    %1639 = vmatpush1.msra.mxu0 %v1613
    %1640 = vmatprep.subr.mxu0 0.0
    %1641 = vmatpush1.msra.mxu0 %v1611
    %1642 = vmatprep.subr.mxu0 0.0
    %1643 = vmatpush1.msra.mxu0 %v1609
    %1644 = vmatprep.subr.mxu0 0.0
    %1645 = vmatpush1.msra.mxu0 %v1607
    %1646 = vmatprep.subr.mxu0 0.0
    %1647 = vmatpush1.msra.mxu0 %v1605
    %1648 = vmatprep.subr.mxu0 0.0
    %1649 = vmatpush1.msra.mxu0 %v1603
    %1650 = vmatprep.subr.mxu0 0.0
    %1651 = vmatpush1.msra.mxu0 %v1601
    %1652 = vmatprep.subr.mxu0 0.0
    %1653 = vmatpush1.msra.mxu0 %v1599
    %1654 = vmatprep.subr.mxu0 0.0
    %1655 = vmatpush1.msra.mxu0 %v1597
    %1656 = vmatprep.subr.mxu0 0.0
    %1657 = vmatpush1.msra.mxu0 %v1595
    %1658 = vmatprep.subr.mxu0 0.0
    %1659 = vmatpush1.msra.mxu0 %v1593
    %1660 = vmatprep.subr.mxu0 0.0
    %1661 = vmatpush1.msra.mxu0 %v1591
    %1662 = vmatprep.subr.mxu0 0.0
    %1663 = vmatpush1.msra.mxu0 %v1589
    %1664 = vmatprep.subr.mxu0 0.0
    %1665 = vmatpush1.msra.mxu0 %v1587
    %1666 = vmatprep.subr.mxu0 0.0
    %1667 = vmatpush2.msra.mxu0 0.0
    %1668 = vmatprep.subr.mxu0 0.0
    %1669 = vmatpush2.msra.mxu0 0.0
    %1670 = vmatprep.subr.mxu0 0.0
    %1671 = vmatpush2.msra.mxu0 0.0
    %1672 = vmatprep.subr.mxu0 0.0
    %1673 = vmatpush2.msra.mxu0 0.0
    %1674 = vmatprep.subr.mxu0 0.0
    %1675 = vmatpush2.msra.mxu0 0.0
    %1676 = vmatprep.subr.mxu0 0.0
    %1677 = vmatpush2.msra.mxu0 0.0
    %1678 = vmatprep.subr.mxu0 0.0
    %1679 = vmatpush2.msra.mxu0 0.0
    %1680 = vmatprep.subr.mxu0 0.0
    %1681 = vmatpush2.msra.mxu0 0.0
    %1682 = vmatprep.subr.mxu0 0.0
    %1683 = vmatpush2.msra.mxu0 0.0
    %1684 = vmatprep.subr.mxu0 0.0
    %1685 = vmatpush2.msra.mxu0 0.0
    %1686 = vmatprep.subr.mxu0 0.0
    %1687 = vmatpush2.msra.mxu0 0.0
    %1688 = vmatprep.subr.mxu0 0.0
    %1689 = vmatpush2.msra.mxu0 0.0
    %1690 = vmatprep.subr.mxu0 0.0
    %1691 = vmatpush2.msra.mxu0 0.0
    %1692 = vmatprep.subr.mxu0 0.0
    %1693 = vmatpush2.msra.mxu0 0.0
    %1694 = vmatprep.subr.mxu0 0.0
    %1695 = vmatpush2.msra.mxu0 0.0
    %1696 = vmatprep.subr.mxu0 0.0
    %1697 = vmatpush2.msra.mxu0 0.0
    %1698 = vmatprep.mubr.f32.mxu0 0.0
    %1699 = vmatmul.mubr.f32.gmra.mxu0 %v1554
    %v1700 = vpop.f32.mrf.mxu0
    %v1701 = vadd.f32 0.0, %v1700
    %v1702 = vpop.f32.mrf.mxu0
    %1703 = vmatprep.mubr.f32.mxu0 0.0
    %1704 = vmatmul.mubr.f32.gmra.mxu0 %v1555
    %v1705 = vpop.f32.mrf.mxu0
    %v1706 = vadd.f32 0.0, %v1705
    %v1707 = vpop.f32.mrf.mxu0
    %1708 = vmatprep.mubr.f32.mxu0 0.0
    %1709 = vmatmul.mubr.f32.gmra.mxu0 %v1556
    %v1710 = vpop.f32.mrf.mxu0
    %v1711 = vadd.f32 0.0, %v1710
    %v1712 = vpop.f32.mrf.mxu0
    %1713 = vmatprep.mubr.f32.mxu0 0.0
    %1714 = vmatmul.mubr.f32.gmra.mxu0 %v1557
    %v1715 = vpop.f32.mrf.mxu0
    %v1716 = vadd.f32 0.0, %v1715
    %v1717 = vpop.f32.mrf.mxu0
    %1718 = vmatprep.mubr.f32.mxu0 0.0
    %1719 = vmatmul.mubr.f32.gmra.mxu0 %v1558
    %v1720 = vpop.f32.mrf.mxu0
    %v1721 = vadd.f32 0.0, %v1720
    %v1722 = vpop.f32.mrf.mxu0
    %1723 = vmatprep.mubr.f32.mxu0 0.0
    %1724 = vmatmul.mubr.f32.gmra.mxu0 %v1559
    %v1725 = vpop.f32.mrf.mxu0
    %v1726 = vadd.f32 0.0, %v1725
    %v1727 = vpop.f32.mrf.mxu0
    %1728 = vmatprep.mubr.f32.mxu0 0.0
    %1729 = vmatmul.mubr.f32.gmra.mxu0 %v1560
    %v1730 = vpop.f32.mrf.mxu0
    %v1731 = vadd.f32 0.0, %v1730
    %v1732 = vpop.f32.mrf.mxu0
    %1733 = vmatprep.mubr.f32.mxu0 0.0
    %1734 = vmatmul.mubr.f32.gmra.mxu0 %v1561
    %v1735 = vpop.f32.mrf.mxu0
    %v1736 = vadd.f32 0.0, %v1735
    %v1737 = vpop.f32.mrf.mxu0
    %1738 = vmatprep.mubr.f32.mxu0 0.0
    %1739 = vmatmul.mubr.f32.gmra.mxu0 %v1562
    %v1740 = vpop.f32.mrf.mxu0
    %v1741 = vadd.f32 0.0, %v1740
    %v1742 = vpop.f32.mrf.mxu0
    %1743 = vmatprep.mubr.f32.mxu0 0.0
    %1744 = vmatmul.mubr.f32.gmra.mxu0 %v1563
    %v1745 = vpop.f32.mrf.mxu0
    %v1746 = vadd.f32 0.0, %v1745
    %v1747 = vpop.f32.mrf.mxu0
    %1748 = vmatprep.mubr.f32.mxu0 0.0
    %1749 = vmatmul.mubr.f32.gmra.mxu0 %v1564
    %v1750 = vpop.f32.mrf.mxu0
    %v1751 = vadd.f32 0.0, %v1750
    %v1752 = vpop.f32.mrf.mxu0
    %1753 = vmatprep.mubr.f32.mxu0 0.0
    %1754 = vmatmul.mubr.f32.gmra.mxu0 %v1565
    %v1755 = vpop.f32.mrf.mxu0
    %v1756 = vadd.f32 0.0, %v1755
    %v1757 = vpop.f32.mrf.mxu0
    %1758 = vmatprep.mubr.f32.mxu0 0.0
    %1759 = vmatmul.mubr.f32.gmra.mxu0 %v1566
    %v1760 = vpop.f32.mrf.mxu0
    %v1761 = vadd.f32 0.0, %v1760
    %v1762 = vpop.f32.mrf.mxu0
    %1763 = vmatprep.mubr.f32.mxu0 0.0
    %1764 = vmatmul.mubr.f32.gmra.mxu0 %v1567
    %v1765 = vpop.f32.mrf.mxu0
    %v1766 = vadd.f32 0.0, %v1765
    %v1767 = vpop.f32.mrf.mxu0
    %1768 = vmatprep.mubr.f32.mxu0 0.0
    %1769 = vmatmul.mubr.f32.gmra.mxu0 %v1568
    %v1770 = vpop.f32.mrf.mxu0
    %v1771 = vadd.f32 0.0, %v1770
    %v1772 = vpop.f32.mrf.mxu0
    %1773 = vmatprep.mubr.f32.mxu0 0.0
    %1774 = vmatmul.mubr.f32.gmra.mxu0 %v1569
    %v1775 = vpop.f32.mrf.mxu0
    %v1776 = vadd.f32 0.0, %v1775
    %v1777 = vpop.f32.mrf.mxu0
    %1778 = vdwg.mxu0
    %1779 = vmatprep.subr.mxu0 0.0
    %1780 = vmatpush1.msra.mxu0 %v715
    %1781 = vmatprep.subr.mxu0 0.0
    %1782 = vmatpush1.msra.mxu0 %v710
    %1783 = vmatprep.subr.mxu0 0.0
    %1784 = vmatpush1.msra.mxu0 %v705
    %1785 = vmatprep.subr.mxu0 0.0
    %1786 = vmatpush1.msra.mxu0 %v700
    %1787 = vmatprep.subr.mxu0 0.0
    %1788 = vmatpush1.msra.mxu0 %v695
    %1789 = vmatprep.subr.mxu0 0.0
    %1790 = vmatpush1.msra.mxu0 %v690
    %1791 = vmatprep.subr.mxu0 0.0
    %1792 = vmatpush1.msra.mxu0 %v685
    %1793 = vmatprep.subr.mxu0 0.0
    %1794 = vmatpush1.msra.mxu0 %v680
    %1795 = vmatprep.subr.mxu0 0.0
    %1796 = vmatpush1.msra.mxu0 %v675
    %1797 = vmatprep.subr.mxu0 0.0
    %1798 = vmatpush1.msra.mxu0 %v670
    %1799 = vmatprep.subr.mxu0 0.0
    %1800 = vmatpush1.msra.mxu0 %v665
    %1801 = vmatprep.subr.mxu0 0.0
    %1802 = vmatpush1.msra.mxu0 %v660
    %1803 = vmatprep.subr.mxu0 0.0
    %1804 = vmatpush1.msra.mxu0 %v655
    %1805 = vmatprep.subr.mxu0 0.0
    %1806 = vmatpush1.msra.mxu0 %v650
    %1807 = vmatprep.subr.mxu0 0.0
    %1808 = vmatpush1.msra.mxu0 %v645
    %1809 = vmatprep.subr.mxu0 0.0
    %1810 = vmatpush1.msra.mxu0 %v640
    %1811 = vmatprep.subr.mxu0 0.0
    %1812 = vmatpush2.msra.mxu0 0.0
    %1813 = vmatprep.subr.mxu0 0.0
    %1814 = vmatpush2.msra.mxu0 0.0
    %1815 = vmatprep.subr.mxu0 0.0
    %1816 = vmatpush2.msra.mxu0 0.0
    %1817 = vmatprep.subr.mxu0 0.0
    %1818 = vmatpush2.msra.mxu0 0.0
    %1819 = vmatprep.subr.mxu0 0.0
    %1820 = vmatpush2.msra.mxu0 0.0
    %1821 = vmatprep.subr.mxu0 0.0
    %1822 = vmatpush2.msra.mxu0 0.0
    %1823 = vmatprep.subr.mxu0 0.0
    %1824 = vmatpush2.msra.mxu0 0.0
    %1825 = vmatprep.subr.mxu0 0.0
    %1826 = vmatpush2.msra.mxu0 0.0
    %1827 = vmatprep.subr.mxu0 0.0
    %1828 = vmatpush2.msra.mxu0 0.0
    %1829 = vmatprep.subr.mxu0 0.0
    %1830 = vmatpush2.msra.mxu0 0.0
    %1831 = vmatprep.subr.mxu0 0.0
    %1832 = vmatpush2.msra.mxu0 0.0
    %1833 = vmatprep.subr.mxu0 0.0
    %1834 = vmatpush2.msra.mxu0 0.0
    %1835 = vmatprep.subr.mxu0 0.0
    %1836 = vmatpush2.msra.mxu0 0.0
    %1837 = vmatprep.subr.mxu0 0.0
    %1838 = vmatpush2.msra.mxu0 0.0
    %1839 = vmatprep.subr.mxu0 0.0
    %1840 = vmatpush2.msra.mxu0 0.0
    %1841 = vmatprep.subr.mxu0 0.0
    %1842 = vmatpush2.msra.mxu0 0.0
    %1843 = vmatprep.mubr.f32.mxu0 0.0
    %1844 = vmatmul.mubr.f32.gmra.mxu0 %v1120
    %v1845 = vpop.f32.mrf.mxu0
    %v1846 = vadd.f32 %v1701, %v1845
    %v1847 = vpop.f32.mrf.mxu0
    %1848 = vmatprep.mubr.f32.mxu0 0.0
    %1849 = vmatmul.mubr.f32.gmra.mxu0 %v1121
    %v1850 = vpop.f32.mrf.mxu0
    %v1851 = vadd.f32 %v1706, %v1850
    %v1852 = vpop.f32.mrf.mxu0
    %1853 = vmatprep.mubr.f32.mxu0 0.0
    %1854 = vmatmul.mubr.f32.gmra.mxu0 %v1122
    %v1855 = vpop.f32.mrf.mxu0
    %v1856 = vadd.f32 %v1711, %v1855
    %v1857 = vpop.f32.mrf.mxu0
    %1858 = vmatprep.mubr.f32.mxu0 0.0
    %1859 = vmatmul.mubr.f32.gmra.mxu0 %v1123
    %v1860 = vpop.f32.mrf.mxu0
    %v1861 = vadd.f32 %v1716, %v1860
    %v1862 = vpop.f32.mrf.mxu0
    %1863 = vmatprep.mubr.f32.mxu0 0.0
    %1864 = vmatmul.mubr.f32.gmra.mxu0 %v1124
    %v1865 = vpop.f32.mrf.mxu0
    %v1866 = vadd.f32 %v1721, %v1865
    %v1867 = vpop.f32.mrf.mxu0
    %1868 = vmatprep.mubr.f32.mxu0 0.0
    %1869 = vmatmul.mubr.f32.gmra.mxu0 %v1125
    %v1870 = vpop.f32.mrf.mxu0
    %v1871 = vadd.f32 %v1726, %v1870
    %v1872 = vpop.f32.mrf.mxu0
    %1873 = vmatprep.mubr.f32.mxu0 0.0
    %1874 = vmatmul.mubr.f32.gmra.mxu0 %v1126
    %v1875 = vpop.f32.mrf.mxu0
    %v1876 = vadd.f32 %v1731, %v1875
    %v1877 = vpop.f32.mrf.mxu0
    %1878 = vmatprep.mubr.f32.mxu0 0.0
    %1879 = vmatmul.mubr.f32.gmra.mxu0 %v1127
    %v1880 = vpop.f32.mrf.mxu0
    %v1881 = vadd.f32 %v1736, %v1880
    %v1882 = vpop.f32.mrf.mxu0
    %1883 = vmatprep.mubr.f32.mxu0 0.0
    %1884 = vmatmul.mubr.f32.gmra.mxu0 %v1128
    %v1885 = vpop.f32.mrf.mxu0
    %v1886 = vadd.f32 %v1741, %v1885
    %v1887 = vpop.f32.mrf.mxu0
    %1888 = vmatprep.mubr.f32.mxu0 0.0
    %1889 = vmatmul.mubr.f32.gmra.mxu0 %v1129
    %v1890 = vpop.f32.mrf.mxu0
    %v1891 = vadd.f32 %v1746, %v1890
    %v1892 = vpop.f32.mrf.mxu0
    %1893 = vmatprep.mubr.f32.mxu0 0.0
    %1894 = vmatmul.mubr.f32.gmra.mxu0 %v1130
    %v1895 = vpop.f32.mrf.mxu0
    %v1896 = vadd.f32 %v1751, %v1895
    %v1897 = vpop.f32.mrf.mxu0
    %1898 = vmatprep.mubr.f32.mxu0 0.0
    %1899 = vmatmul.mubr.f32.gmra.mxu0 %v1131
    %v1900 = vpop.f32.mrf.mxu0
    %v1901 = vadd.f32 %v1756, %v1900
    %v1902 = vpop.f32.mrf.mxu0
    %1903 = vmatprep.mubr.f32.mxu0 0.0
    %1904 = vmatmul.mubr.f32.gmra.mxu0 %v1132
    %v1905 = vpop.f32.mrf.mxu0
    %v1906 = vadd.f32 %v1761, %v1905
    %v1907 = vpop.f32.mrf.mxu0
    %1908 = vmatprep.mubr.f32.mxu0 0.0
    %1909 = vmatmul.mubr.f32.gmra.mxu0 %v1133
    %v1910 = vpop.f32.mrf.mxu0
    %v1911 = vadd.f32 %v1766, %v1910
    %v1912 = vpop.f32.mrf.mxu0
    %1913 = vmatprep.mubr.f32.mxu0 0.0
    %1914 = vmatmul.mubr.f32.gmra.mxu0 %v1134
    %v1915 = vpop.f32.mrf.mxu0
    %v1916 = vadd.f32 %v1771, %v1915
    %v1917 = vpop.f32.mrf.mxu0
    %1918 = vmatprep.mubr.f32.mxu0 0.0
    %1919 = vmatmul.mubr.f32.gmra.mxu0 %v1135
    %v1920 = vpop.f32.mrf.mxu0
    %v1921 = vadd.f32 %v1776, %v1920
    %v1922 = vpop.f32.mrf.mxu0
    %1923 = vdwg.mxu0
    %s1924 = scalar_lea.vmem [#allocation2], 256
    %v1925 = vld [vmem:[%s1924] sm:$0xff]
    %v1926 = vld [vmem:[%s1924 + $0x8] sm:$0xff]
    %v1927 = vld [vmem:[%s1924 + $0x10] sm:$0xff]
    %v1928 = vld [vmem:[%s1924 + $0x18] sm:$0xff]
    %v1929 = vld [vmem:[%s1924 + $0x20] sm:$0xff]
    %v1930 = vld [vmem:[%s1924 + $0x28] sm:$0xff]
    %v1931 = vld [vmem:[%s1924 + $0x30] sm:$0xff]
    %v1932 = vld [vmem:[%s1924 + $0x38] sm:$0xff]
    %v1933 = vld [vmem:[%s1924 + $0x40] sm:$0xff]
    %v1934 = vld [vmem:[%s1924 + $0x48] sm:$0xff]
    %v1935 = vld [vmem:[%s1924 + $0x50] sm:$0xff]
    %v1936 = vld [vmem:[%s1924 + $0x58] sm:$0xff]
    %v1937 = vld [vmem:[%s1924 + $0x60] sm:$0xff]
    %v1938 = vld [vmem:[%s1924 + $0x68] sm:$0xff]
    %v1939 = vld [vmem:[%s1924 + $0x70] sm:$0xff]
    %v1940 = vld [vmem:[%s1924 + $0x78] sm:$0xff]
    %1941 = vrot.lane.b32.xlu0 %v491, 112
    %v1942 = vpop.permute.xlu0 %1941
    %1943 = vrot.lane.b32.xlu0 %v496, 112
    %v1944 = vpop.permute.xlu0 %1943
    %1945 = vrot.lane.b32.xlu0 %v501, 112
    %v1946 = vpop.permute.xlu0 %1945
    %1947 = vrot.lane.b32.xlu0 %v506, 112
    %v1948 = vpop.permute.xlu0 %1947
    %1949 = vrot.lane.b32.xlu0 %v511, 112
    %v1950 = vpop.permute.xlu0 %1949
    %1951 = vrot.lane.b32.xlu0 %v516, 112
    %v1952 = vpop.permute.xlu0 %1951
    %1953 = vrot.lane.b32.xlu0 %v521, 112
    %v1954 = vpop.permute.xlu0 %1953
    %1955 = vrot.lane.b32.xlu0 %v526, 112
    %v1956 = vpop.permute.xlu0 %1955
    %1957 = vrot.lane.b32.xlu0 %v531, 112
    %v1958 = vpop.permute.xlu0 %1957
    %1959 = vrot.lane.b32.xlu0 %v536, 112
    %v1960 = vpop.permute.xlu0 %1959
    %1961 = vrot.lane.b32.xlu0 %v541, 112
    %v1962 = vpop.permute.xlu0 %1961
    %1963 = vrot.lane.b32.xlu0 %v546, 112
    %v1964 = vpop.permute.xlu0 %1963
    %1965 = vrot.lane.b32.xlu0 %v551, 112
    %v1966 = vpop.permute.xlu0 %1965
    %1967 = vrot.lane.b32.xlu0 %v556, 112
    %v1968 = vpop.permute.xlu0 %1967
    %1969 = vrot.lane.b32.xlu0 %v561, 112
    %v1970 = vpop.permute.xlu0 %1969
    %1971 = vrot.lane.b32.xlu0 %v566, 112
    %v1972 = vpop.permute.xlu0 %1971
    %1973 = vrot.lane.b32.xlu0 %v491, 80
    %v1974 = vpop.permute.xlu0 %1973
    %1975 = vrot.lane.b32.xlu0 %v496, 80
    %v1976 = vpop.permute.xlu0 %1975
    %1977 = vrot.lane.b32.xlu0 %v501, 80
    %v1978 = vpop.permute.xlu0 %1977
    %1979 = vrot.lane.b32.xlu0 %v506, 80
    %v1980 = vpop.permute.xlu0 %1979
    %1981 = vrot.lane.b32.xlu0 %v511, 80
    %v1982 = vpop.permute.xlu0 %1981
    %1983 = vrot.lane.b32.xlu0 %v516, 80
    %v1984 = vpop.permute.xlu0 %1983
    %1985 = vrot.lane.b32.xlu0 %v521, 80
    %v1986 = vpop.permute.xlu0 %1985
    %1987 = vrot.lane.b32.xlu0 %v526, 80
    %v1988 = vpop.permute.xlu0 %1987
    %1989 = vrot.lane.b32.xlu0 %v531, 80
    %v1990 = vpop.permute.xlu0 %1989
    %1991 = vrot.lane.b32.xlu0 %v536, 80
    %v1992 = vpop.permute.xlu0 %1991
    %1993 = vrot.lane.b32.xlu0 %v541, 80
    %v1994 = vpop.permute.xlu0 %1993
    %1995 = vrot.lane.b32.xlu0 %v546, 80
    %v1996 = vpop.permute.xlu0 %1995
    %1997 = vrot.lane.b32.xlu0 %v551, 80
    %v1998 = vpop.permute.xlu0 %1997
    %1999 = vrot.lane.b32.xlu0 %v556, 80
    %v2000 = vpop.permute.xlu0 %1999
    %2001 = vrot.lane.b32.xlu0 %v561, 80
    %v2002 = vpop.permute.xlu0 %2001
    %2003 = vrot.lane.b32.xlu0 %v566, 80
    %v2004 = vpop.permute.xlu0 %2003
    %v2005 = vsel %vm782, %v1942, 0
    %v2007 = vsel %vm782, %v1944, 0
    %v2009 = vsel %vm782, %v1946, 0
    %v2011 = vsel %vm782, %v1948, 0
    %v2013 = vsel %vm782, %v1950, 0
    %v2015 = vsel %vm782, %v1952, 0
    %v2017 = vsel %vm782, %v1954, 0
    %v2019 = vsel %vm782, %v1956, 0
    %v2021 = vsel %vm782, %v1958, 0
    %v2023 = vsel %vm782, %v1960, 0
    %v2025 = vsel %vm782, %v1962, 0
    %v2027 = vsel %vm782, %v1964, 0
    %v2029 = vsel %vm782, %v1966, 0
    %v2031 = vsel %vm782, %v1968, 0
    %v2033 = vsel %vm782, %v1970, 0
    %v2035 = vsel %vm782, %v1972, 0
    %v2037 = vsel %vm782, %v1974, 0
    %v2039 = vsel %vm782, %v1976, 0
    %v2041 = vsel %vm782, %v1978, 0
    %v2043 = vsel %vm782, %v1980, 0
    %v2045 = vsel %vm782, %v1982, 0
    %v2047 = vsel %vm782, %v1984, 0
    %v2049 = vsel %vm782, %v1986, 0
    %v2051 = vsel %vm782, %v1988, 0
    %v2053 = vsel %vm782, %v1990, 0
    %v2055 = vsel %vm782, %v1992, 0
    %v2057 = vsel %vm782, %v1994, 0
    %v2059 = vsel %vm782, %v1996, 0
    %v2061 = vsel %vm782, %v1998, 0
    %v2063 = vsel %vm782, %v2000, 0
    %v2065 = vsel %vm782, %v2002, 0
    %v2067 = vsel %vm782, %v2004, 0
    %2069 = vmatprep.subr.mxu0 0.0
    %2070 = vmatpush1.xpose.msra.mxu0 %v2067
    %2071 = vmatprep.subr.mxu0 0.0
    %2072 = vmatpush1.xpose.msra.mxu0 %v2065
    %2073 = vmatprep.subr.mxu0 0.0
    %2074 = vmatpush1.xpose.msra.mxu0 %v2063
    %2075 = vmatprep.subr.mxu0 0.0
    %2076 = vmatpush1.xpose.msra.mxu0 %v2061
    %2077 = vmatprep.subr.mxu0 0.0
    %2078 = vmatpush1.xpose.msra.mxu0 %v2059
    %2079 = vmatprep.subr.mxu0 0.0
    %2080 = vmatpush1.xpose.msra.mxu0 %v2057
    %2081 = vmatprep.subr.mxu0 0.0
    %2082 = vmatpush1.xpose.msra.mxu0 %v2055
    %2083 = vmatprep.subr.mxu0 0.0
    %2084 = vmatpush1.xpose.msra.mxu0 %v2053
    %2085 = vmatprep.subr.mxu0 0.0
    %2086 = vmatpush1.xpose.msra.mxu0 %v2051
    %2087 = vmatprep.subr.mxu0 0.0
    %2088 = vmatpush1.xpose.msra.mxu0 %v2049
    %2089 = vmatprep.subr.mxu0 0.0
    %2090 = vmatpush1.xpose.msra.mxu0 %v2047
    %2091 = vmatprep.subr.mxu0 0.0
    %2092 = vmatpush1.xpose.msra.mxu0 %v2045
    %2093 = vmatprep.subr.mxu0 0.0
    %2094 = vmatpush1.xpose.msra.mxu0 %v2043
    %2095 = vmatprep.subr.mxu0 0.0
    %2096 = vmatpush1.xpose.msra.mxu0 %v2041
    %2097 = vmatprep.subr.mxu0 0.0
    %2098 = vmatpush1.xpose.msra.mxu0 %v2039
    %2099 = vmatprep.subr.mxu0 0.0
    %2100 = vmatpush1.xpose.msra.mxu0 %v2037
    %2101 = vmatprep.subr.mxu0 0.0
    %2102 = vmatpush2.xpose.msra.mxu0 0.0
    %2103 = vmatprep.subr.mxu0 0.0
    %2104 = vmatpush2.xpose.msra.mxu0 0.0
    %2105 = vmatprep.subr.mxu0 0.0
    %2106 = vmatpush2.xpose.msra.mxu0 0.0
    %2107 = vmatprep.subr.mxu0 0.0
    %2108 = vmatpush2.xpose.msra.mxu0 0.0
    %2109 = vmatprep.subr.mxu0 0.0
    %2110 = vmatpush2.xpose.msra.mxu0 0.0
    %2111 = vmatprep.subr.mxu0 0.0
    %2112 = vmatpush2.xpose.msra.mxu0 0.0
    %2113 = vmatprep.subr.mxu0 0.0
    %2114 = vmatpush2.xpose.msra.mxu0 0.0
    %2115 = vmatprep.subr.mxu0 0.0
    %2116 = vmatpush2.xpose.msra.mxu0 0.0
    %2117 = vmatprep.subr.mxu0 0.0
    %2118 = vmatpush2.xpose.msra.mxu0 0.0
    %2119 = vmatprep.subr.mxu0 0.0
    %2120 = vmatpush2.xpose.msra.mxu0 0.0
    %2121 = vmatprep.subr.mxu0 0.0
    %2122 = vmatpush2.xpose.msra.mxu0 0.0
    %2123 = vmatprep.subr.mxu0 0.0
    %2124 = vmatpush2.xpose.msra.mxu0 0.0
    %2125 = vmatprep.subr.mxu0 0.0
    %2126 = vmatpush2.xpose.msra.mxu0 0.0
    %2127 = vmatprep.subr.mxu0 0.0
    %2128 = vmatpush2.xpose.msra.mxu0 0.0
    %2129 = vmatprep.subr.mxu0 0.0
    %2130 = vmatpush2.xpose.msra.mxu0 0.0
    %2131 = vmatprep.subr.mxu0 0.0
    %2132 = vmatpush2.xpose.msra.mxu0 0.0
    %2133 = vmatprep.mubr.f32.mxu0 0.0
    %2134 = vmatmul.mubr.f32.gmra.mxu0 %v2005
    %v2135 = vpop.f32.mrf.mxu0
    %v2136 = vadd.f32 %v1925, %v2135
    %v2137 = vpop.f32.mrf.mxu0
    %2138 = vmatprep.mubr.f32.mxu0 0.0
    %2139 = vmatmul.mubr.f32.gmra.mxu0 %v2007
    %v2140 = vpop.f32.mrf.mxu0
    %v2141 = vadd.f32 %v1926, %v2140
    %v2142 = vpop.f32.mrf.mxu0
    %2143 = vmatprep.mubr.f32.mxu0 0.0
    %2144 = vmatmul.mubr.f32.gmra.mxu0 %v2009
    %v2145 = vpop.f32.mrf.mxu0
    %v2146 = vadd.f32 %v1927, %v2145
    %v2147 = vpop.f32.mrf.mxu0
    %2148 = vmatprep.mubr.f32.mxu0 0.0
    %2149 = vmatmul.mubr.f32.gmra.mxu0 %v2011
    %v2150 = vpop.f32.mrf.mxu0
    %v2151 = vadd.f32 %v1928, %v2150
    %v2152 = vpop.f32.mrf.mxu0
    %2153 = vmatprep.mubr.f32.mxu0 0.0
    %2154 = vmatmul.mubr.f32.gmra.mxu0 %v2013
    %v2155 = vpop.f32.mrf.mxu0
    %v2156 = vadd.f32 %v1929, %v2155
    %v2157 = vpop.f32.mrf.mxu0
    %2158 = vmatprep.mubr.f32.mxu0 0.0
    %2159 = vmatmul.mubr.f32.gmra.mxu0 %v2015
    %v2160 = vpop.f32.mrf.mxu0
    %v2161 = vadd.f32 %v1930, %v2160
    %v2162 = vpop.f32.mrf.mxu0
    %2163 = vmatprep.mubr.f32.mxu0 0.0
    %2164 = vmatmul.mubr.f32.gmra.mxu0 %v2017
    %v2165 = vpop.f32.mrf.mxu0
    %v2166 = vadd.f32 %v1931, %v2165
    %v2167 = vpop.f32.mrf.mxu0
    %2168 = vmatprep.mubr.f32.mxu0 0.0
    %2169 = vmatmul.mubr.f32.gmra.mxu0 %v2019
    %v2170 = vpop.f32.mrf.mxu0
    %v2171 = vadd.f32 %v1932, %v2170
    %v2172 = vpop.f32.mrf.mxu0
    %2173 = vmatprep.mubr.f32.mxu0 0.0
    %2174 = vmatmul.mubr.f32.gmra.mxu0 %v2021
    %v2175 = vpop.f32.mrf.mxu0
    %v2176 = vadd.f32 %v1933, %v2175
    %v2177 = vpop.f32.mrf.mxu0
    %2178 = vmatprep.mubr.f32.mxu0 0.0
    %2179 = vmatmul.mubr.f32.gmra.mxu0 %v2023
    %v2180 = vpop.f32.mrf.mxu0
    %v2181 = vadd.f32 %v1934, %v2180
    %v2182 = vpop.f32.mrf.mxu0
    %2183 = vmatprep.mubr.f32.mxu0 0.0
    %2184 = vmatmul.mubr.f32.gmra.mxu0 %v2025
    %v2185 = vpop.f32.mrf.mxu0
    %v2186 = vadd.f32 %v1935, %v2185
    %v2187 = vpop.f32.mrf.mxu0
    %2188 = vmatprep.mubr.f32.mxu0 0.0
    %2189 = vmatmul.mubr.f32.gmra.mxu0 %v2027
    %v2190 = vpop.f32.mrf.mxu0
    %v2191 = vadd.f32 %v1936, %v2190
    %v2192 = vpop.f32.mrf.mxu0
    %2193 = vmatprep.mubr.f32.mxu0 0.0
    %2194 = vmatmul.mubr.f32.gmra.mxu0 %v2029
    %v2195 = vpop.f32.mrf.mxu0
    %v2196 = vadd.f32 %v1937, %v2195
    %v2197 = vpop.f32.mrf.mxu0
    %2198 = vmatprep.mubr.f32.mxu0 0.0
    %2199 = vmatmul.mubr.f32.gmra.mxu0 %v2031
    %v2200 = vpop.f32.mrf.mxu0
    %v2201 = vadd.f32 %v1938, %v2200
    %v2202 = vpop.f32.mrf.mxu0
    %2203 = vmatprep.mubr.f32.mxu0 0.0
    %2204 = vmatmul.mubr.f32.gmra.mxu0 %v2033
    %v2205 = vpop.f32.mrf.mxu0
    %v2206 = vadd.f32 %v1939, %v2205
    %v2207 = vpop.f32.mrf.mxu0
    %2208 = vmatprep.mubr.f32.mxu0 0.0
    %2209 = vmatmul.mubr.f32.gmra.mxu0 %v2035
    %v2210 = vpop.f32.mrf.mxu0
    %v2211 = vadd.f32 %v1940, %v2210
    %v2212 = vpop.f32.mrf.mxu0
    %2213 = vdwg.mxu0
    %2214 = vmax.xlane.f32.xlu0 %v2136
    %v2215 = vpop.xlane.xlu0 %2214
    %2216 = vmax.xlane.f32.xlu0 %v2141
    %v2217 = vpop.xlane.xlu0 %2216
    %2218 = vmax.xlane.f32.xlu0 %v2146
    %v2219 = vpop.xlane.xlu0 %2218
    %2220 = vmax.xlane.f32.xlu0 %v2151
    %v2221 = vpop.xlane.xlu0 %2220
    %2222 = vmax.xlane.f32.xlu0 %v2156
    %v2223 = vpop.xlane.xlu0 %2222
    %2224 = vmax.xlane.f32.xlu0 %v2161
    %v2225 = vpop.xlane.xlu0 %2224
    %2226 = vmax.xlane.f32.xlu0 %v2166
    %v2227 = vpop.xlane.xlu0 %2226
    %2228 = vmax.xlane.f32.xlu0 %v2171
    %v2229 = vpop.xlane.xlu0 %2228
    %2230 = vmax.xlane.f32.xlu0 %v2176
    %v2231 = vpop.xlane.xlu0 %2230
    %2232 = vmax.xlane.f32.xlu0 %v2181
    %v2233 = vpop.xlane.xlu0 %2232
    %2234 = vmax.xlane.f32.xlu0 %v2186
    %v2235 = vpop.xlane.xlu0 %2234
    %2236 = vmax.xlane.f32.xlu0 %v2191
    %v2237 = vpop.xlane.xlu0 %2236
    %2238 = vmax.xlane.f32.xlu0 %v2196
    %v2239 = vpop.xlane.xlu0 %2238
    %2240 = vmax.xlane.f32.xlu0 %v2201
    %v2241 = vpop.xlane.xlu0 %2240
    %2242 = vmax.xlane.f32.xlu0 %v2206
    %v2243 = vpop.xlane.xlu0 %2242
    %2244 = vmax.xlane.f32.xlu0 %v2211
    %v2245 = vpop.xlane.xlu0 %2244
    %v2246 = vsub.f32 %v2136, %v2215
    %v2247 = vsub.f32 %v2141, %v2217
    %v2248 = vsub.f32 %v2146, %v2219
    %v2249 = vsub.f32 %v2151, %v2221
    %v2250 = vsub.f32 %v2156, %v2223
    %v2251 = vsub.f32 %v2161, %v2225
    %v2252 = vsub.f32 %v2166, %v2227
    %v2253 = vsub.f32 %v2171, %v2229
    %v2254 = vsub.f32 %v2176, %v2231
    %v2255 = vsub.f32 %v2181, %v2233
    %v2256 = vsub.f32 %v2186, %v2235
    %v2257 = vsub.f32 %v2191, %v2237
    %v2258 = vsub.f32 %v2196, %v2239
    %v2259 = vsub.f32 %v2201, %v2241
    %v2260 = vsub.f32 %v2206, %v2243
    %v2261 = vsub.f32 %v2211, %v2245
    %v2262 = vmul.f32 %v2246, 1.442695
    %v2263 = vpow.pop %v2262
    %v2264 = vmul.f32 %v2247, 1.442695
    %v2265 = vpow.pop %v2264
    %v2266 = vmul.f32 %v2248, 1.442695
    %v2267 = vpow.pop %v2266
    %v2268 = vmul.f32 %v2249, 1.442695
    %v2269 = vpow.pop %v2268
    %v2270 = vmul.f32 %v2250, 1.442695
    %v2271 = vpow.pop %v2270
    %v2272 = vmul.f32 %v2251, 1.442695
    %v2273 = vpow.pop %v2272
    %v2274 = vmul.f32 %v2252, 1.442695
    %v2275 = vpow.pop %v2274
    %v2276 = vmul.f32 %v2253, 1.442695
    %v2277 = vpow.pop %v2276
    %v2278 = vmul.f32 %v2254, 1.442695
    %v2279 = vpow.pop %v2278
    %v2280 = vmul.f32 %v2255, 1.442695
    %v2281 = vpow.pop %v2280
    %v2282 = vmul.f32 %v2256, 1.442695
    %v2283 = vpow.pop %v2282
    %v2284 = vmul.f32 %v2257, 1.442695
    %v2285 = vpow.pop %v2284
    %v2286 = vmul.f32 %v2258, 1.442695
    %v2287 = vpow.pop %v2286
    %v2288 = vmul.f32 %v2259, 1.442695
    %v2289 = vpow.pop %v2288
    %v2290 = vmul.f32 %v2260, 1.442695
    %v2291 = vpow.pop %v2290
    %v2292 = vmul.f32 %v2261, 1.442695
    %v2293 = vpow.pop %v2292
    %2294 = vadd.xlane.f32.xlu0 %v2263
    %v2295 = vpop.xlane.xlu0 %2294
    %2296 = vadd.xlane.f32.xlu0 %v2265
    %v2297 = vpop.xlane.xlu0 %2296
    %2298 = vadd.xlane.f32.xlu0 %v2267
    %v2299 = vpop.xlane.xlu0 %2298
    %2300 = vadd.xlane.f32.xlu0 %v2269
    %v2301 = vpop.xlane.xlu0 %2300
    %2302 = vadd.xlane.f32.xlu0 %v2271
    %v2303 = vpop.xlane.xlu0 %2302
    %2304 = vadd.xlane.f32.xlu0 %v2273
    %v2305 = vpop.xlane.xlu0 %2304
    %2306 = vadd.xlane.f32.xlu0 %v2275
    %v2307 = vpop.xlane.xlu0 %2306
    %2308 = vadd.xlane.f32.xlu0 %v2277
    %v2309 = vpop.xlane.xlu0 %2308
    %2310 = vadd.xlane.f32.xlu0 %v2279
    %v2311 = vpop.xlane.xlu0 %2310
    %2312 = vadd.xlane.f32.xlu0 %v2281
    %v2313 = vpop.xlane.xlu0 %2312
    %2314 = vadd.xlane.f32.xlu0 %v2283
    %v2315 = vpop.xlane.xlu0 %2314
    %2316 = vadd.xlane.f32.xlu0 %v2285
    %v2317 = vpop.xlane.xlu0 %2316
    %2318 = vadd.xlane.f32.xlu0 %v2287
    %v2319 = vpop.xlane.xlu0 %2318
    %2320 = vadd.xlane.f32.xlu0 %v2289
    %v2321 = vpop.xlane.xlu0 %2320
    %2322 = vadd.xlane.f32.xlu0 %v2291
    %v2323 = vpop.xlane.xlu0 %2322
    %2324 = vadd.xlane.f32.xlu0 %v2293
    %v2325 = vpop.xlane.xlu0 %2324
    %v2326 = vrcp.pop %v2295
    %v2327 = vrcp.pop %v2297
    %v2328 = vrcp.pop %v2299
    %v2329 = vrcp.pop %v2301
    %v2330 = vrcp.pop %v2303
    %v2331 = vrcp.pop %v2305
    %v2332 = vrcp.pop %v2307
    %v2333 = vrcp.pop %v2309
    %v2334 = vrcp.pop %v2311
    %v2335 = vrcp.pop %v2313
    %v2336 = vrcp.pop %v2315
    %v2337 = vrcp.pop %v2317
    %v2338 = vrcp.pop %v2319
    %v2339 = vrcp.pop %v2321
    %v2340 = vrcp.pop %v2323
    %v2341 = vrcp.pop %v2325
    %v2342 = vmul.f32 %v2263, %v2326
    %v2343 = vmul.f32 %v2265, %v2327
    %v2344 = vmul.f32 %v2267, %v2328
    %v2345 = vmul.f32 %v2269, %v2329
    %v2346 = vmul.f32 %v2271, %v2330
    %v2347 = vmul.f32 %v2273, %v2331
    %v2348 = vmul.f32 %v2275, %v2332
    %v2349 = vmul.f32 %v2277, %v2333
    %v2350 = vmul.f32 %v2279, %v2334
    %v2351 = vmul.f32 %v2281, %v2335
    %v2352 = vmul.f32 %v2283, %v2336
    %v2353 = vmul.f32 %v2285, %v2337
    %v2354 = vmul.f32 %v2287, %v2338
    %v2355 = vmul.f32 %v2289, %v2339
    %v2356 = vmul.f32 %v2291, %v2340
    %v2357 = vmul.f32 %v2293, %v2341
    %2358 = vrot.lane.b32.xlu0 %v640, 64
    %v2359 = vpop.permute.xlu0 %2358
    %2360 = vrot.lane.b32.xlu0 %v645, 64
    %v2361 = vpop.permute.xlu0 %2360
    %2362 = vrot.lane.b32.xlu0 %v650, 64
    %v2363 = vpop.permute.xlu0 %2362
    %2364 = vrot.lane.b32.xlu0 %v655, 64
    %v2365 = vpop.permute.xlu0 %2364
    %2366 = vrot.lane.b32.xlu0 %v660, 64
    %v2367 = vpop.permute.xlu0 %2366
    %2368 = vrot.lane.b32.xlu0 %v665, 64
    %v2369 = vpop.permute.xlu0 %2368
    %2370 = vrot.lane.b32.xlu0 %v670, 64
    %v2371 = vpop.permute.xlu0 %2370
    %2372 = vrot.lane.b32.xlu0 %v675, 64
    %v2373 = vpop.permute.xlu0 %2372
    %2374 = vrot.lane.b32.xlu0 %v680, 64
    %v2375 = vpop.permute.xlu0 %2374
    %2376 = vrot.lane.b32.xlu0 %v685, 64
    %v2377 = vpop.permute.xlu0 %2376
    %2378 = vrot.lane.b32.xlu0 %v690, 64
    %v2379 = vpop.permute.xlu0 %2378
    %2380 = vrot.lane.b32.xlu0 %v695, 64
    %v2381 = vpop.permute.xlu0 %2380
    %2382 = vrot.lane.b32.xlu0 %v700, 64
    %v2383 = vpop.permute.xlu0 %2382
    %2384 = vrot.lane.b32.xlu0 %v705, 64
    %v2385 = vpop.permute.xlu0 %2384
    %2386 = vrot.lane.b32.xlu0 %v710, 64
    %v2387 = vpop.permute.xlu0 %2386
    %2388 = vrot.lane.b32.xlu0 %v715, 64
    %v2389 = vpop.permute.xlu0 %2388
    %2406 = vmatprep.subr.mxu0 0.0
    %2407 = vmatpush1.msra.mxu0 %v2389
    %2408 = vmatprep.subr.mxu0 0.0
    %2409 = vmatpush1.msra.mxu0 %v2387
    %2410 = vmatprep.subr.mxu0 0.0
    %2411 = vmatpush1.msra.mxu0 %v2385
    %2412 = vmatprep.subr.mxu0 0.0
    %2413 = vmatpush1.msra.mxu0 %v2383
    %2414 = vmatprep.subr.mxu0 0.0
    %2415 = vmatpush1.msra.mxu0 %v2381
    %2416 = vmatprep.subr.mxu0 0.0
    %2417 = vmatpush1.msra.mxu0 %v2379
    %2418 = vmatprep.subr.mxu0 0.0
    %2419 = vmatpush1.msra.mxu0 %v2377
    %2420 = vmatprep.subr.mxu0 0.0
    %2421 = vmatpush1.msra.mxu0 %v2375
    %2422 = vmatprep.subr.mxu0 0.0
    %2423 = vmatpush1.msra.mxu0 %v2373
    %2424 = vmatprep.subr.mxu0 0.0
    %2425 = vmatpush1.msra.mxu0 %v2371
    %2426 = vmatprep.subr.mxu0 0.0
    %2427 = vmatpush1.msra.mxu0 %v2369
    %2428 = vmatprep.subr.mxu0 0.0
    %2429 = vmatpush1.msra.mxu0 %v2367
    %2430 = vmatprep.subr.mxu0 0.0
    %2431 = vmatpush1.msra.mxu0 %v2365
    %2432 = vmatprep.subr.mxu0 0.0
    %2433 = vmatpush1.msra.mxu0 %v2363
    %2434 = vmatprep.subr.mxu0 0.0
    %2435 = vmatpush1.msra.mxu0 %v2361
    %2436 = vmatprep.subr.mxu0 0.0
    %2437 = vmatpush1.msra.mxu0 %v2359
    %2438 = vmatprep.subr.mxu0 0.0
    %2439 = vmatpush2.msra.mxu0 0.0
    %2440 = vmatprep.subr.mxu0 0.0
    %2441 = vmatpush2.msra.mxu0 0.0
    %2442 = vmatprep.subr.mxu0 0.0
    %2443 = vmatpush2.msra.mxu0 0.0
    %2444 = vmatprep.subr.mxu0 0.0
    %2445 = vmatpush2.msra.mxu0 0.0
    %2446 = vmatprep.subr.mxu0 0.0
    %2447 = vmatpush2.msra.mxu0 0.0
    %2448 = vmatprep.subr.mxu0 0.0
    %2449 = vmatpush2.msra.mxu0 0.0
    %2450 = vmatprep.subr.mxu0 0.0
    %2451 = vmatpush2.msra.mxu0 0.0
    %2452 = vmatprep.subr.mxu0 0.0
    %2453 = vmatpush2.msra.mxu0 0.0
    %2454 = vmatprep.subr.mxu0 0.0
    %2455 = vmatpush2.msra.mxu0 0.0
    %2456 = vmatprep.subr.mxu0 0.0
    %2457 = vmatpush2.msra.mxu0 0.0
    %2458 = vmatprep.subr.mxu0 0.0
    %2459 = vmatpush2.msra.mxu0 0.0
    %2460 = vmatprep.subr.mxu0 0.0
    %2461 = vmatpush2.msra.mxu0 0.0
    %2462 = vmatprep.subr.mxu0 0.0
    %2463 = vmatpush2.msra.mxu0 0.0
    %2464 = vmatprep.subr.mxu0 0.0
    %2465 = vmatpush2.msra.mxu0 0.0
    %2466 = vmatprep.subr.mxu0 0.0
    %2467 = vmatpush2.msra.mxu0 0.0
    %2468 = vmatprep.subr.mxu0 0.0
    %2469 = vmatpush2.msra.mxu0 0.0
    %2470 = vmatprep.mubr.f32.mxu0 0.0
    %2471 = vmatmul.mubr.f32.gmra.mxu0 %v2342
    %v2472 = vpop.f32.mrf.mxu0
    %v2473 = vadd.f32 0.0, %v2472
    %v2474 = vpop.f32.mrf.mxu0
    %2475 = vmatprep.mubr.f32.mxu0 0.0
    %2476 = vmatmul.mubr.f32.gmra.mxu0 %v2343
    %v2477 = vpop.f32.mrf.mxu0
    %v2478 = vadd.f32 0.0, %v2477
    %v2479 = vpop.f32.mrf.mxu0
    %2480 = vmatprep.mubr.f32.mxu0 0.0
    %2481 = vmatmul.mubr.f32.gmra.mxu0 %v2344
    %v2482 = vpop.f32.mrf.mxu0
    %v2483 = vadd.f32 0.0, %v2482
    %v2484 = vpop.f32.mrf.mxu0
    %2485 = vmatprep.mubr.f32.mxu0 0.0
    %2486 = vmatmul.mubr.f32.gmra.mxu0 %v2345
    %v2487 = vpop.f32.mrf.mxu0
    %v2488 = vadd.f32 0.0, %v2487
    %v2489 = vpop.f32.mrf.mxu0
    %2490 = vmatprep.mubr.f32.mxu0 0.0
    %2491 = vmatmul.mubr.f32.gmra.mxu0 %v2346
    %v2492 = vpop.f32.mrf.mxu0
    %v2493 = vadd.f32 0.0, %v2492
    %v2494 = vpop.f32.mrf.mxu0
    %2495 = vmatprep.mubr.f32.mxu0 0.0
    %2496 = vmatmul.mubr.f32.gmra.mxu0 %v2347
    %v2497 = vpop.f32.mrf.mxu0
    %v2498 = vadd.f32 0.0, %v2497
    %v2499 = vpop.f32.mrf.mxu0
    %2500 = vmatprep.mubr.f32.mxu0 0.0
    %2501 = vmatmul.mubr.f32.gmra.mxu0 %v2348
    %v2502 = vpop.f32.mrf.mxu0
    %v2503 = vadd.f32 0.0, %v2502
    %v2504 = vpop.f32.mrf.mxu0
    %2505 = vmatprep.mubr.f32.mxu0 0.0
    %2506 = vmatmul.mubr.f32.gmra.mxu0 %v2349
    %v2507 = vpop.f32.mrf.mxu0
    %v2508 = vadd.f32 0.0, %v2507
    %v2509 = vpop.f32.mrf.mxu0
    %2510 = vmatprep.mubr.f32.mxu0 0.0
    %2511 = vmatmul.mubr.f32.gmra.mxu0 %v2350
    %v2512 = vpop.f32.mrf.mxu0
    %v2513 = vadd.f32 0.0, %v2512
    %v2514 = vpop.f32.mrf.mxu0
    %2515 = vmatprep.mubr.f32.mxu0 0.0
    %2516 = vmatmul.mubr.f32.gmra.mxu0 %v2351
    %v2517 = vpop.f32.mrf.mxu0
    %v2518 = vadd.f32 0.0, %v2517
    %v2519 = vpop.f32.mrf.mxu0
    %2520 = vmatprep.mubr.f32.mxu0 0.0
    %2521 = vmatmul.mubr.f32.gmra.mxu0 %v2352
    %v2522 = vpop.f32.mrf.mxu0
    %v2523 = vadd.f32 0.0, %v2522
    %v2524 = vpop.f32.mrf.mxu0
    %2525 = vmatprep.mubr.f32.mxu0 0.0
    %2526 = vmatmul.mubr.f32.gmra.mxu0 %v2353
    %v2527 = vpop.f32.mrf.mxu0
    %v2528 = vadd.f32 0.0, %v2527
    %v2529 = vpop.f32.mrf.mxu0
    %2530 = vmatprep.mubr.f32.mxu0 0.0
    %2531 = vmatmul.mubr.f32.gmra.mxu0 %v2354
    %v2532 = vpop.f32.mrf.mxu0
    %v2533 = vadd.f32 0.0, %v2532
    %v2534 = vpop.f32.mrf.mxu0
    %2535 = vmatprep.mubr.f32.mxu0 0.0
    %2536 = vmatmul.mubr.f32.gmra.mxu0 %v2355
    %v2537 = vpop.f32.mrf.mxu0
    %v2538 = vadd.f32 0.0, %v2537
    %v2539 = vpop.f32.mrf.mxu0
    %2540 = vmatprep.mubr.f32.mxu0 0.0
    %2541 = vmatmul.mubr.f32.gmra.mxu0 %v2356
    %v2542 = vpop.f32.mrf.mxu0
    %v2543 = vadd.f32 0.0, %v2542
    %v2544 = vpop.f32.mrf.mxu0
    %2545 = vmatprep.mubr.f32.mxu0 0.0
    %2546 = vmatmul.mubr.f32.gmra.mxu0 %v2357
    %v2547 = vpop.f32.mrf.mxu0
    %v2548 = vadd.f32 0.0, %v2547
    %v2549 = vpop.f32.mrf.mxu0
    %2550 = vdwg.mxu0
    %v2551 = vadd.f32 %v1846, %v2473
    %v2552 = vadd.f32 %v1851, %v2478
    %v2553 = vadd.f32 %v1856, %v2483
    %v2554 = vadd.f32 %v1861, %v2488
    %v2555 = vadd.f32 %v1866, %v2493
    %v2556 = vadd.f32 %v1871, %v2498
    %v2557 = vadd.f32 %v1876, %v2503
    %v2558 = vadd.f32 %v1881, %v2508
    %v2559 = vadd.f32 %v1886, %v2513
    %v2560 = vadd.f32 %v1891, %v2518
    %v2561 = vadd.f32 %v1896, %v2523
    %v2562 = vadd.f32 %v1901, %v2528
    %v2563 = vadd.f32 %v1906, %v2533
    %v2564 = vadd.f32 %v1911, %v2538
    %v2565 = vadd.f32 %v1916, %v2543
    %v2566 = vadd.f32 %v1921, %v2548
    %s2567 = scalar_lea.vmem [#allocation2], 384
    %v2568 = vld [vmem:[%s2567] sm:$0xff]
    %v2569 = vld [vmem:[%s2567 + $0x8] sm:$0xff]
    %v2570 = vld [vmem:[%s2567 + $0x10] sm:$0xff]
    %v2571 = vld [vmem:[%s2567 + $0x18] sm:$0xff]
    %v2572 = vld [vmem:[%s2567 + $0x20] sm:$0xff]
    %v2573 = vld [vmem:[%s2567 + $0x28] sm:$0xff]
    %v2574 = vld [vmem:[%s2567 + $0x30] sm:$0xff]
    %v2575 = vld [vmem:[%s2567 + $0x38] sm:$0xff]
    %v2576 = vld [vmem:[%s2567 + $0x40] sm:$0xff]
    %v2577 = vld [vmem:[%s2567 + $0x48] sm:$0xff]
    %v2578 = vld [vmem:[%s2567 + $0x50] sm:$0xff]
    %v2579 = vld [vmem:[%s2567 + $0x58] sm:$0xff]
    %v2580 = vld [vmem:[%s2567 + $0x60] sm:$0xff]
    %v2581 = vld [vmem:[%s2567 + $0x68] sm:$0xff]
    %v2582 = vld [vmem:[%s2567 + $0x70] sm:$0xff]
    %v2583 = vld [vmem:[%s2567 + $0x78] sm:$0xff]
    %2584 = vrot.lane.b32.xlu0 %v491, 104
    %v2585 = vpop.permute.xlu0 %2584
    %2586 = vrot.lane.b32.xlu0 %v496, 104
    %v2587 = vpop.permute.xlu0 %2586
    %2588 = vrot.lane.b32.xlu0 %v501, 104
    %v2589 = vpop.permute.xlu0 %2588
    %2590 = vrot.lane.b32.xlu0 %v506, 104
    %v2591 = vpop.permute.xlu0 %2590
    %2592 = vrot.lane.b32.xlu0 %v511, 104
    %v2593 = vpop.permute.xlu0 %2592
    %2594 = vrot.lane.b32.xlu0 %v516, 104
    %v2595 = vpop.permute.xlu0 %2594
    %2596 = vrot.lane.b32.xlu0 %v521, 104
    %v2597 = vpop.permute.xlu0 %2596
    %2598 = vrot.lane.b32.xlu0 %v526, 104
    %v2599 = vpop.permute.xlu0 %2598
    %2600 = vrot.lane.b32.xlu0 %v531, 104
    %v2601 = vpop.permute.xlu0 %2600
    %2602 = vrot.lane.b32.xlu0 %v536, 104
    %v2603 = vpop.permute.xlu0 %2602
    %2604 = vrot.lane.b32.xlu0 %v541, 104
    %v2605 = vpop.permute.xlu0 %2604
    %2606 = vrot.lane.b32.xlu0 %v546, 104
    %v2607 = vpop.permute.xlu0 %2606
    %2608 = vrot.lane.b32.xlu0 %v551, 104
    %v2609 = vpop.permute.xlu0 %2608
    %2610 = vrot.lane.b32.xlu0 %v556, 104
    %v2611 = vpop.permute.xlu0 %2610
    %2612 = vrot.lane.b32.xlu0 %v561, 104
    %v2613 = vpop.permute.xlu0 %2612
    %2614 = vrot.lane.b32.xlu0 %v566, 104
    %v2615 = vpop.permute.xlu0 %2614
    %2616 = vrot.lane.b32.xlu0 %v491, 72
    %v2617 = vpop.permute.xlu0 %2616
    %2618 = vrot.lane.b32.xlu0 %v496, 72
    %v2619 = vpop.permute.xlu0 %2618
    %2620 = vrot.lane.b32.xlu0 %v501, 72
    %v2621 = vpop.permute.xlu0 %2620
    %2622 = vrot.lane.b32.xlu0 %v506, 72
    %v2623 = vpop.permute.xlu0 %2622
    %2624 = vrot.lane.b32.xlu0 %v511, 72
    %v2625 = vpop.permute.xlu0 %2624
    %2626 = vrot.lane.b32.xlu0 %v516, 72
    %v2627 = vpop.permute.xlu0 %2626
    %2628 = vrot.lane.b32.xlu0 %v521, 72
    %v2629 = vpop.permute.xlu0 %2628
    %2630 = vrot.lane.b32.xlu0 %v526, 72
    %v2631 = vpop.permute.xlu0 %2630
    %2632 = vrot.lane.b32.xlu0 %v531, 72
    %v2633 = vpop.permute.xlu0 %2632
    %2634 = vrot.lane.b32.xlu0 %v536, 72
    %v2635 = vpop.permute.xlu0 %2634
    %2636 = vrot.lane.b32.xlu0 %v541, 72
    %v2637 = vpop.permute.xlu0 %2636
    %2638 = vrot.lane.b32.xlu0 %v546, 72
    %v2639 = vpop.permute.xlu0 %2638
    %2640 = vrot.lane.b32.xlu0 %v551, 72
    %v2641 = vpop.permute.xlu0 %2640
    %2642 = vrot.lane.b32.xlu0 %v556, 72
    %v2643 = vpop.permute.xlu0 %2642
    %2644 = vrot.lane.b32.xlu0 %v561, 72
    %v2645 = vpop.permute.xlu0 %2644
    %2646 = vrot.lane.b32.xlu0 %v566, 72
    %v2647 = vpop.permute.xlu0 %2646
    %v2648 = vsel %vm782, %v2585, 0
    %v2650 = vsel %vm782, %v2587, 0
    %v2652 = vsel %vm782, %v2589, 0
    %v2654 = vsel %vm782, %v2591, 0
    %v2656 = vsel %vm782, %v2593, 0
    %v2658 = vsel %vm782, %v2595, 0
    %v2660 = vsel %vm782, %v2597, 0
    %v2662 = vsel %vm782, %v2599, 0
    %v2664 = vsel %vm782, %v2601, 0
    %v2666 = vsel %vm782, %v2603, 0
    %v2668 = vsel %vm782, %v2605, 0
    %v2670 = vsel %vm782, %v2607, 0
    %v2672 = vsel %vm782, %v2609, 0
    %v2674 = vsel %vm782, %v2611, 0
    %v2676 = vsel %vm782, %v2613, 0
    %v2678 = vsel %vm782, %v2615, 0
    %v2680 = vsel %vm782, %v2617, 0
    %v2682 = vsel %vm782, %v2619, 0
    %v2684 = vsel %vm782, %v2621, 0
    %v2686 = vsel %vm782, %v2623, 0
    %v2688 = vsel %vm782, %v2625, 0
    %v2690 = vsel %vm782, %v2627, 0
    %v2692 = vsel %vm782, %v2629, 0
    %v2694 = vsel %vm782, %v2631, 0
    %v2696 = vsel %vm782, %v2633, 0
    %v2698 = vsel %vm782, %v2635, 0
    %v2700 = vsel %vm782, %v2637, 0
    %v2702 = vsel %vm782, %v2639, 0
    %v2704 = vsel %vm782, %v2641, 0
    %v2706 = vsel %vm782, %v2643, 0
    %v2708 = vsel %vm782, %v2645, 0
    %v2710 = vsel %vm782, %v2647, 0
    %2712 = vmatprep.subr.mxu0 0.0
    %2713 = vmatpush1.xpose.msra.mxu0 %v2710
    %2714 = vmatprep.subr.mxu0 0.0
    %2715 = vmatpush1.xpose.msra.mxu0 %v2708
    %2716 = vmatprep.subr.mxu0 0.0
    %2717 = vmatpush1.xpose.msra.mxu0 %v2706
    %2718 = vmatprep.subr.mxu0 0.0
    %2719 = vmatpush1.xpose.msra.mxu0 %v2704
    %2720 = vmatprep.subr.mxu0 0.0
    %2721 = vmatpush1.xpose.msra.mxu0 %v2702
    %2722 = vmatprep.subr.mxu0 0.0
    %2723 = vmatpush1.xpose.msra.mxu0 %v2700
    %2724 = vmatprep.subr.mxu0 0.0
    %2725 = vmatpush1.xpose.msra.mxu0 %v2698
    %2726 = vmatprep.subr.mxu0 0.0
    %2727 = vmatpush1.xpose.msra.mxu0 %v2696
    %2728 = vmatprep.subr.mxu0 0.0
    %2729 = vmatpush1.xpose.msra.mxu0 %v2694
    %2730 = vmatprep.subr.mxu0 0.0
    %2731 = vmatpush1.xpose.msra.mxu0 %v2692
    %2732 = vmatprep.subr.mxu0 0.0
    %2733 = vmatpush1.xpose.msra.mxu0 %v2690
    %2734 = vmatprep.subr.mxu0 0.0
    %2735 = vmatpush1.xpose.msra.mxu0 %v2688
    %2736 = vmatprep.subr.mxu0 0.0
    %2737 = vmatpush1.xpose.msra.mxu0 %v2686
    %2738 = vmatprep.subr.mxu0 0.0
    %2739 = vmatpush1.xpose.msra.mxu0 %v2684
    %2740 = vmatprep.subr.mxu0 0.0
    %2741 = vmatpush1.xpose.msra.mxu0 %v2682
    %2742 = vmatprep.subr.mxu0 0.0
    %2743 = vmatpush1.xpose.msra.mxu0 %v2680
    %2744 = vmatprep.subr.mxu0 0.0
    %2745 = vmatpush2.xpose.msra.mxu0 0.0
    %2746 = vmatprep.subr.mxu0 0.0
    %2747 = vmatpush2.xpose.msra.mxu0 0.0
    %2748 = vmatprep.subr.mxu0 0.0
    %2749 = vmatpush2.xpose.msra.mxu0 0.0
    %2750 = vmatprep.subr.mxu0 0.0
    %2751 = vmatpush2.xpose.msra.mxu0 0.0
    %2752 = vmatprep.subr.mxu0 0.0
    %2753 = vmatpush2.xpose.msra.mxu0 0.0
    %2754 = vmatprep.subr.mxu0 0.0
    %2755 = vmatpush2.xpose.msra.mxu0 0.0
    %2756 = vmatprep.subr.mxu0 0.0
    %2757 = vmatpush2.xpose.msra.mxu0 0.0
    %2758 = vmatprep.subr.mxu0 0.0
    %2759 = vmatpush2.xpose.msra.mxu0 0.0
    %2760 = vmatprep.subr.mxu0 0.0
    %2761 = vmatpush2.xpose.msra.mxu0 0.0
    %2762 = vmatprep.subr.mxu0 0.0
    %2763 = vmatpush2.xpose.msra.mxu0 0.0
    %2764 = vmatprep.subr.mxu0 0.0
    %2765 = vmatpush2.xpose.msra.mxu0 0.0
    %2766 = vmatprep.subr.mxu0 0.0
    %2767 = vmatpush2.xpose.msra.mxu0 0.0
    %2768 = vmatprep.subr.mxu0 0.0
    %2769 = vmatpush2.xpose.msra.mxu0 0.0
    %2770 = vmatprep.subr.mxu0 0.0
    %2771 = vmatpush2.xpose.msra.mxu0 0.0
    %2772 = vmatprep.subr.mxu0 0.0
    %2773 = vmatpush2.xpose.msra.mxu0 0.0
    %2774 = vmatprep.subr.mxu0 0.0
    %2775 = vmatpush2.xpose.msra.mxu0 0.0
    %2776 = vmatprep.mubr.f32.mxu0 0.0
    %2777 = vmatmul.mubr.f32.gmra.mxu0 %v2648
    %v2778 = vpop.f32.mrf.mxu0
    %v2779 = vadd.f32 %v2568, %v2778
    %v2780 = vpop.f32.mrf.mxu0
    %2781 = vmatprep.mubr.f32.mxu0 0.0
    %2782 = vmatmul.mubr.f32.gmra.mxu0 %v2650
    %v2783 = vpop.f32.mrf.mxu0
    %v2784 = vadd.f32 %v2569, %v2783
    %v2785 = vpop.f32.mrf.mxu0
    %2786 = vmatprep.mubr.f32.mxu0 0.0
    %2787 = vmatmul.mubr.f32.gmra.mxu0 %v2652
    %v2788 = vpop.f32.mrf.mxu0
    %v2789 = vadd.f32 %v2570, %v2788
    %v2790 = vpop.f32.mrf.mxu0
    %2791 = vmatprep.mubr.f32.mxu0 0.0
    %2792 = vmatmul.mubr.f32.gmra.mxu0 %v2654
    %v2793 = vpop.f32.mrf.mxu0
    %v2794 = vadd.f32 %v2571, %v2793
    %v2795 = vpop.f32.mrf.mxu0
    %2796 = vmatprep.mubr.f32.mxu0 0.0
    %2797 = vmatmul.mubr.f32.gmra.mxu0 %v2656
    %v2798 = vpop.f32.mrf.mxu0
    %v2799 = vadd.f32 %v2572, %v2798
    %v2800 = vpop.f32.mrf.mxu0
    %2801 = vmatprep.mubr.f32.mxu0 0.0
    %2802 = vmatmul.mubr.f32.gmra.mxu0 %v2658
    %v2803 = vpop.f32.mrf.mxu0
    %v2804 = vadd.f32 %v2573, %v2803
    %v2805 = vpop.f32.mrf.mxu0
    %2806 = vmatprep.mubr.f32.mxu0 0.0
    %2807 = vmatmul.mubr.f32.gmra.mxu0 %v2660
    %v2808 = vpop.f32.mrf.mxu0
    %v2809 = vadd.f32 %v2574, %v2808
    %v2810 = vpop.f32.mrf.mxu0
    %2811 = vmatprep.mubr.f32.mxu0 0.0
    %2812 = vmatmul.mubr.f32.gmra.mxu0 %v2662
    %v2813 = vpop.f32.mrf.mxu0
    %v2814 = vadd.f32 %v2575, %v2813
    %v2815 = vpop.f32.mrf.mxu0
    %2816 = vmatprep.mubr.f32.mxu0 0.0
    %2817 = vmatmul.mubr.f32.gmra.mxu0 %v2664
    %v2818 = vpop.f32.mrf.mxu0
    %v2819 = vadd.f32 %v2576, %v2818
    %v2820 = vpop.f32.mrf.mxu0
    %2821 = vmatprep.mubr.f32.mxu0 0.0
    %2822 = vmatmul.mubr.f32.gmra.mxu0 %v2666
    %v2823 = vpop.f32.mrf.mxu0
    %v2824 = vadd.f32 %v2577, %v2823
    %v2825 = vpop.f32.mrf.mxu0
    %2826 = vmatprep.mubr.f32.mxu0 0.0
    %2827 = vmatmul.mubr.f32.gmra.mxu0 %v2668
    %v2828 = vpop.f32.mrf.mxu0
    %v2829 = vadd.f32 %v2578, %v2828
    %v2830 = vpop.f32.mrf.mxu0
    %2831 = vmatprep.mubr.f32.mxu0 0.0
    %2832 = vmatmul.mubr.f32.gmra.mxu0 %v2670
    %v2833 = vpop.f32.mrf.mxu0
    %v2834 = vadd.f32 %v2579, %v2833
    %v2835 = vpop.f32.mrf.mxu0
    %2836 = vmatprep.mubr.f32.mxu0 0.0
    %2837 = vmatmul.mubr.f32.gmra.mxu0 %v2672
    %v2838 = vpop.f32.mrf.mxu0
    %v2839 = vadd.f32 %v2580, %v2838
    %v2840 = vpop.f32.mrf.mxu0
    %2841 = vmatprep.mubr.f32.mxu0 0.0
    %2842 = vmatmul.mubr.f32.gmra.mxu0 %v2674
    %v2843 = vpop.f32.mrf.mxu0
    %v2844 = vadd.f32 %v2581, %v2843
    %v2845 = vpop.f32.mrf.mxu0
    %2846 = vmatprep.mubr.f32.mxu0 0.0
    %2847 = vmatmul.mubr.f32.gmra.mxu0 %v2676
    %v2848 = vpop.f32.mrf.mxu0
    %v2849 = vadd.f32 %v2582, %v2848
    %v2850 = vpop.f32.mrf.mxu0
    %2851 = vmatprep.mubr.f32.mxu0 0.0
    %2852 = vmatmul.mubr.f32.gmra.mxu0 %v2678
    %v2853 = vpop.f32.mrf.mxu0
    %v2854 = vadd.f32 %v2583, %v2853
    %v2855 = vpop.f32.mrf.mxu0
    %2856 = vdwg.mxu0
    %2857 = vmax.xlane.f32.xlu0 %v2779
    %v2858 = vpop.xlane.xlu0 %2857
    %2859 = vmax.xlane.f32.xlu0 %v2784
    %v2860 = vpop.xlane.xlu0 %2859
    %2861 = vmax.xlane.f32.xlu0 %v2789
    %v2862 = vpop.xlane.xlu0 %2861
    %2863 = vmax.xlane.f32.xlu0 %v2794
    %v2864 = vpop.xlane.xlu0 %2863
    %2865 = vmax.xlane.f32.xlu0 %v2799
    %v2866 = vpop.xlane.xlu0 %2865
    %2867 = vmax.xlane.f32.xlu0 %v2804
    %v2868 = vpop.xlane.xlu0 %2867
    %2869 = vmax.xlane.f32.xlu0 %v2809
    %v2870 = vpop.xlane.xlu0 %2869
    %2871 = vmax.xlane.f32.xlu0 %v2814
    %v2872 = vpop.xlane.xlu0 %2871
    %2873 = vmax.xlane.f32.xlu0 %v2819
    %v2874 = vpop.xlane.xlu0 %2873
    %2875 = vmax.xlane.f32.xlu0 %v2824
    %v2876 = vpop.xlane.xlu0 %2875
    %2877 = vmax.xlane.f32.xlu0 %v2829
    %v2878 = vpop.xlane.xlu0 %2877
    %2879 = vmax.xlane.f32.xlu0 %v2834
    %v2880 = vpop.xlane.xlu0 %2879
    %2881 = vmax.xlane.f32.xlu0 %v2839
    %v2882 = vpop.xlane.xlu0 %2881
    %2883 = vmax.xlane.f32.xlu0 %v2844
    %v2884 = vpop.xlane.xlu0 %2883
    %2885 = vmax.xlane.f32.xlu0 %v2849
    %v2886 = vpop.xlane.xlu0 %2885
    %2887 = vmax.xlane.f32.xlu0 %v2854
    %v2888 = vpop.xlane.xlu0 %2887
    %v2889 = vsub.f32 %v2779, %v2858
    %v2890 = vsub.f32 %v2784, %v2860
    %v2891 = vsub.f32 %v2789, %v2862
    %v2892 = vsub.f32 %v2794, %v2864
    %v2893 = vsub.f32 %v2799, %v2866
    %v2894 = vsub.f32 %v2804, %v2868
    %v2895 = vsub.f32 %v2809, %v2870
    %v2896 = vsub.f32 %v2814, %v2872
    %v2897 = vsub.f32 %v2819, %v2874
    %v2898 = vsub.f32 %v2824, %v2876
    %v2899 = vsub.f32 %v2829, %v2878
    %v2900 = vsub.f32 %v2834, %v2880
    %v2901 = vsub.f32 %v2839, %v2882
    %v2902 = vsub.f32 %v2844, %v2884
    %v2903 = vsub.f32 %v2849, %v2886
    %v2904 = vsub.f32 %v2854, %v2888
    %v2905 = vmul.f32 %v2889, 1.442695
    %v2906 = vpow.pop %v2905
    %v2907 = vmul.f32 %v2890, 1.442695
    %v2908 = vpow.pop %v2907
    %v2909 = vmul.f32 %v2891, 1.442695
    %v2910 = vpow.pop %v2909
    %v2911 = vmul.f32 %v2892, 1.442695
    %v2912 = vpow.pop %v2911
    %v2913 = vmul.f32 %v2893, 1.442695
    %v2914 = vpow.pop %v2913
    %v2915 = vmul.f32 %v2894, 1.442695
    %v2916 = vpow.pop %v2915
    %v2917 = vmul.f32 %v2895, 1.442695
    %v2918 = vpow.pop %v2917
    %v2919 = vmul.f32 %v2896, 1.442695
    %v2920 = vpow.pop %v2919
    %v2921 = vmul.f32 %v2897, 1.442695
    %v2922 = vpow.pop %v2921
    %v2923 = vmul.f32 %v2898, 1.442695
    %v2924 = vpow.pop %v2923
    %v2925 = vmul.f32 %v2899, 1.442695
    %v2926 = vpow.pop %v2925
    %v2927 = vmul.f32 %v2900, 1.442695
    %v2928 = vpow.pop %v2927
    %v2929 = vmul.f32 %v2901, 1.442695
    %v2930 = vpow.pop %v2929
    %v2931 = vmul.f32 %v2902, 1.442695
    %v2932 = vpow.pop %v2931
    %v2933 = vmul.f32 %v2903, 1.442695
    %v2934 = vpow.pop %v2933
    %v2935 = vmul.f32 %v2904, 1.442695
    %v2936 = vpow.pop %v2935
    %2937 = vadd.xlane.f32.xlu0 %v2906
    %v2938 = vpop.xlane.xlu0 %2937
    %2939 = vadd.xlane.f32.xlu0 %v2908
    %v2940 = vpop.xlane.xlu0 %2939
    %2941 = vadd.xlane.f32.xlu0 %v2910
    %v2942 = vpop.xlane.xlu0 %2941
    %2943 = vadd.xlane.f32.xlu0 %v2912
    %v2944 = vpop.xlane.xlu0 %2943
    %2945 = vadd.xlane.f32.xlu0 %v2914
    %v2946 = vpop.xlane.xlu0 %2945
    %2947 = vadd.xlane.f32.xlu0 %v2916
    %v2948 = vpop.xlane.xlu0 %2947
    %2949 = vadd.xlane.f32.xlu0 %v2918
    %v2950 = vpop.xlane.xlu0 %2949
    %2951 = vadd.xlane.f32.xlu0 %v2920
    %v2952 = vpop.xlane.xlu0 %2951
    %2953 = vadd.xlane.f32.xlu0 %v2922
    %v2954 = vpop.xlane.xlu0 %2953
    %2955 = vadd.xlane.f32.xlu0 %v2924
    %v2956 = vpop.xlane.xlu0 %2955
    %2957 = vadd.xlane.f32.xlu0 %v2926
    %v2958 = vpop.xlane.xlu0 %2957
    %2959 = vadd.xlane.f32.xlu0 %v2928
    %v2960 = vpop.xlane.xlu0 %2959
    %2961 = vadd.xlane.f32.xlu0 %v2930
    %v2962 = vpop.xlane.xlu0 %2961
    %2963 = vadd.xlane.f32.xlu0 %v2932
    %v2964 = vpop.xlane.xlu0 %2963
    %2965 = vadd.xlane.f32.xlu0 %v2934
    %v2966 = vpop.xlane.xlu0 %2965
    %2967 = vadd.xlane.f32.xlu0 %v2936
    %v2968 = vpop.xlane.xlu0 %2967
    %v2969 = vrcp.pop %v2938
    %v2970 = vrcp.pop %v2940
    %v2971 = vrcp.pop %v2942
    %v2972 = vrcp.pop %v2944
    %v2973 = vrcp.pop %v2946
    %v2974 = vrcp.pop %v2948
    %v2975 = vrcp.pop %v2950
    %v2976 = vrcp.pop %v2952
    %v2977 = vrcp.pop %v2954
    %v2978 = vrcp.pop %v2956
    %v2979 = vrcp.pop %v2958
    %v2980 = vrcp.pop %v2960
    %v2981 = vrcp.pop %v2962
    %v2982 = vrcp.pop %v2964
    %v2983 = vrcp.pop %v2966
    %v2984 = vrcp.pop %v2968
    %v2985 = vmul.f32 %v2906, %v2969
    %v2986 = vmul.f32 %v2908, %v2970
    %v2987 = vmul.f32 %v2910, %v2971
    %v2988 = vmul.f32 %v2912, %v2972
    %v2989 = vmul.f32 %v2914, %v2973
    %v2990 = vmul.f32 %v2916, %v2974
    %v2991 = vmul.f32 %v2918, %v2975
    %v2992 = vmul.f32 %v2920, %v2976
    %v2993 = vmul.f32 %v2922, %v2977
    %v2994 = vmul.f32 %v2924, %v2978
    %v2995 = vmul.f32 %v2926, %v2979
    %v2996 = vmul.f32 %v2928, %v2980
    %v2997 = vmul.f32 %v2930, %v2981
    %v2998 = vmul.f32 %v2932, %v2982
    %v2999 = vmul.f32 %v2934, %v2983
    %v3000 = vmul.f32 %v2936, %v2984
    %3001 = vrot.lane.b32.xlu0 %v640, 32
    %v3002 = vpop.permute.xlu0 %3001
    %3003 = vrot.lane.b32.xlu0 %v645, 32
    %v3004 = vpop.permute.xlu0 %3003
    %3005 = vrot.lane.b32.xlu0 %v650, 32
    %v3006 = vpop.permute.xlu0 %3005
    %3007 = vrot.lane.b32.xlu0 %v655, 32
    %v3008 = vpop.permute.xlu0 %3007
    %3009 = vrot.lane.b32.xlu0 %v660, 32
    %v3010 = vpop.permute.xlu0 %3009
    %3011 = vrot.lane.b32.xlu0 %v665, 32
    %v3012 = vpop.permute.xlu0 %3011
    %3013 = vrot.lane.b32.xlu0 %v670, 32
    %v3014 = vpop.permute.xlu0 %3013
    %3015 = vrot.lane.b32.xlu0 %v675, 32
    %v3016 = vpop.permute.xlu0 %3015
    %3017 = vrot.lane.b32.xlu0 %v680, 32
    %v3018 = vpop.permute.xlu0 %3017
    %3019 = vrot.lane.b32.xlu0 %v685, 32
    %v3020 = vpop.permute.xlu0 %3019
    %3021 = vrot.lane.b32.xlu0 %v690, 32
    %v3022 = vpop.permute.xlu0 %3021
    %3023 = vrot.lane.b32.xlu0 %v695, 32
    %v3024 = vpop.permute.xlu0 %3023
    %3025 = vrot.lane.b32.xlu0 %v700, 32
    %v3026 = vpop.permute.xlu0 %3025
    %3027 = vrot.lane.b32.xlu0 %v705, 32
    %v3028 = vpop.permute.xlu0 %3027
    %3029 = vrot.lane.b32.xlu0 %v710, 32
    %v3030 = vpop.permute.xlu0 %3029
    %3031 = vrot.lane.b32.xlu0 %v715, 32
    %v3032 = vpop.permute.xlu0 %3031
    %3049 = vmatprep.subr.mxu0 0.0
    %3050 = vmatpush1.msra.mxu0 %v3032
    %3051 = vmatprep.subr.mxu0 0.0
    %3052 = vmatpush1.msra.mxu0 %v3030
    %3053 = vmatprep.subr.mxu0 0.0
    %3054 = vmatpush1.msra.mxu0 %v3028
    %3055 = vmatprep.subr.mxu0 0.0
    %3056 = vmatpush1.msra.mxu0 %v3026
    %3057 = vmatprep.subr.mxu0 0.0
    %3058 = vmatpush1.msra.mxu0 %v3024
    %3059 = vmatprep.subr.mxu0 0.0
    %3060 = vmatpush1.msra.mxu0 %v3022
    %3061 = vmatprep.subr.mxu0 0.0
    %3062 = vmatpush1.msra.mxu0 %v3020
    %3063 = vmatprep.subr.mxu0 0.0
    %3064 = vmatpush1.msra.mxu0 %v3018
    %3065 = vmatprep.subr.mxu0 0.0
    %3066 = vmatpush1.msra.mxu0 %v3016
    %3067 = vmatprep.subr.mxu0 0.0
    %3068 = vmatpush1.msra.mxu0 %v3014
    %3069 = vmatprep.subr.mxu0 0.0
    %3070 = vmatpush1.msra.mxu0 %v3012
    %3071 = vmatprep.subr.mxu0 0.0
    %3072 = vmatpush1.msra.mxu0 %v3010
    %3073 = vmatprep.subr.mxu0 0.0
    %3074 = vmatpush1.msra.mxu0 %v3008
    %3075 = vmatprep.subr.mxu0 0.0
    %3076 = vmatpush1.msra.mxu0 %v3006
    %3077 = vmatprep.subr.mxu0 0.0
    %3078 = vmatpush1.msra.mxu0 %v3004
    %3079 = vmatprep.subr.mxu0 0.0
    %3080 = vmatpush1.msra.mxu0 %v3002
    %3081 = vmatprep.subr.mxu0 0.0
    %3082 = vmatpush2.msra.mxu0 0.0
    %3083 = vmatprep.subr.mxu0 0.0
    %3084 = vmatpush2.msra.mxu0 0.0
    %3085 = vmatprep.subr.mxu0 0.0
    %3086 = vmatpush2.msra.mxu0 0.0
    %3087 = vmatprep.subr.mxu0 0.0
    %3088 = vmatpush2.msra.mxu0 0.0
    %3089 = vmatprep.subr.mxu0 0.0
    %3090 = vmatpush2.msra.mxu0 0.0
    %3091 = vmatprep.subr.mxu0 0.0
    %3092 = vmatpush2.msra.mxu0 0.0
    %3093 = vmatprep.subr.mxu0 0.0
    %3094 = vmatpush2.msra.mxu0 0.0
    %3095 = vmatprep.subr.mxu0 0.0
    %3096 = vmatpush2.msra.mxu0 0.0
    %3097 = vmatprep.subr.mxu0 0.0
    %3098 = vmatpush2.msra.mxu0 0.0
    %3099 = vmatprep.subr.mxu0 0.0
    %3100 = vmatpush2.msra.mxu0 0.0
    %3101 = vmatprep.subr.mxu0 0.0
    %3102 = vmatpush2.msra.mxu0 0.0
    %3103 = vmatprep.subr.mxu0 0.0
    %3104 = vmatpush2.msra.mxu0 0.0
    %3105 = vmatprep.subr.mxu0 0.0
    %3106 = vmatpush2.msra.mxu0 0.0
    %3107 = vmatprep.subr.mxu0 0.0
    %3108 = vmatpush2.msra.mxu0 0.0
    %3109 = vmatprep.subr.mxu0 0.0
    %3110 = vmatpush2.msra.mxu0 0.0
    %3111 = vmatprep.subr.mxu0 0.0
    %3112 = vmatpush2.msra.mxu0 0.0
    %3113 = vmatprep.mubr.f32.mxu0 0.0
    %3114 = vmatmul.mubr.f32.gmra.mxu0 %v2985
    %v3115 = vpop.f32.mrf.mxu0
    %v3116 = vadd.f32 0.0, %v3115
    %v3117 = vpop.f32.mrf.mxu0
    %3118 = vmatprep.mubr.f32.mxu0 0.0
    %3119 = vmatmul.mubr.f32.gmra.mxu0 %v2986
    %v3120 = vpop.f32.mrf.mxu0
    %v3121 = vadd.f32 0.0, %v3120
    %v3122 = vpop.f32.mrf.mxu0
    %3123 = vmatprep.mubr.f32.mxu0 0.0
    %3124 = vmatmul.mubr.f32.gmra.mxu0 %v2987
    %v3125 = vpop.f32.mrf.mxu0
    %v3126 = vadd.f32 0.0, %v3125
    %v3127 = vpop.f32.mrf.mxu0
    %3128 = vmatprep.mubr.f32.mxu0 0.0
    %3129 = vmatmul.mubr.f32.gmra.mxu0 %v2988
    %v3130 = vpop.f32.mrf.mxu0
    %v3131 = vadd.f32 0.0, %v3130
    %v3132 = vpop.f32.mrf.mxu0
    %3133 = vmatprep.mubr.f32.mxu0 0.0
    %3134 = vmatmul.mubr.f32.gmra.mxu0 %v2989
    %v3135 = vpop.f32.mrf.mxu0
    %v3136 = vadd.f32 0.0, %v3135
    %v3137 = vpop.f32.mrf.mxu0
    %3138 = vmatprep.mubr.f32.mxu0 0.0
    %3139 = vmatmul.mubr.f32.gmra.mxu0 %v2990
    %v3140 = vpop.f32.mrf.mxu0
    %v3141 = vadd.f32 0.0, %v3140
    %v3142 = vpop.f32.mrf.mxu0
    %3143 = vmatprep.mubr.f32.mxu0 0.0
    %3144 = vmatmul.mubr.f32.gmra.mxu0 %v2991
    %v3145 = vpop.f32.mrf.mxu0
    %v3146 = vadd.f32 0.0, %v3145
    %v3147 = vpop.f32.mrf.mxu0
    %3148 = vmatprep.mubr.f32.mxu0 0.0
    %3149 = vmatmul.mubr.f32.gmra.mxu0 %v2992
    %v3150 = vpop.f32.mrf.mxu0
    %v3151 = vadd.f32 0.0, %v3150
    %v3152 = vpop.f32.mrf.mxu0
    %3153 = vmatprep.mubr.f32.mxu0 0.0
    %3154 = vmatmul.mubr.f32.gmra.mxu0 %v2993
    %v3155 = vpop.f32.mrf.mxu0
    %v3156 = vadd.f32 0.0, %v3155
    %v3157 = vpop.f32.mrf.mxu0
    %3158 = vmatprep.mubr.f32.mxu0 0.0
    %3159 = vmatmul.mubr.f32.gmra.mxu0 %v2994
    %v3160 = vpop.f32.mrf.mxu0
    %v3161 = vadd.f32 0.0, %v3160
    %v3162 = vpop.f32.mrf.mxu0
    %3163 = vmatprep.mubr.f32.mxu0 0.0
    %3164 = vmatmul.mubr.f32.gmra.mxu0 %v2995
    %v3165 = vpop.f32.mrf.mxu0
    %v3166 = vadd.f32 0.0, %v3165
    %v3167 = vpop.f32.mrf.mxu0
    %3168 = vmatprep.mubr.f32.mxu0 0.0
    %3169 = vmatmul.mubr.f32.gmra.mxu0 %v2996
    %v3170 = vpop.f32.mrf.mxu0
    %v3171 = vadd.f32 0.0, %v3170
    %v3172 = vpop.f32.mrf.mxu0
    %3173 = vmatprep.mubr.f32.mxu0 0.0
    %3174 = vmatmul.mubr.f32.gmra.mxu0 %v2997
    %v3175 = vpop.f32.mrf.mxu0
    %v3176 = vadd.f32 0.0, %v3175
    %v3177 = vpop.f32.mrf.mxu0
    %3178 = vmatprep.mubr.f32.mxu0 0.0
    %3179 = vmatmul.mubr.f32.gmra.mxu0 %v2998
    %v3180 = vpop.f32.mrf.mxu0
    %v3181 = vadd.f32 0.0, %v3180
    %v3182 = vpop.f32.mrf.mxu0
    %3183 = vmatprep.mubr.f32.mxu0 0.0
    %3184 = vmatmul.mubr.f32.gmra.mxu0 %v2999
    %v3185 = vpop.f32.mrf.mxu0
    %v3186 = vadd.f32 0.0, %v3185
    %v3187 = vpop.f32.mrf.mxu0
    %3188 = vmatprep.mubr.f32.mxu0 0.0
    %3189 = vmatmul.mubr.f32.gmra.mxu0 %v3000
    %v3190 = vpop.f32.mrf.mxu0
    %v3191 = vadd.f32 0.0, %v3190
    %v3192 = vpop.f32.mrf.mxu0
    %3193 = vdwg.mxu0
    %v3194 = vadd.f32 %v2551, %v3116
    %v3195 = vadd.f32 %v2552, %v3121
    %v3196 = vadd.f32 %v2553, %v3126
    %v3197 = vadd.f32 %v2554, %v3131
    %v3198 = vadd.f32 %v2555, %v3136
    %v3199 = vadd.f32 %v2556, %v3141
    %v3200 = vadd.f32 %v2557, %v3146
    %v3201 = vadd.f32 %v2558, %v3151
    %v3202 = vadd.f32 %v2559, %v3156
    %v3203 = vadd.f32 %v2560, %v3161
    %v3204 = vadd.f32 %v2561, %v3166
    %v3205 = vadd.f32 %v2562, %v3171
    %v3206 = vadd.f32 %v2563, %v3176
    %v3207 = vadd.f32 %v2564, %v3181
    %v3208 = vadd.f32 %v2565, %v3186
    %v3209 = vadd.f32 %v2566, %v3191
    %v3210 = vadd.f32 %v61, %v3194
    %v3211 = vadd.f32 %v62, %v3195
    %v3212 = vadd.f32 %v63, %v3196
    %v3213 = vadd.f32 %v64, %v3197
    %v3214 = vadd.f32 %v65, %v3198
    %v3215 = vadd.f32 %v66, %v3199
    %v3216 = vadd.f32 %v67, %v3200
    %v3217 = vadd.f32 %v68, %v3201
    %v3218 = vadd.f32 %v69, %v3202
    %v3219 = vadd.f32 %v70, %v3203
    %v3220 = vadd.f32 %v71, %v3204
    %v3221 = vadd.f32 %v72, %v3205
    %v3222 = vadd.f32 %v73, %v3206
    %v3223 = vadd.f32 %v74, %v3207
    %v3224 = vadd.f32 %v75, %v3208
    %v3225 = vadd.f32 %v76, %v3209
    %v3226 = vld [vmem:[%s7] sm:$0x1]
    %v3228 = vlaneseq
    %v3229 = vshrl.u32 %v3228, 7
    %v3230 = vsub.s32 0, %v3229
    %v3231 = vrot.slane %v3226, %v3230
    %v3233 = vadd.f32 %v3210, %v3231
    %v3234 = vadd.f32 %v3211, %v3231
    %v3235 = vadd.f32 %v3212, %v3231
    %v3236 = vadd.f32 %v3213, %v3231
    %v3237 = vadd.f32 %v3214, %v3231
    %v3238 = vadd.f32 %v3215, %v3231
    %v3239 = vadd.f32 %v3216, %v3231
    %v3240 = vadd.f32 %v3217, %v3231
    %v3241 = vadd.f32 %v3218, %v3231
    %v3242 = vadd.f32 %v3219, %v3231
    %v3243 = vadd.f32 %v3220, %v3231
    %v3244 = vadd.f32 %v3221, %v3231
    %v3245 = vadd.f32 %v3222, %v3231
    %v3246 = vadd.f32 %v3223, %v3231
    %v3247 = vadd.f32 %v3224, %v3231
    %v3248 = vadd.f32 %v3225, %v3231
    %v3249 = vsel %vm77, %v3233, 0.0
    %3250 = vadd.xlane.f32.xlu0 %v3249
    %v3251 = vpop.xlane.xlu0 %3250
    %v3252 = vsel %vm77, %v3234, 0.0
    %3253 = vadd.xlane.f32.xlu0 %v3252
    %v3254 = vpop.xlane.xlu0 %3253
    %v3255 = vsel %vm77, %v3235, 0.0
    %3256 = vadd.xlane.f32.xlu0 %v3255
    %v3257 = vpop.xlane.xlu0 %3256
    %v3258 = vsel %vm77, %v3236, 0.0
    %3259 = vadd.xlane.f32.xlu0 %v3258
    %v3260 = vpop.xlane.xlu0 %3259
    %v3261 = vsel %vm77, %v3237, 0.0
    %3262 = vadd.xlane.f32.xlu0 %v3261
    %v3263 = vpop.xlane.xlu0 %3262
    %v3264 = vsel %vm77, %v3238, 0.0
    %3265 = vadd.xlane.f32.xlu0 %v3264
    %v3266 = vpop.xlane.xlu0 %3265
    %v3267 = vsel %vm77, %v3239, 0.0
    %3268 = vadd.xlane.f32.xlu0 %v3267
    %v3269 = vpop.xlane.xlu0 %3268
    %v3270 = vsel %vm77, %v3240, 0.0
    %3271 = vadd.xlane.f32.xlu0 %v3270
    %v3272 = vpop.xlane.xlu0 %3271
    %v3273 = vsel %vm77, %v3241, 0.0
    %3274 = vadd.xlane.f32.xlu0 %v3273
    %v3275 = vpop.xlane.xlu0 %3274
    %v3276 = vsel %vm77, %v3242, 0.0
    %3277 = vadd.xlane.f32.xlu0 %v3276
    %v3278 = vpop.xlane.xlu0 %3277
    %v3279 = vsel %vm77, %v3243, 0.0
    %3280 = vadd.xlane.f32.xlu0 %v3279
    %v3281 = vpop.xlane.xlu0 %3280
    %v3282 = vsel %vm77, %v3244, 0.0
    %3283 = vadd.xlane.f32.xlu0 %v3282
    %v3284 = vpop.xlane.xlu0 %3283
    %v3285 = vsel %vm77, %v3245, 0.0
    %3286 = vadd.xlane.f32.xlu0 %v3285
    %v3287 = vpop.xlane.xlu0 %3286
    %v3288 = vsel %vm77, %v3246, 0.0
    %3289 = vadd.xlane.f32.xlu0 %v3288
    %v3290 = vpop.xlane.xlu0 %3289
    %v3291 = vsel %vm77, %v3247, 0.0
    %3292 = vadd.xlane.f32.xlu0 %v3291
    %v3293 = vpop.xlane.xlu0 %3292
    %v3294 = vsel %vm77, %v3248, 0.0
    %3295 = vadd.xlane.f32.xlu0 %v3294
    %v3296 = vpop.xlane.xlu0 %3295
    %v3297 = vmul.f32 %v3251, %v126
    %v3298 = vmul.f32 %v3254, %v126
    %v3299 = vmul.f32 %v3257, %v126
    %v3300 = vmul.f32 %v3260, %v126
    %v3301 = vmul.f32 %v3263, %v126
    %v3302 = vmul.f32 %v3266, %v126
    %v3303 = vmul.f32 %v3269, %v126
    %v3304 = vmul.f32 %v3272, %v126
    %v3305 = vmul.f32 %v3275, %v126
    %v3306 = vmul.f32 %v3278, %v126
    %v3307 = vmul.f32 %v3281, %v126
    %v3308 = vmul.f32 %v3284, %v126
    %v3309 = vmul.f32 %v3287, %v126
    %v3310 = vmul.f32 %v3290, %v126
    %v3311 = vmul.f32 %v3293, %v126
    %v3312 = vmul.f32 %v3296, %v126
    %v3313 = vmul.f32 %v3233, %v3233
    %v3314 = vmul.f32 %v3234, %v3234
    %v3315 = vmul.f32 %v3235, %v3235
    %v3316 = vmul.f32 %v3236, %v3236
    %v3317 = vmul.f32 %v3237, %v3237
    %v3318 = vmul.f32 %v3238, %v3238
    %v3319 = vmul.f32 %v3239, %v3239
    %v3320 = vmul.f32 %v3240, %v3240
    %v3321 = vmul.f32 %v3241, %v3241
    %v3322 = vmul.f32 %v3242, %v3242
    %v3323 = vmul.f32 %v3243, %v3243
    %v3324 = vmul.f32 %v3244, %v3244
    %v3325 = vmul.f32 %v3245, %v3245
    %v3326 = vmul.f32 %v3246, %v3246
    %v3327 = vmul.f32 %v3247, %v3247
    %v3328 = vmul.f32 %v3248, %v3248
    %v3329 = vsel %vm77, %v3313, 0.0
    %3330 = vadd.xlane.f32.xlu0 %v3329
    %v3331 = vpop.xlane.xlu0 %3330
    %v3332 = vsel %vm77, %v3314, 0.0
    %3333 = vadd.xlane.f32.xlu0 %v3332
    %v3334 = vpop.xlane.xlu0 %3333
    %v3335 = vsel %vm77, %v3315, 0.0
    %3336 = vadd.xlane.f32.xlu0 %v3335
    %v3337 = vpop.xlane.xlu0 %3336
    %v3338 = vsel %vm77, %v3316, 0.0
    %3339 = vadd.xlane.f32.xlu0 %v3338
    %v3340 = vpop.xlane.xlu0 %3339
    %v3341 = vsel %vm77, %v3317, 0.0
    %3342 = vadd.xlane.f32.xlu0 %v3341
    %v3343 = vpop.xlane.xlu0 %3342
    %v3344 = vsel %vm77, %v3318, 0.0
    %3345 = vadd.xlane.f32.xlu0 %v3344
    %v3346 = vpop.xlane.xlu0 %3345
    %v3347 = vsel %vm77, %v3319, 0.0
    %3348 = vadd.xlane.f32.xlu0 %v3347
    %v3349 = vpop.xlane.xlu0 %3348
    %v3350 = vsel %vm77, %v3320, 0.0
    %3351 = vadd.xlane.f32.xlu0 %v3350
    %v3352 = vpop.xlane.xlu0 %3351
    %v3353 = vsel %vm77, %v3321, 0.0
    %3354 = vadd.xlane.f32.xlu0 %v3353
    %v3355 = vpop.xlane.xlu0 %3354
    %v3356 = vsel %vm77, %v3322, 0.0
    %3357 = vadd.xlane.f32.xlu0 %v3356
    %v3358 = vpop.xlane.xlu0 %3357
    %v3359 = vsel %vm77, %v3323, 0.0
    %3360 = vadd.xlane.f32.xlu0 %v3359
    %v3361 = vpop.xlane.xlu0 %3360
    %v3362 = vsel %vm77, %v3324, 0.0
    %3363 = vadd.xlane.f32.xlu0 %v3362
    %v3364 = vpop.xlane.xlu0 %3363
    %v3365 = vsel %vm77, %v3325, 0.0
    %3366 = vadd.xlane.f32.xlu0 %v3365
    %v3367 = vpop.xlane.xlu0 %3366
    %v3368 = vsel %vm77, %v3326, 0.0
    %3369 = vadd.xlane.f32.xlu0 %v3368
    %v3370 = vpop.xlane.xlu0 %3369
    %v3371 = vsel %vm77, %v3327, 0.0
    %3372 = vadd.xlane.f32.xlu0 %v3371
    %v3373 = vpop.xlane.xlu0 %3372
    %v3374 = vsel %vm77, %v3328, 0.0
    %3375 = vadd.xlane.f32.xlu0 %v3374
    %v3376 = vpop.xlane.xlu0 %3375
    %v3377 = vmul.f32 %v3331, %v126
    %v3378 = vmul.f32 %v3334, %v126
    %v3379 = vmul.f32 %v3337, %v126
    %v3380 = vmul.f32 %v3340, %v126
    %v3381 = vmul.f32 %v3343, %v126
    %v3382 = vmul.f32 %v3346, %v126
    %v3383 = vmul.f32 %v3349, %v126
    %v3384 = vmul.f32 %v3352, %v126
    %v3385 = vmul.f32 %v3355, %v126
    %v3386 = vmul.f32 %v3358, %v126
    %v3387 = vmul.f32 %v3361, %v126
    %v3388 = vmul.f32 %v3364, %v126
    %v3389 = vmul.f32 %v3367, %v126
    %v3390 = vmul.f32 %v3370, %v126
    %v3391 = vmul.f32 %v3373, %v126
    %v3392 = vmul.f32 %v3376, %v126
    %v3393 = vsub.f32 %v3233, %v3297
    %v3394 = vsub.f32 %v3234, %v3298
    %v3395 = vsub.f32 %v3235, %v3299
    %v3396 = vsub.f32 %v3236, %v3300
    %v3397 = vsub.f32 %v3237, %v3301
    %v3398 = vsub.f32 %v3238, %v3302
    %v3399 = vsub.f32 %v3239, %v3303
    %v3400 = vsub.f32 %v3240, %v3304
    %v3401 = vsub.f32 %v3241, %v3305
    %v3402 = vsub.f32 %v3242, %v3306
    %v3403 = vsub.f32 %v3243, %v3307
    %v3404 = vsub.f32 %v3244, %v3308
    %v3405 = vsub.f32 %v3245, %v3309
    %v3406 = vsub.f32 %v3246, %v3310
    %v3407 = vsub.f32 %v3247, %v3311
    %v3408 = vsub.f32 %v3248, %v3312
    %v3409 = vmul.f32 %v3297, %v3297
    %v3410 = vmul.f32 %v3298, %v3298
    %v3411 = vmul.f32 %v3299, %v3299
    %v3412 = vmul.f32 %v3300, %v3300
    %v3413 = vmul.f32 %v3301, %v3301
    %v3414 = vmul.f32 %v3302, %v3302
    %v3415 = vmul.f32 %v3303, %v3303
    %v3416 = vmul.f32 %v3304, %v3304
    %v3417 = vmul.f32 %v3305, %v3305
    %v3418 = vmul.f32 %v3306, %v3306
    %v3419 = vmul.f32 %v3307, %v3307
    %v3420 = vmul.f32 %v3308, %v3308
    %v3421 = vmul.f32 %v3309, %v3309
    %v3422 = vmul.f32 %v3310, %v3310
    %v3423 = vmul.f32 %v3311, %v3311
    %v3424 = vmul.f32 %v3312, %v3312
    %v3425 = vsub.f32 %v3377, %v3409
    %v3426 = vsub.f32 %v3378, %v3410
    %v3427 = vsub.f32 %v3379, %v3411
    %v3428 = vsub.f32 %v3380, %v3412
    %v3429 = vsub.f32 %v3381, %v3413
    %v3430 = vsub.f32 %v3382, %v3414
    %v3431 = vsub.f32 %v3383, %v3415
    %v3432 = vsub.f32 %v3384, %v3416
    %v3433 = vsub.f32 %v3385, %v3417
    %v3434 = vsub.f32 %v3386, %v3418
    %v3435 = vsub.f32 %v3387, %v3419
    %v3436 = vsub.f32 %v3388, %v3420
    %v3437 = vsub.f32 %v3389, %v3421
    %v3438 = vsub.f32 %v3390, %v3422
    %v3439 = vsub.f32 %v3391, %v3423
    %v3440 = vsub.f32 %v3392, %v3424
    %v3441 = vadd.f32 %v3425, 1e-05
    %v3442 = vadd.f32 %v3426, 1e-05
    %v3443 = vadd.f32 %v3427, 1e-05
    %v3444 = vadd.f32 %v3428, 1e-05
    %v3445 = vadd.f32 %v3429, 1e-05
    %v3446 = vadd.f32 %v3430, 1e-05
    %v3447 = vadd.f32 %v3431, 1e-05
    %v3448 = vadd.f32 %v3432, 1e-05
    %v3449 = vadd.f32 %v3433, 1e-05
    %v3450 = vadd.f32 %v3434, 1e-05
    %v3451 = vadd.f32 %v3435, 1e-05
    %v3452 = vadd.f32 %v3436, 1e-05
    %v3453 = vadd.f32 %v3437, 1e-05
    %v3454 = vadd.f32 %v3438, 1e-05
    %v3455 = vadd.f32 %v3439, 1e-05
    %v3456 = vadd.f32 %v3440, 1e-05
    %v3457 = vrsqrt.pop %v3441
    %v3458 = vrsqrt.pop %v3442
    %v3459 = vrsqrt.pop %v3443
    %v3460 = vrsqrt.pop %v3444
    %v3461 = vrsqrt.pop %v3445
    %v3462 = vrsqrt.pop %v3446
    %v3463 = vrsqrt.pop %v3447
    %v3464 = vrsqrt.pop %v3448
    %v3465 = vrsqrt.pop %v3449
    %v3466 = vrsqrt.pop %v3450
    %v3467 = vrsqrt.pop %v3451
    %v3468 = vrsqrt.pop %v3452
    %v3469 = vrsqrt.pop %v3453
    %v3470 = vrsqrt.pop %v3454
    %v3471 = vrsqrt.pop %v3455
    %v3472 = vrsqrt.pop %v3456
    %v3473 = vmul.f32 %v3393, %v3457
    %v3474 = vmul.f32 %v3394, %v3458
    %v3475 = vmul.f32 %v3395, %v3459
    %v3476 = vmul.f32 %v3396, %v3460
    %v3477 = vmul.f32 %v3397, %v3461
    %v3478 = vmul.f32 %v3398, %v3462
    %v3479 = vmul.f32 %v3399, %v3463
    %v3480 = vmul.f32 %v3400, %v3464
    %v3481 = vmul.f32 %v3401, %v3465
    %v3482 = vmul.f32 %v3402, %v3466
    %v3483 = vmul.f32 %v3403, %v3467
    %v3484 = vmul.f32 %v3404, %v3468
    %v3485 = vmul.f32 %v3405, %v3469
    %v3486 = vmul.f32 %v3406, %v3470
    %v3487 = vmul.f32 %v3407, %v3471
    %v3488 = vmul.f32 %v3408, %v3472
    %v3489 = vld [vmem:[%s8] sm:$0x1]
    %v3491 = vlaneseq
    %v3492 = vshrl.u32 %v3491, 7
    %v3493 = vsub.s32 0, %v3492
    %v3494 = vrot.slane %v3489, %v3493
    %v3496 = vmul.f32 %v3473, %v3494
    %v3497 = vmul.f32 %v3474, %v3494
    %v3498 = vmul.f32 %v3475, %v3494
    %v3499 = vmul.f32 %v3476, %v3494
    %v3500 = vmul.f32 %v3477, %v3494
    %v3501 = vmul.f32 %v3478, %v3494
    %v3502 = vmul.f32 %v3479, %v3494
    %v3503 = vmul.f32 %v3480, %v3494
    %v3504 = vmul.f32 %v3481, %v3494
    %v3505 = vmul.f32 %v3482, %v3494
    %v3506 = vmul.f32 %v3483, %v3494
    %v3507 = vmul.f32 %v3484, %v3494
    %v3508 = vmul.f32 %v3485, %v3494
    %v3509 = vmul.f32 %v3486, %v3494
    %v3510 = vmul.f32 %v3487, %v3494
    %v3511 = vmul.f32 %v3488, %v3494
    %v3512 = vld [vmem:[%s9] sm:$0x1]
    %v3514 = vlaneseq
    %v3515 = vshrl.u32 %v3514, 7
    %v3516 = vsub.s32 0, %v3515
    %v3517 = vrot.slane %v3512, %v3516
    %v3519 = vadd.f32 %v3496, %v3517
    %v3520 = vadd.f32 %v3497, %v3517
    %v3521 = vadd.f32 %v3498, %v3517
    %v3522 = vadd.f32 %v3499, %v3517
    %v3523 = vadd.f32 %v3500, %v3517
    %v3524 = vadd.f32 %v3501, %v3517
    %v3525 = vadd.f32 %v3502, %v3517
    %v3526 = vadd.f32 %v3503, %v3517
    %v3527 = vadd.f32 %v3504, %v3517
    %v3528 = vadd.f32 %v3505, %v3517
    %v3529 = vadd.f32 %v3506, %v3517
    %v3530 = vadd.f32 %v3507, %v3517
    %v3531 = vadd.f32 %v3508, %v3517
    %v3532 = vadd.f32 %v3509, %v3517
    %v3533 = vadd.f32 %v3510, %v3517
    %v3534 = vadd.f32 %v3511, %v3517
    %v3535 = vld [vmem:[%s10] sm:$0xff]
    %v3536 = vld [vmem:[%s10 + $0x8] sm:$0xff]
    %v3537 = vld [vmem:[%s10 + $0x10] sm:$0xff]
    %v3538 = vld [vmem:[%s10 + $0x18] sm:$0xff]
    %v3539 = vld [vmem:[%s11] sm:$0x1]
    %v3541 = vlaneseq
    %v3542 = vshrl.u32 %v3541, 7
    %v3543 = vsub.s32 0, %v3542
    %v3544 = vrot.slane %v3539, %v3543
    %v3547 = vsel %vm77, %v3519, 0
    %v3550 = vsel %vm77, %v3520, 0
    %v3553 = vsel %vm77, %v3521, 0
    %v3556 = vsel %vm77, %v3522, 0
    %v3559 = vsel %vm77, %v3523, 0
    %v3562 = vsel %vm77, %v3524, 0
    %v3565 = vsel %vm77, %v3525, 0
    %v3568 = vsel %vm77, %v3526, 0
    %v3571 = vsel %vm77, %v3527, 0
    %v3574 = vsel %vm77, %v3528, 0
    %v3577 = vsel %vm77, %v3529, 0
    %v3580 = vsel %vm77, %v3530, 0
    %v3583 = vsel %vm77, %v3531, 0
    %v3586 = vsel %vm77, %v3532, 0
    %v3589 = vsel %vm77, %v3533, 0
    %v3592 = vsel %vm77, %v3534, 0
    %3594 = vmatprep.subr.mxu0 0.0
    %3595 = vmatpush1.msra.mxu0 0.0
    %3596 = vmatprep.subr.mxu0 0.0
    %3597 = vmatpush1.msra.mxu0 0.0
    %3598 = vmatprep.subr.mxu0 0.0
    %3599 = vmatpush1.msra.mxu0 0.0
    %3600 = vmatprep.subr.mxu0 0.0
    %3601 = vmatpush1.msra.mxu0 0.0
    %3602 = vmatprep.subr.mxu0 0.0
    %3603 = vmatpush1.msra.mxu0 0.0
    %3604 = vmatprep.subr.mxu0 0.0
    %3605 = vmatpush1.msra.mxu0 0.0
    %3606 = vmatprep.subr.mxu0 0.0
    %3607 = vmatpush1.msra.mxu0 0.0
    %3608 = vmatprep.subr.mxu0 0.0
    %3609 = vmatpush1.msra.mxu0 0.0
    %3610 = vmatprep.subr.mxu0 0.0
    %3611 = vmatpush1.msra.mxu0 0.0
    %3612 = vmatprep.subr.mxu0 0.0
    %3613 = vmatpush1.msra.mxu0 0.0
    %3614 = vmatprep.subr.mxu0 0.0
    %3615 = vmatpush1.msra.mxu0 0.0
    %3616 = vmatprep.subr.mxu0 0.0
    %3617 = vmatpush1.msra.mxu0 0.0
    %3618 = vmatprep.subr.mxu0 0.0
    %3619 = vmatpush1.msra.mxu0 %v3538
    %3620 = vmatprep.subr.mxu0 0.0
    %3621 = vmatpush1.msra.mxu0 %v3537
    %3622 = vmatprep.subr.mxu0 0.0
    %3623 = vmatpush1.msra.mxu0 %v3536
    %3624 = vmatprep.subr.mxu0 0.0
    %3625 = vmatpush1.msra.mxu0 %v3535
    %3626 = vmatprep.subr.mxu0 0.0
    %3627 = vmatpush2.msra.mxu0 0.0
    %3628 = vmatprep.subr.mxu0 0.0
    %3629 = vmatpush2.msra.mxu0 0.0
    %3630 = vmatprep.subr.mxu0 0.0
    %3631 = vmatpush2.msra.mxu0 0.0
    %3632 = vmatprep.subr.mxu0 0.0
    %3633 = vmatpush2.msra.mxu0 0.0
    %3634 = vmatprep.subr.mxu0 0.0
    %3635 = vmatpush2.msra.mxu0 0.0
    %3636 = vmatprep.subr.mxu0 0.0
    %3637 = vmatpush2.msra.mxu0 0.0
    %3638 = vmatprep.subr.mxu0 0.0
    %3639 = vmatpush2.msra.mxu0 0.0
    %3640 = vmatprep.subr.mxu0 0.0
    %3641 = vmatpush2.msra.mxu0 0.0
    %3642 = vmatprep.subr.mxu0 0.0
    %3643 = vmatpush2.msra.mxu0 0.0
    %3644 = vmatprep.subr.mxu0 0.0
    %3645 = vmatpush2.msra.mxu0 0.0
    %3646 = vmatprep.subr.mxu0 0.0
    %3647 = vmatpush2.msra.mxu0 0.0
    %3648 = vmatprep.subr.mxu0 0.0
    %3649 = vmatpush2.msra.mxu0 0.0
    %3650 = vmatprep.subr.mxu0 0.0
    %3651 = vmatpush2.msra.mxu0 0.0
    %3652 = vmatprep.subr.mxu0 0.0
    %3653 = vmatpush2.msra.mxu0 0.0
    %3654 = vmatprep.subr.mxu0 0.0
    %3655 = vmatpush2.msra.mxu0 0.0
    %3656 = vmatprep.subr.mxu0 0.0
    %3657 = vmatpush2.msra.mxu0 0.0
    %3658 = vmatprep.mubr.f32.mxu0 0.0
    %3659 = vmatmul.mubr.f32.gmra.mxu0 %v3547
    %v3660 = vpop.f32.mrf.mxu0
    %v3661 = vadd.f32 %v3544, %v3660
    %v3662 = vpop.f32.mrf.mxu0
    %3663 = vmatprep.mubr.f32.mxu0 0.0
    %3664 = vmatmul.mubr.f32.gmra.mxu0 %v3550
    %v3665 = vpop.f32.mrf.mxu0
    %v3666 = vadd.f32 %v3544, %v3665
    %v3667 = vpop.f32.mrf.mxu0
    %3668 = vmatprep.mubr.f32.mxu0 0.0
    %3669 = vmatmul.mubr.f32.gmra.mxu0 %v3553
    %v3670 = vpop.f32.mrf.mxu0
    %v3671 = vadd.f32 %v3544, %v3670
    %v3672 = vpop.f32.mrf.mxu0
    %3673 = vmatprep.mubr.f32.mxu0 0.0
    %3674 = vmatmul.mubr.f32.gmra.mxu0 %v3556
    %v3675 = vpop.f32.mrf.mxu0
    %v3676 = vadd.f32 %v3544, %v3675
    %v3677 = vpop.f32.mrf.mxu0
    %3678 = vmatprep.mubr.f32.mxu0 0.0
    %3679 = vmatmul.mubr.f32.gmra.mxu0 %v3559
    %v3680 = vpop.f32.mrf.mxu0
    %v3681 = vadd.f32 %v3544, %v3680
    %v3682 = vpop.f32.mrf.mxu0
    %3683 = vmatprep.mubr.f32.mxu0 0.0
    %3684 = vmatmul.mubr.f32.gmra.mxu0 %v3562
    %v3685 = vpop.f32.mrf.mxu0
    %v3686 = vadd.f32 %v3544, %v3685
    %v3687 = vpop.f32.mrf.mxu0
    %3688 = vmatprep.mubr.f32.mxu0 0.0
    %3689 = vmatmul.mubr.f32.gmra.mxu0 %v3565
    %v3690 = vpop.f32.mrf.mxu0
    %v3691 = vadd.f32 %v3544, %v3690
    %v3692 = vpop.f32.mrf.mxu0
    %3693 = vmatprep.mubr.f32.mxu0 0.0
    %3694 = vmatmul.mubr.f32.gmra.mxu0 %v3568
    %v3695 = vpop.f32.mrf.mxu0
    %v3696 = vadd.f32 %v3544, %v3695
    %v3697 = vpop.f32.mrf.mxu0
    %3698 = vmatprep.mubr.f32.mxu0 0.0
    %3699 = vmatmul.mubr.f32.gmra.mxu0 %v3571
    %v3700 = vpop.f32.mrf.mxu0
    %v3701 = vadd.f32 %v3544, %v3700
    %v3702 = vpop.f32.mrf.mxu0
    %3703 = vmatprep.mubr.f32.mxu0 0.0
    %3704 = vmatmul.mubr.f32.gmra.mxu0 %v3574
    %v3705 = vpop.f32.mrf.mxu0
    %v3706 = vadd.f32 %v3544, %v3705
    %v3707 = vpop.f32.mrf.mxu0
    %3708 = vmatprep.mubr.f32.mxu0 0.0
    %3709 = vmatmul.mubr.f32.gmra.mxu0 %v3577
    %v3710 = vpop.f32.mrf.mxu0
    %v3711 = vadd.f32 %v3544, %v3710
    %v3712 = vpop.f32.mrf.mxu0
    %3713 = vmatprep.mubr.f32.mxu0 0.0
    %3714 = vmatmul.mubr.f32.gmra.mxu0 %v3580
    %v3715 = vpop.f32.mrf.mxu0
    %v3716 = vadd.f32 %v3544, %v3715
    %v3717 = vpop.f32.mrf.mxu0
    %3718 = vmatprep.mubr.f32.mxu0 0.0
    %3719 = vmatmul.mubr.f32.gmra.mxu0 %v3583
    %v3720 = vpop.f32.mrf.mxu0
    %v3721 = vadd.f32 %v3544, %v3720
    %v3722 = vpop.f32.mrf.mxu0
    %3723 = vmatprep.mubr.f32.mxu0 0.0
    %3724 = vmatmul.mubr.f32.gmra.mxu0 %v3586
    %v3725 = vpop.f32.mrf.mxu0
    %v3726 = vadd.f32 %v3544, %v3725
    %v3727 = vpop.f32.mrf.mxu0
    %3728 = vmatprep.mubr.f32.mxu0 0.0
    %3729 = vmatmul.mubr.f32.gmra.mxu0 %v3589
    %v3730 = vpop.f32.mrf.mxu0
    %v3731 = vadd.f32 %v3544, %v3730
    %v3732 = vpop.f32.mrf.mxu0
    %3733 = vmatprep.mubr.f32.mxu0 0.0
    %3734 = vmatmul.mubr.f32.gmra.mxu0 %v3592
    %v3735 = vpop.f32.mrf.mxu0
    %v3736 = vadd.f32 %v3544, %v3735
    %v3737 = vpop.f32.mrf.mxu0
    %3738 = vdwg.mxu0
    %v3739 = vmul.f32 %v3661, 0.5
    %v3740 = vmul.f32 %v3666, 0.5
    %v3741 = vmul.f32 %v3671, 0.5
    %v3742 = vmul.f32 %v3676, 0.5
    %v3743 = vmul.f32 %v3681, 0.5
    %v3744 = vmul.f32 %v3686, 0.5
    %v3745 = vmul.f32 %v3691, 0.5
    %v3746 = vmul.f32 %v3696, 0.5
    %v3747 = vmul.f32 %v3701, 0.5
    %v3748 = vmul.f32 %v3706, 0.5
    %v3749 = vmul.f32 %v3711, 0.5
    %v3750 = vmul.f32 %v3716, 0.5
    %v3751 = vmul.f32 %v3721, 0.5
    %v3752 = vmul.f32 %v3726, 0.5
    %v3753 = vmul.f32 %v3731, 0.5
    %v3754 = vmul.f32 %v3736, 0.5
    %v3755 = vmul.f32 %v3661, 0.044715
    %v3756 = vmul.f32 %v3666, 0.044715
    %v3757 = vmul.f32 %v3671, 0.044715
    %v3758 = vmul.f32 %v3676, 0.044715
    %v3759 = vmul.f32 %v3681, 0.044715
    %v3760 = vmul.f32 %v3686, 0.044715
    %v3761 = vmul.f32 %v3691, 0.044715
    %v3762 = vmul.f32 %v3696, 0.044715
    %v3763 = vmul.f32 %v3701, 0.044715
    %v3764 = vmul.f32 %v3706, 0.044715
    %v3765 = vmul.f32 %v3711, 0.044715
    %v3766 = vmul.f32 %v3716, 0.044715
    %v3767 = vmul.f32 %v3721, 0.044715
    %v3768 = vmul.f32 %v3726, 0.044715
    %v3769 = vmul.f32 %v3731, 0.044715
    %v3770 = vmul.f32 %v3736, 0.044715
    %v3771 = vmul.f32 %v3755, %v3661
    %v3772 = vmul.f32 %v3756, %v3666
    %v3773 = vmul.f32 %v3757, %v3671
    %v3774 = vmul.f32 %v3758, %v3676
    %v3775 = vmul.f32 %v3759, %v3681
    %v3776 = vmul.f32 %v3760, %v3686
    %v3777 = vmul.f32 %v3761, %v3691
    %v3778 = vmul.f32 %v3762, %v3696
    %v3779 = vmul.f32 %v3763, %v3701
    %v3780 = vmul.f32 %v3764, %v3706
    %v3781 = vmul.f32 %v3765, %v3711
    %v3782 = vmul.f32 %v3766, %v3716
    %v3783 = vmul.f32 %v3767, %v3721
    %v3784 = vmul.f32 %v3768, %v3726
    %v3785 = vmul.f32 %v3769, %v3731
    %v3786 = vmul.f32 %v3770, %v3736
    %v3787 = vmul.f32 %v3771, %v3661
    %v3788 = vmul.f32 %v3772, %v3666
    %v3789 = vmul.f32 %v3773, %v3671
    %v3790 = vmul.f32 %v3774, %v3676
    %v3791 = vmul.f32 %v3775, %v3681
    %v3792 = vmul.f32 %v3776, %v3686
    %v3793 = vmul.f32 %v3777, %v3691
    %v3794 = vmul.f32 %v3778, %v3696
    %v3795 = vmul.f32 %v3779, %v3701
    %v3796 = vmul.f32 %v3780, %v3706
    %v3797 = vmul.f32 %v3781, %v3711
    %v3798 = vmul.f32 %v3782, %v3716
    %v3799 = vmul.f32 %v3783, %v3721
    %v3800 = vmul.f32 %v3784, %v3726
    %v3801 = vmul.f32 %v3785, %v3731
    %v3802 = vmul.f32 %v3786, %v3736
    %v3803 = vadd.f32 %v3661, %v3787
    %v3804 = vadd.f32 %v3666, %v3788
    %v3805 = vadd.f32 %v3671, %v3789
    %v3806 = vadd.f32 %v3676, %v3790
    %v3807 = vadd.f32 %v3681, %v3791
    %v3808 = vadd.f32 %v3686, %v3792
    %v3809 = vadd.f32 %v3691, %v3793
    %v3810 = vadd.f32 %v3696, %v3794
    %v3811 = vadd.f32 %v3701, %v3795
    %v3812 = vadd.f32 %v3706, %v3796
    %v3813 = vadd.f32 %v3711, %v3797
    %v3814 = vadd.f32 %v3716, %v3798
    %v3815 = vadd.f32 %v3721, %v3799
    %v3816 = vadd.f32 %v3726, %v3800
    %v3817 = vadd.f32 %v3731, %v3801
    %v3818 = vadd.f32 %v3736, %v3802
    %v3819 = vmul.f32 %v3803, 0.7978846
    %v3820 = vmul.f32 %v3804, 0.7978846
    %v3821 = vmul.f32 %v3805, 0.7978846
    %v3822 = vmul.f32 %v3806, 0.7978846
    %v3823 = vmul.f32 %v3807, 0.7978846
    %v3824 = vmul.f32 %v3808, 0.7978846
    %v3825 = vmul.f32 %v3809, 0.7978846
    %v3826 = vmul.f32 %v3810, 0.7978846
    %v3827 = vmul.f32 %v3811, 0.7978846
    %v3828 = vmul.f32 %v3812, 0.7978846
    %v3829 = vmul.f32 %v3813, 0.7978846
    %v3830 = vmul.f32 %v3814, 0.7978846
    %v3831 = vmul.f32 %v3815, 0.7978846
    %v3832 = vmul.f32 %v3816, 0.7978846
    %v3833 = vmul.f32 %v3817, 0.7978846
    %v3834 = vmul.f32 %v3818, 0.7978846
    %v3835 = vtanh.pop %v3819
    %v3836 = vtanh.pop %v3820
    %v3837 = vtanh.pop %v3821
    %v3838 = vtanh.pop %v3822
    %v3839 = vtanh.pop %v3823
    %v3840 = vtanh.pop %v3824
    %v3841 = vtanh.pop %v3825
    %v3842 = vtanh.pop %v3826
    %v3843 = vtanh.pop %v3827
    %v3844 = vtanh.pop %v3828
    %v3845 = vtanh.pop %v3829
    %v3846 = vtanh.pop %v3830
    %v3847 = vtanh.pop %v3831
    %v3848 = vtanh.pop %v3832
    %v3849 = vtanh.pop %v3833
    %v3850 = vtanh.pop %v3834
    %v3851 = vadd.f32 %v3835, 1.0
    %v3852 = vadd.f32 %v3836, 1.0
    %v3853 = vadd.f32 %v3837, 1.0
    %v3854 = vadd.f32 %v3838, 1.0
    %v3855 = vadd.f32 %v3839, 1.0
    %v3856 = vadd.f32 %v3840, 1.0
    %v3857 = vadd.f32 %v3841, 1.0
    %v3858 = vadd.f32 %v3842, 1.0
    %v3859 = vadd.f32 %v3843, 1.0
    %v3860 = vadd.f32 %v3844, 1.0
    %v3861 = vadd.f32 %v3845, 1.0
    %v3862 = vadd.f32 %v3846, 1.0
    %v3863 = vadd.f32 %v3847, 1.0
    %v3864 = vadd.f32 %v3848, 1.0
    %v3865 = vadd.f32 %v3849, 1.0
    %v3866 = vadd.f32 %v3850, 1.0
    %v3867 = vmul.f32 %v3739, %v3851
    %v3868 = vmul.f32 %v3740, %v3852
    %v3869 = vmul.f32 %v3741, %v3853
    %v3870 = vmul.f32 %v3742, %v3854
    %v3871 = vmul.f32 %v3743, %v3855
    %v3872 = vmul.f32 %v3744, %v3856
    %v3873 = vmul.f32 %v3745, %v3857
    %v3874 = vmul.f32 %v3746, %v3858
    %v3875 = vmul.f32 %v3747, %v3859
    %v3876 = vmul.f32 %v3748, %v3860
    %v3877 = vmul.f32 %v3749, %v3861
    %v3878 = vmul.f32 %v3750, %v3862
    %v3879 = vmul.f32 %v3751, %v3863
    %v3880 = vmul.f32 %v3752, %v3864
    %v3881 = vmul.f32 %v3753, %v3865
    %v3882 = vmul.f32 %v3754, %v3866
    %v3883 = vld [vmem:[%s12] sm:$0xff]
    %v3884 = vld [vmem:[%s12 + $0x8] sm:$0xff]
    %v3885 = vld [vmem:[%s12 + $0x10] sm:$0xff]
    %v3886 = vld [vmem:[%s12 + $0x18] sm:$0xff]
    %v3887 = vld [vmem:[%s12 + $0x20] sm:$0xff]
    %v3888 = vld [vmem:[%s12 + $0x28] sm:$0xff]
    %v3889 = vld [vmem:[%s12 + $0x30] sm:$0xff]
    %v3890 = vld [vmem:[%s12 + $0x38] sm:$0xff]
    %v3891 = vld [vmem:[%s12 + $0x40] sm:$0xff]
    %v3892 = vld [vmem:[%s12 + $0x48] sm:$0xff]
    %v3893 = vld [vmem:[%s12 + $0x50] sm:$0xff]
    %v3894 = vld [vmem:[%s12 + $0x58] sm:$0xff]
    %v3895 = vld [vmem:[%s12 + $0x60] sm:$0xff]
    %v3896 = vld [vmem:[%s12 + $0x68] sm:$0xff]
    %v3897 = vld [vmem:[%s12 + $0x70] sm:$0xff]
    %v3898 = vld [vmem:[%s12 + $0x78] sm:$0xff]
    %v3899 = vld [vmem:[%s13] sm:$0x1]
    %v3901 = vlaneseq
    %v3902 = vshrl.u32 %v3901, 7
    %v3903 = vsub.s32 0, %v3902
    %v3904 = vrot.slane %v3899, %v3903
    %3906 = vmatprep.subr.mxu0 0.0
    %3907 = vmatpush1.msra.mxu0 %v3898
    %3908 = vmatprep.subr.mxu0 0.0
    %3909 = vmatpush1.msra.mxu0 %v3897
    %3910 = vmatprep.subr.mxu0 0.0
    %3911 = vmatpush1.msra.mxu0 %v3896
    %3912 = vmatprep.subr.mxu0 0.0
    %3913 = vmatpush1.msra.mxu0 %v3895
    %3914 = vmatprep.subr.mxu0 0.0
    %3915 = vmatpush1.msra.mxu0 %v3894
    %3916 = vmatprep.subr.mxu0 0.0
    %3917 = vmatpush1.msra.mxu0 %v3893
    %3918 = vmatprep.subr.mxu0 0.0
    %3919 = vmatpush1.msra.mxu0 %v3892
    %3920 = vmatprep.subr.mxu0 0.0
    %3921 = vmatpush1.msra.mxu0 %v3891
    %3922 = vmatprep.subr.mxu0 0.0
    %3923 = vmatpush1.msra.mxu0 %v3890
    %3924 = vmatprep.subr.mxu0 0.0
    %3925 = vmatpush1.msra.mxu0 %v3889
    %3926 = vmatprep.subr.mxu0 0.0
    %3927 = vmatpush1.msra.mxu0 %v3888
    %3928 = vmatprep.subr.mxu0 0.0
    %3929 = vmatpush1.msra.mxu0 %v3887
    %3930 = vmatprep.subr.mxu0 0.0
    %3931 = vmatpush1.msra.mxu0 %v3886
    %3932 = vmatprep.subr.mxu0 0.0
    %3933 = vmatpush1.msra.mxu0 %v3885
    %3934 = vmatprep.subr.mxu0 0.0
    %3935 = vmatpush1.msra.mxu0 %v3884
    %3936 = vmatprep.subr.mxu0 0.0
    %3937 = vmatpush1.msra.mxu0 %v3883
    %3938 = vmatprep.subr.mxu0 0.0
    %3939 = vmatpush2.msra.mxu0 0.0
    %3940 = vmatprep.subr.mxu0 0.0
    %3941 = vmatpush2.msra.mxu0 0.0
    %3942 = vmatprep.subr.mxu0 0.0
    %3943 = vmatpush2.msra.mxu0 0.0
    %3944 = vmatprep.subr.mxu0 0.0
    %3945 = vmatpush2.msra.mxu0 0.0
    %3946 = vmatprep.subr.mxu0 0.0
    %3947 = vmatpush2.msra.mxu0 0.0
    %3948 = vmatprep.subr.mxu0 0.0
    %3949 = vmatpush2.msra.mxu0 0.0
    %3950 = vmatprep.subr.mxu0 0.0
    %3951 = vmatpush2.msra.mxu0 0.0
    %3952 = vmatprep.subr.mxu0 0.0
    %3953 = vmatpush2.msra.mxu0 0.0
    %3954 = vmatprep.subr.mxu0 0.0
    %3955 = vmatpush2.msra.mxu0 0.0
    %3956 = vmatprep.subr.mxu0 0.0
    %3957 = vmatpush2.msra.mxu0 0.0
    %3958 = vmatprep.subr.mxu0 0.0
    %3959 = vmatpush2.msra.mxu0 0.0
    %3960 = vmatprep.subr.mxu0 0.0
    %3961 = vmatpush2.msra.mxu0 0.0
    %3962 = vmatprep.subr.mxu0 0.0
    %3963 = vmatpush2.msra.mxu0 0.0
    %3964 = vmatprep.subr.mxu0 0.0
    %3965 = vmatpush2.msra.mxu0 0.0
    %3966 = vmatprep.subr.mxu0 0.0
    %3967 = vmatpush2.msra.mxu0 0.0
    %3968 = vmatprep.subr.mxu0 0.0
    %3969 = vmatpush2.msra.mxu0 0.0
    %3970 = vmatprep.mubr.f32.mxu0 0.0
    %3971 = vmatmul.mubr.f32.gmra.mxu0 %v3867
    %v3972 = vpop.f32.mrf.mxu0
    %v3973 = vadd.f32 %v3904, %v3972
    %v3974 = vpop.f32.mrf.mxu0
    %3975 = vmatprep.mubr.f32.mxu0 0.0
    %3976 = vmatmul.mubr.f32.gmra.mxu0 %v3868
    %v3977 = vpop.f32.mrf.mxu0
    %v3978 = vadd.f32 %v3904, %v3977
    %v3979 = vpop.f32.mrf.mxu0
    %3980 = vmatprep.mubr.f32.mxu0 0.0
    %3981 = vmatmul.mubr.f32.gmra.mxu0 %v3869
    %v3982 = vpop.f32.mrf.mxu0
    %v3983 = vadd.f32 %v3904, %v3982
    %v3984 = vpop.f32.mrf.mxu0
    %3985 = vmatprep.mubr.f32.mxu0 0.0
    %3986 = vmatmul.mubr.f32.gmra.mxu0 %v3870
    %v3987 = vpop.f32.mrf.mxu0
    %v3988 = vadd.f32 %v3904, %v3987
    %v3989 = vpop.f32.mrf.mxu0
    %3990 = vmatprep.mubr.f32.mxu0 0.0
    %3991 = vmatmul.mubr.f32.gmra.mxu0 %v3871
    %v3992 = vpop.f32.mrf.mxu0
    %v3993 = vadd.f32 %v3904, %v3992
    %v3994 = vpop.f32.mrf.mxu0
    %3995 = vmatprep.mubr.f32.mxu0 0.0
    %3996 = vmatmul.mubr.f32.gmra.mxu0 %v3872
    %v3997 = vpop.f32.mrf.mxu0
    %v3998 = vadd.f32 %v3904, %v3997
    %v3999 = vpop.f32.mrf.mxu0
    %4000 = vmatprep.mubr.f32.mxu0 0.0
    %4001 = vmatmul.mubr.f32.gmra.mxu0 %v3873
    %v4002 = vpop.f32.mrf.mxu0
    %v4003 = vadd.f32 %v3904, %v4002
    %v4004 = vpop.f32.mrf.mxu0
    %4005 = vmatprep.mubr.f32.mxu0 0.0
    %4006 = vmatmul.mubr.f32.gmra.mxu0 %v3874
    %v4007 = vpop.f32.mrf.mxu0
    %v4008 = vadd.f32 %v3904, %v4007
    %v4009 = vpop.f32.mrf.mxu0
    %4010 = vmatprep.mubr.f32.mxu0 0.0
    %4011 = vmatmul.mubr.f32.gmra.mxu0 %v3875
    %v4012 = vpop.f32.mrf.mxu0
    %v4013 = vadd.f32 %v3904, %v4012
    %v4014 = vpop.f32.mrf.mxu0
    %4015 = vmatprep.mubr.f32.mxu0 0.0
    %4016 = vmatmul.mubr.f32.gmra.mxu0 %v3876
    %v4017 = vpop.f32.mrf.mxu0
    %v4018 = vadd.f32 %v3904, %v4017
    %v4019 = vpop.f32.mrf.mxu0
    %4020 = vmatprep.mubr.f32.mxu0 0.0
    %4021 = vmatmul.mubr.f32.gmra.mxu0 %v3877
    %v4022 = vpop.f32.mrf.mxu0
    %v4023 = vadd.f32 %v3904, %v4022
    %v4024 = vpop.f32.mrf.mxu0
    %4025 = vmatprep.mubr.f32.mxu0 0.0
    %4026 = vmatmul.mubr.f32.gmra.mxu0 %v3878
    %v4027 = vpop.f32.mrf.mxu0
    %v4028 = vadd.f32 %v3904, %v4027
    %v4029 = vpop.f32.mrf.mxu0
    %4030 = vmatprep.mubr.f32.mxu0 0.0
    %4031 = vmatmul.mubr.f32.gmra.mxu0 %v3879
    %v4032 = vpop.f32.mrf.mxu0
    %v4033 = vadd.f32 %v3904, %v4032
    %v4034 = vpop.f32.mrf.mxu0
    %4035 = vmatprep.mubr.f32.mxu0 0.0
    %4036 = vmatmul.mubr.f32.gmra.mxu0 %v3880
    %v4037 = vpop.f32.mrf.mxu0
    %v4038 = vadd.f32 %v3904, %v4037
    %v4039 = vpop.f32.mrf.mxu0
    %4040 = vmatprep.mubr.f32.mxu0 0.0
    %4041 = vmatmul.mubr.f32.gmra.mxu0 %v3881
    %v4042 = vpop.f32.mrf.mxu0
    %v4043 = vadd.f32 %v3904, %v4042
    %v4044 = vpop.f32.mrf.mxu0
    %4045 = vmatprep.mubr.f32.mxu0 0.0
    %4046 = vmatmul.mubr.f32.gmra.mxu0 %v3882
    %v4047 = vpop.f32.mrf.mxu0
    %v4048 = vadd.f32 %v3904, %v4047
    %v4049 = vpop.f32.mrf.mxu0
    %4050 = vdwg.mxu0
    %v4051 = vadd.f32 %v3233, %v3973
    %v4052 = vadd.f32 %v3234, %v3978
    %v4053 = vadd.f32 %v3235, %v3983
    %v4054 = vadd.f32 %v3236, %v3988
    %v4055 = vadd.f32 %v3237, %v3993
    %v4056 = vadd.f32 %v3238, %v3998
    %v4057 = vadd.f32 %v3239, %v4003
    %v4058 = vadd.f32 %v3240, %v4008
    %v4059 = vadd.f32 %v3241, %v4013
    %v4060 = vadd.f32 %v3242, %v4018
    %v4061 = vadd.f32 %v3243, %v4023
    %v4062 = vadd.f32 %v3244, %v4028
    %v4063 = vadd.f32 %v3245, %v4033
    %v4064 = vadd.f32 %v3246, %v4038
    %v4065 = vadd.f32 %v3247, %v4043
    %v4066 = vadd.f32 %v3248, %v4048
    %4067 = vst.msk [vmem:[%s14] sm:$0xff] %vm77, %v4051
    %4068 = vst.msk [vmem:[%s14 + $0x8] sm:$0xff] %vm77, %v4052
    %4069 = vst.msk [vmem:[%s14 + $0x10] sm:$0xff] %vm77, %v4053
    %4070 = vst.msk [vmem:[%s14 + $0x18] sm:$0xff] %vm77, %v4054
    %4071 = vst.msk [vmem:[%s14 + $0x20] sm:$0xff] %vm77, %v4055
    %4072 = vst.msk [vmem:[%s14 + $0x28] sm:$0xff] %vm77, %v4056
    %4073 = vst.msk [vmem:[%s14 + $0x30] sm:$0xff] %vm77, %v4057
    %4074 = vst.msk [vmem:[%s14 + $0x38] sm:$0xff] %vm77, %v4058
    %4075 = vst.msk [vmem:[%s14 + $0x40] sm:$0xff] %vm77, %v4059
    %4076 = vst.msk [vmem:[%s14 + $0x48] sm:$0xff] %vm77, %v4060
    %4077 = vst.msk [vmem:[%s14 + $0x50] sm:$0xff] %vm77, %v4061
    %4078 = vst.msk [vmem:[%s14 + $0x58] sm:$0xff] %vm77, %v4062
    %4079 = vst.msk [vmem:[%s14 + $0x60] sm:$0xff] %vm77, %v4063
    %4080 = vst.msk [vmem:[%s14 + $0x68] sm:$0xff] %vm77, %v4064
    %4081 = vst.msk [vmem:[%s14 + $0x70] sm:$0xff] %vm77, %v4065
    %4082 = vst.msk [vmem:[%s14 + $0x78] sm:$0xff] %vm77, %v4066
    // Predicated region
    $region62: #{swim_block_forward.1} parent=1 // pred_check
      _
    $region63: #{swim_block_forward.1} parent=1 // pred_check_branch
      %4084 = sbr.rel (0) target = $region65
    $region64: #{swim_block_forward.1} parent=1 // pred_region
      _
    $region65: #{swim_block_forward.1} parent=1 // pred_fallthru
      _
    // Predicated region
    $region66: #{swim_block_forward.1} parent=1 // pred_check
      _
    $region67: #{swim_block_forward.1} parent=1 // pred_check_branch
      %4086 = sbr.rel (0) target = $region69
    $region68: #{swim_block_forward.1} parent=1 // pred_region
      _
    $region69: #{swim_block_forward.1} parent=1 // pred_fallthru
      _
    %4087 = vsyncpa [#allocation3], 1

</llo_original>
